<compile_context>
chip_gen: v7x
topology: tpu7x:2x2x1
jax: 0.10.0
libtpu: 0.0.40
codegen_flags: <defaults>
</compile_context>

<pallas_src>
import jax
import jax.numpy as jnp
from jax import lax
from jax.experimental import pallas as pl
from jax.experimental.pallas import tpu as pltpu


# ----------------------------- Pallas kernel -----------------------------

def bigru_kernel(x_ref,                                  # [T, B, E]  bf16 time-major input
                 w_in_ref,                               # [E, 6H]    bf16, cols fwd(r,z,n)|rev(r,z,n)
                 b_in_ref,                               # [1, 6H]    f32  (b_ih + b_hh for r,z gates)
                 whh_fr_ref, whh_fz_ref, whh_fn_ref,     # [H, H]     bf16, forward dir per-gate
                 whh_rr_ref, whh_rz_ref, whh_rn_ref,     # [H, H]     bf16, reverse dir per-gate
                 bhn_f_ref, bhn_r_ref,                   # [1, H]     f32  (b_hn stays inside r*(..))
                 wout_ref, bout_ref,                     # [2H, C], [1, C] f32
                 out_ref,                                # [B, C]     f32
                 gi_fr, gi_fz, gi_fn,                    # VMEM [T, B, H] f32 (hoisted x-projection)
                 gi_rr, gi_rz, gi_rn,
                 hf_all, hr_all):                        # VMEM [T, B, H] f32 (per-step hidden)
    T, B, E = x_ref.shape
    H = whh_fr_ref.shape[0]

    # ---- hoisted input projection: one well-shaped bf16 matmul, out of the loop ----
    x2 = x_ref[...].reshape(T * B, E)                                         # bf16 [T*B, E]
    gi_all = jnp.dot(x2, w_in_ref[...],
                     preferred_element_type=jnp.float32) + b_in_ref[...]      # f32 [T*B, 6H]
    # One-time split into per-gate/per-direction tiles -> no lane slicing in the loop.
    for g, gref in enumerate((gi_fr, gi_fz, gi_fn, gi_rr, gi_rz, gi_rn)):
        gref[...] = gi_all[:, g * H:(g + 1) * H].reshape(T, B, H)

    # hoist recurrent weights / biases out of the loop (load once)
    whh_fr = whh_fr_ref[...]
    whh_fz = whh_fz_ref[...]
    whh_fn = whh_fn_ref[...]
    whh_rr = whh_rr_ref[...]
    whh_rz = whh_rz_ref[...]
    whh_rn = whh_rn_ref[...]
    bhn_f = bhn_f_ref[...]
    bhn_r = bhn_r_ref[...]

    def step(t, carry):
        h_f, h_r = carry
        hf16 = h_f.astype(jnp.bfloat16)
        hr16 = h_r.astype(jnp.bfloat16)
        tr = T - 1 - t

        # forward direction (PyTorch gate order r, z, n)
        ghr = jnp.dot(hf16, whh_fr, preferred_element_type=jnp.float32)
        ghz = jnp.dot(hf16, whh_fz, preferred_element_type=jnp.float32)
        ghn = jnp.dot(hf16, whh_fn, preferred_element_type=jnp.float32) + bhn_f
        r = jax.nn.sigmoid(gi_fr[t] + ghr)
        z = jax.nn.sigmoid(gi_fz[t] + ghz)
        n = jnp.tanh(gi_fn[t] + r * ghn)          # r * (W_hn h + b_hn), PyTorch form
        h_f = (1.0 - z) * n + z * h_f

        # reverse direction (consumes x at T-1-t)
        ghr2 = jnp.dot(hr16, whh_rr, preferred_element_type=jnp.float32)
        ghz2 = jnp.dot(hr16, whh_rz, preferred_element_type=jnp.float32)
        ghn2 = jnp.dot(hr16, whh_rn, preferred_element_type=jnp.float32) + bhn_r
        r2 = jax.nn.sigmoid(gi_rr[tr] + ghr2)
        z2 = jax.nn.sigmoid(gi_rz[tr] + ghz2)
        n2 = jnp.tanh(gi_rn[tr] + r2 * ghn2)
        h_r = (1.0 - z2) * n2 + z2 * h_r

        # stash raw hidden states; tanh + max-pool deferred past the loop
        hf_all[t] = h_f
        hr_all[t] = h_r
        return h_f, h_r

    h0 = jnp.zeros((B, H), jnp.float32)
    lax.fori_loop(0, T, step, (h0, h0), unroll=True)

    # ---- deferred tanh + temporal max-pool, fully vectorized over [T, B, H] ----
    m_f = jnp.max(jnp.tanh(hf_all[...]), axis=0)          # [B, H]
    m_r = jnp.max(jnp.tanh(hr_all[...]), axis=0)          # [B, H]
    m = jnp.concatenate([m_f, m_r], axis=1)               # [B, 2H]

    # linearOut: single fused dot on the concatenated features.
    out_ref[...] = (jnp.dot(m, wout_ref[...], preferred_element_type=jnp.float32)
                    + bout_ref[...])


# ------------------------------ wrapper ---------------------------------

def bigru_forward(tokens, params, max_norm):
    """tokens: [B, T] int32 -> logits [B, class_num] float32."""
    H = params["w_hh_f"].shape[0]
    C = params["w_out"].shape[1]
    B, T = tokens.shape

    # Embedding lookup with PyTorch max_norm renorm semantics (plain-JAX glue).
    rows = params["embed"][tokens]                                    # [B, T, E]
    norms = jnp.linalg.norm(rows, axis=-1, keepdims=True)
    scale = jnp.where(norms > max_norm, max_norm / (norms + 1e-7), 1.0)
    x = rows * scale
    # Dropout(embed) / GRU inter-layer dropout: identity in eval mode.
    x_tbe = jnp.transpose(x, (1, 0, 2)).astype(jnp.bfloat16)          # [T, B, E]

    # Pack the input projection for one hoisted matmul: [E, 6H], cols fwd(r,z,n)|rev(r,z,n).
    w_in = jnp.concatenate([params["w_ih_f"], params["w_ih_r"]],
                           axis=1).astype(jnp.bfloat16)
    zeros_h = jnp.zeros((1, H), jnp.float32)
    b_fwd = params["b_ih_f"] + jnp.concatenate([params["b_hh_f"][:, :2 * H], zeros_h], axis=1)
    b_rev = params["b_ih_r"] + jnp.concatenate([params["b_hh_r"][:, :2 * H], zeros_h], axis=1)
    b_in = jnp.concatenate([b_fwd, b_rev], axis=1)                    # [1, 6H] f32

    # Per-gate recurrent weights -> in-loop dots need no non-128-aligned lane slices.
    def gate(w, g):
        return lax.slice_in_dim(w, g * H, (g + 1) * H, axis=1).astype(jnp.bfloat16)

    whh_fr, whh_fz, whh_fn = gate(params["w_hh_f"], 0), gate(params["w_hh_f"], 1), gate(params["w_hh_f"], 2)
    whh_rr, whh_rz, whh_rn = gate(params["w_hh_r"], 0), gate(params["w_hh_r"], 1), gate(params["w_hh_r"], 2)
    bhn_f = params["b_hh_f"][:, 2 * H:3 * H]
    bhn_r = params["b_hh_r"][:, 2 * H:3 * H]

    args = (x_tbe, w_in, b_in,
            whh_fr, whh_fz, whh_fn, whh_rr, whh_rz, whh_rn,
            bhn_f, bhn_r,
            params["w_out"], params["b_out"])

    vmem = pl.BlockSpec(memory_space=pltpu.MemorySpace.VMEM)
    scratch = [pltpu.VMEM((T, B, H), jnp.float32)] * 8

    # TODO(synk): at realistic batch sizes, add a batch-tile grid axis marked
    # "parallel" (dimension_semantics) so v7x's two TensorCores both run, and
    # tile T via BlockSpec if T*B*E outgrows VMEM. At B=2 / T=8 this is moot.
    return pl.pallas_call(
        bigru_kernel,
        out_shape=jax.ShapeDtypeStruct((B, C), jnp.float32),
        in_specs=[vmem] * len(args),
        out_specs=vmem,
        scratch_shapes=scratch,
    )(*args)


# --------------------------- parameter setup -----------------------------

def xavier_normal(key, shape, fan_in, fan_out, gain):
    std = gain * jnp.sqrt(2.0 / (fan_in + fan_out))
    return std * jax.random.normal(key, shape, dtype=jnp.float32)


def init_params(key, vocab, embed_dim, hidden, classes):
    ks = jax.random.split(key, 12)
    gain_gru = 5.0 / 3.0
    E, H, C = embed_dim, hidden, classes
    bound = 1.0 / jnp.sqrt(H)

    def ub(k, shape):
        return jax.random.uniform(k, shape, jnp.float32, -bound, bound)

    return {
        "embed": jax.random.normal(ks[0], (vocab, E), jnp.float32),
        # stored transposed relative to PyTorch ([3H,E] -> [E,3H]); gate order r,z,n
        "w_ih_f": xavier_normal(ks[1], (E, 3 * H), E, 3 * H, gain_gru),
        "w_hh_f": xavier_normal(ks[2], (H, 3 * H), H, 3 * H, gain_gru),
        "b_ih_f": ub(ks[3], (1, 3 * H)),
        "b_hh_f": ub(ks[4], (1, 3 * H)),
        "w_ih_r": xavier_normal(ks[5], (E, 3 * H), E, 3 * H, gain_gru),
        "w_hh_r": xavier_normal(ks[6], (H, 3 * H), H, 3 * H, gain_gru),
        "b_ih_r": ub(ks[7], (1, 3 * H)),
        "b_hh_r": ub(ks[8], (1, 3 * H)),
        # linearOut weight stored transposed ([C,2H] -> [2H,C])
        "w_out": xavier_normal(ks[9], (2 * H, C), 2 * H, C, 1.0),
        "b_out": jax.random.uniform(ks[10], (1, C), jnp.float32,
                                    -1.0 / jnp.sqrt(2 * H), 1.0 / jnp.sqrt(2 * H)),
    }


# ------------------------------- main ------------------------------------

if __name__ == "__main__":
    # args: embed_num=50, embed_dim=input_size=32, hidden_size=32,
    #       class_num=5, max_norm=5.0
    B, T = 2, 8
    VOCAB, EMBED, HIDDEN, CLASSES = 50, 32, 32, 5
    MAX_NORM = 5.0

    key = jax.random.PRNGKey(0)
    k_param, k_tok = jax.random.split(key)
    params = init_params(k_param, VOCAB, EMBED, HIDDEN, CLASSES)
    tokens = jax.random.randint(k_tok, (B, T), 0, VOCAB, dtype=jnp.int32)

    fwd = jax.jit(bigru_forward)
    logits = fwd(tokens, params, MAX_NORM)
    jax.block_until_ready(logits)
    assert logits.shape == (B, CLASSES) and logits.dtype == jnp.float32
    print("KERNEL_OK")
</pallas_src>

<mosaic_0001>
module attributes {stable_mosaic.version = 11 : i64} {
  func.func @bigru_kernel(%arg0: memref<8x2x32xbf16, #tpu.memory_space<vmem>>, %arg1: memref<32x192xbf16, #tpu.memory_space<vmem>>, %arg2: memref<1x192xf32, #tpu.memory_space<vmem>>, %arg3: memref<32x32xbf16, #tpu.memory_space<vmem>>, %arg4: memref<32x32xbf16, #tpu.memory_space<vmem>>, %arg5: memref<32x32xbf16, #tpu.memory_space<vmem>>, %arg6: memref<32x32xbf16, #tpu.memory_space<vmem>>, %arg7: memref<32x32xbf16, #tpu.memory_space<vmem>>, %arg8: memref<32x32xbf16, #tpu.memory_space<vmem>>, %arg9: memref<1x32xf32, #tpu.memory_space<vmem>>, %arg10: memref<1x32xf32, #tpu.memory_space<vmem>>, %arg11: memref<64x5xf32, #tpu.memory_space<vmem>>, %arg12: memref<1x5xf32, #tpu.memory_space<vmem>>, %arg13: memref<2x5xf32, #tpu.memory_space<vmem>>, %arg14: memref<8x2x32xf32, #tpu.memory_space<vmem>>, %arg15: memref<8x2x32xf32, #tpu.memory_space<vmem>>, %arg16: memref<8x2x32xf32, #tpu.memory_space<vmem>>, %arg17: memref<8x2x32xf32, #tpu.memory_space<vmem>>, %arg18: memref<8x2x32xf32, #tpu.memory_space<vmem>>, %arg19: memref<8x2x32xf32, #tpu.memory_space<vmem>>, %arg20: memref<8x2x32xf32, #tpu.memory_space<vmem>>, %arg21: memref<8x2x32xf32, #tpu.memory_space<vmem>>) attributes {dimension_semantics = [], scalar_prefetch = 0 : i64, scratch_operands = 8 : i64, tpu.core_type = #tpu.core_type<tc>} {
    %c0 = arith.constant 0 : index
    %c0_0 = arith.constant 0 : index
    %c0_1 = arith.constant 0 : index
    %0 = vector.load %arg0[%c0, %c0_0, %c0_1] : memref<8x2x32xbf16, #tpu.memory_space<vmem>>, vector<8x2x32xbf16>
    %1 = vector.shape_cast %0 : vector<8x2x32xbf16> to vector<16x32xbf16>
    %c0_2 = arith.constant 0 : index
    %c0_3 = arith.constant 0 : index
    %2 = vector.load %arg1[%c0_2, %c0_3] : memref<32x192xbf16, #tpu.memory_space<vmem>>, vector<32x192xbf16>
    %cst = arith.constant dense<0.000000e+00> : vector<16x192xf32>
    %3 = tpu.matmul %1, %2, %cst {dimension_numbers = #tpu.dot_dimension_numbers<[1], [0], [0], [1], [0, 0, 1, 1], [], []>} : vector<16x32xbf16>, vector<32x192xbf16>, vector<16x192xf32> -> vector<16x192xf32>
    %c0_4 = arith.constant 0 : index
    %c0_5 = arith.constant 0 : index
    %4 = vector.load %arg2[%c0_4, %c0_5] : memref<1x192xf32, #tpu.memory_space<vmem>>, vector<1x192xf32>
    %5 = vector.broadcast %4 : vector<1x192xf32> to vector<16x192xf32>
    %6 = arith.addf %3, %5 : vector<16x192xf32>
    %7 = vector.extract_strided_slice %6 {offsets = [0, 0], sizes = [16, 32], strides = [1, 1]} : vector<16x192xf32> to vector<16x32xf32>
    %8 = vector.shape_cast %7 : vector<16x32xf32> to vector<8x2x32xf32>
    %c0_6 = arith.constant 0 : index
    %c0_7 = arith.constant 0 : index
    %c0_8 = arith.constant 0 : index
    %9 = vector.load %arg14[%c0_6, %c0_7, %c0_8] : memref<8x2x32xf32, #tpu.memory_space<vmem>>, vector<8x2x32xf32>
    tpu.vector_store %arg14[%c0_6, %c0_7, %c0_8], %8 {strides = array<i32>} : memref<8x2x32xf32, #tpu.memory_space<vmem>>, vector<8x2x32xf32>,
    %10 = vector.extract_strided_slice %6 {offsets = [0, 32], sizes = [16, 32], strides = [1, 1]} : vector<16x192xf32> to vector<16x32xf32>
    %11 = vector.shape_cast %10 : vector<16x32xf32> to vector<8x2x32xf32>
    %c0_9 = arith.constant 0 : index
    %c0_10 = arith.constant 0 : index
    %c0_11 = arith.constant 0 : index
    %12 = vector.load %arg15[%c0_9, %c0_10, %c0_11] : memref<8x2x32xf32, #tpu.memory_space<vmem>>, vector<8x2x32xf32>
    tpu.vector_store %arg15[%c0_9, %c0_10, %c0_11], %11 {strides = array<i32>} : memref<8x2x32xf32, #tpu.memory_space<vmem>>, vector<8x2x32xf32>,
    %13 = vector.extract_strided_slice %6 {offsets = [0, 64], sizes = [16, 32], strides = [1, 1]} : vector<16x192xf32> to vector<16x32xf32>
    %14 = vector.shape_cast %13 : vector<16x32xf32> to vector<8x2x32xf32>
    %c0_12 = arith.constant 0 : index
    %c0_13 = arith.constant 0 : index
    %c0_14 = arith.constant 0 : index
    %15 = vector.load %arg16[%c0_12, %c0_13, %c0_14] : memref<8x2x32xf32, #tpu.memory_space<vmem>>, vector<8x2x32xf32>
    tpu.vector_store %arg16[%c0_12, %c0_13, %c0_14], %14 {strides = array<i32>} : memref<8x2x32xf32, #tpu.memory_space<vmem>>, vector<8x2x32xf32>,
    %16 = vector.extract_strided_slice %6 {offsets = [0, 96], sizes = [16, 32], strides = [1, 1]} : vector<16x192xf32> to vector<16x32xf32>
    %17 = vector.shape_cast %16 : vector<16x32xf32> to vector<8x2x32xf32>
    %c0_15 = arith.constant 0 : index
    %c0_16 = arith.constant 0 : index
    %c0_17 = arith.constant 0 : index
    %18 = vector.load %arg17[%c0_15, %c0_16, %c0_17] : memref<8x2x32xf32, #tpu.memory_space<vmem>>, vector<8x2x32xf32>
    tpu.vector_store %arg17[%c0_15, %c0_16, %c0_17], %17 {strides = array<i32>} : memref<8x2x32xf32, #tpu.memory_space<vmem>>, vector<8x2x32xf32>,
    %19 = vector.extract_strided_slice %6 {offsets = [0, 128], sizes = [16, 32], strides = [1, 1]} : vector<16x192xf32> to vector<16x32xf32>
    %20 = vector.shape_cast %19 : vector<16x32xf32> to vector<8x2x32xf32>
    %c0_18 = arith.constant 0 : index
    %c0_19 = arith.constant 0 : index
    %c0_20 = arith.constant 0 : index
    %21 = vector.load %arg18[%c0_18, %c0_19, %c0_20] : memref<8x2x32xf32, #tpu.memory_space<vmem>>, vector<8x2x32xf32>
    tpu.vector_store %arg18[%c0_18, %c0_19, %c0_20], %20 {strides = array<i32>} : memref<8x2x32xf32, #tpu.memory_space<vmem>>, vector<8x2x32xf32>,
    %22 = vector.extract_strided_slice %6 {offsets = [0, 160], sizes = [16, 32], strides = [1, 1]} : vector<16x192xf32> to vector<16x32xf32>
    %23 = vector.shape_cast %22 : vector<16x32xf32> to vector<8x2x32xf32>
    %c0_21 = arith.constant 0 : index
    %c0_22 = arith.constant 0 : index
    %c0_23 = arith.constant 0 : index
    %24 = vector.load %arg19[%c0_21, %c0_22, %c0_23] : memref<8x2x32xf32, #tpu.memory_space<vmem>>, vector<8x2x32xf32>
    tpu.vector_store %arg19[%c0_21, %c0_22, %c0_23], %23 {strides = array<i32>} : memref<8x2x32xf32, #tpu.memory_space<vmem>>, vector<8x2x32xf32>,
    %c0_24 = arith.constant 0 : index
    %c0_25 = arith.constant 0 : index
    %25 = vector.load %arg3[%c0_24, %c0_25] : memref<32x32xbf16, #tpu.memory_space<vmem>>, vector<32x32xbf16>
    %c0_26 = arith.constant 0 : index
    %c0_27 = arith.constant 0 : index
    %26 = vector.load %arg4[%c0_26, %c0_27] : memref<32x32xbf16, #tpu.memory_space<vmem>>, vector<32x32xbf16>
    %c0_28 = arith.constant 0 : index
    %c0_29 = arith.constant 0 : index
    %27 = vector.load %arg5[%c0_28, %c0_29] : memref<32x32xbf16, #tpu.memory_space<vmem>>, vector<32x32xbf16>
    %c0_30 = arith.constant 0 : index
    %c0_31 = arith.constant 0 : index
    %28 = vector.load %arg6[%c0_30, %c0_31] : memref<32x32xbf16, #tpu.memory_space<vmem>>, vector<32x32xbf16>
    %c0_32 = arith.constant 0 : index
    %c0_33 = arith.constant 0 : index
    %29 = vector.load %arg7[%c0_32, %c0_33] : memref<32x32xbf16, #tpu.memory_space<vmem>>, vector<32x32xbf16>
    %c0_34 = arith.constant 0 : index
    %c0_35 = arith.constant 0 : index
    %30 = vector.load %arg8[%c0_34, %c0_35] : memref<32x32xbf16, #tpu.memory_space<vmem>>, vector<32x32xbf16>
    %c0_36 = arith.constant 0 : index
    %c0_37 = arith.constant 0 : index
    %31 = vector.load %arg9[%c0_36, %c0_37] : memref<1x32xf32, #tpu.memory_space<vmem>>, vector<1x32xf32>
    %c0_38 = arith.constant 0 : index
    %c0_39 = arith.constant 0 : index
    %32 = vector.load %arg10[%c0_38, %c0_39] : memref<1x32xf32, #tpu.memory_space<vmem>>, vector<1x32xf32>
    %cst_40 = arith.constant 0.000000e+00 : f32
    %33 = vector.broadcast %cst_40 : f32 to vector<2x32xf32>
    %c0_i32 = arith.constant 0 : i32
    %34 = arith.truncf %33 : vector<2x32xf32> to vector<2x32xbf16>
    %35 = arith.truncf %33 : vector<2x32xf32> to vector<2x32xbf16>
    %c7_i32 = arith.constant 7 : i32
    %36 = arith.subi %c7_i32, %c0_i32 : i32
    %cst_41 = arith.constant dense<0.000000e+00> : vector<2x32xf32>
    %37 = tpu.matmul %34, %25, %cst_41 {dimension_numbers = #tpu.dot_dimension_numbers<[1], [0], [0], [1], [0, 0, 1, 1], [], []>} : vector<2x32xbf16>, vector<32x32xbf16>, vector<2x32xf32> -> vector<2x32xf32>
    %cst_42 = arith.constant dense<0.000000e+00> : vector<2x32xf32>
    %38 = tpu.matmul %34, %26, %cst_42 {dimension_numbers = #tpu.dot_dimension_numbers<[1], [0], [0], [1], [0, 0, 1, 1], [], []>} : vector<2x32xbf16>, vector<32x32xbf16>, vector<2x32xf32> -> vector<2x32xf32>
    %cst_43 = arith.constant dense<0.000000e+00> : vector<2x32xf32>
    %39 = tpu.matmul %34, %27, %cst_43 {dimension_numbers = #tpu.dot_dimension_numbers<[1], [0], [0], [1], [0, 0, 1, 1], [], []>} : vector<2x32xbf16>, vector<32x32xbf16>, vector<2x32xf32> -> vector<2x32xf32>
    %40 = vector.broadcast %31 : vector<1x32xf32> to vector<2x32xf32>
    %41 = arith.addf %39, %40 : vector<2x32xf32>
    %42 = arith.index_cast %c0_i32 : i32 to index
    %c0_44 = arith.constant 0 : index
    %c0_45 = arith.constant 0 : index
    %43 = vector.load %arg14[%42, %c0_44, %c0_45] : memref<8x2x32xf32, #tpu.memory_space<vmem>>, vector<1x2x32xf32>
    %44 = vector.shape_cast %43 : vector<1x2x32xf32> to vector<2x32xf32>
    %45 = arith.addf %44, %37 : vector<2x32xf32>
    %46 = arith.negf %45 : vector<2x32xf32>
    %47 = math.exp %46 : vector<2x32xf32>
    %cst_46 = arith.constant 1.000000e+00 : f32
    %48 = vector.broadcast %cst_46 : f32 to vector<2x32xf32>
    %49 = arith.addf %48, %47 : vector<2x32xf32>
    %50 = arith.divf %48, %49 : vector<2x32xf32>
    %51 = arith.index_cast %c0_i32 : i32 to index
    %c0_47 = arith.constant 0 : index
    %c0_48 = arith.constant 0 : index
    %52 = vector.load %arg15[%51, %c0_47, %c0_48] : memref<8x2x32xf32, #tpu.memory_space<vmem>>, vector<1x2x32xf32>
    %53 = vector.shape_cast %52 : vector<1x2x32xf32> to vector<2x32xf32>
    %54 = arith.addf %53, %38 : vector<2x32xf32>
    %55 = arith.negf %54 : vector<2x32xf32>
    %56 = math.exp %55 : vector<2x32xf32>
    %cst_49 = arith.constant 1.000000e+00 : f32
    %57 = vector.broadcast %cst_49 : f32 to vector<2x32xf32>
    %58 = arith.addf %57, %56 : vector<2x32xf32>
    %59 = arith.divf %57, %58 : vector<2x32xf32>
    %60 = arith.index_cast %c0_i32 : i32 to index
    %c0_50 = arith.constant 0 : index
    %c0_51 = arith.constant 0 : index
    %61 = vector.load %arg16[%60, %c0_50, %c0_51] : memref<8x2x32xf32, #tpu.memory_space<vmem>>, vector<1x2x32xf32>
    %62 = vector.shape_cast %61 : vector<1x2x32xf32> to vector<2x32xf32>
    %63 = arith.mulf %50, %41 : vector<2x32xf32>
    %64 = arith.addf %62, %63 : vector<2x32xf32>
    %65 = math.tanh %64 : vector<2x32xf32>
    %cst_52 = arith.constant 1.000000e+00 : f32
    %66 = vector.broadcast %cst_52 : f32 to vector<2x32xf32>
    %67 = arith.subf %66, %59 : vector<2x32xf32>
    %68 = arith.mulf %67, %65 : vector<2x32xf32>
    %69 = arith.mulf %59, %33 : vector<2x32xf32>
    %70 = arith.addf %68, %69 : vector<2x32xf32>
    %cst_53 = arith.constant dense<0.000000e+00> : vector<2x32xf32>
    %71 = tpu.matmul %35, %28, %cst_53 {dimension_numbers = #tpu.dot_dimension_numbers<[1], [0], [0], [1], [0, 0, 1, 1], [], []>} : vector<2x32xbf16>, vector<32x32xbf16>, vector<2x32xf32> -> vector<2x32xf32>
    %cst_54 = arith.constant dense<0.000000e+00> : vector<2x32xf32>
    %72 = tpu.matmul %35, %29, %cst_54 {dimension_numbers = #tpu.dot_dimension_numbers<[1], [0], [0], [1], [0, 0, 1, 1], [], []>} : vector<2x32xbf16>, vector<32x32xbf16>, vector<2x32xf32> -> vector<2x32xf32>
    %cst_55 = arith.constant dense<0.000000e+00> : vector<2x32xf32>
    %73 = tpu.matmul %35, %30, %cst_55 {dimension_numbers = #tpu.dot_dimension_numbers<[1], [0], [0], [1], [0, 0, 1, 1], [], []>} : vector<2x32xbf16>, vector<32x32xbf16>, vector<2x32xf32> -> vector<2x32xf32>
    %74 = vector.broadcast %32 : vector<1x32xf32> to vector<2x32xf32>
    %75 = arith.addf %73, %74 : vector<2x32xf32>
    %76 = arith.index_cast %36 : i32 to index
    %c0_56 = arith.constant 0 : index
    %c0_57 = arith.constant 0 : index
    %77 = vector.load %arg17[%76, %c0_56, %c0_57] : memref<8x2x32xf32, #tpu.memory_space<vmem>>, vector<1x2x32xf32>
    %78 = vector.shape_cast %77 : vector<1x2x32xf32> to vector<2x32xf32>
    %79 = arith.addf %78, %71 : vector<2x32xf32>
    %80 = arith.negf %79 : vector<2x32xf32>
    %81 = math.exp %80 : vector<2x32xf32>
    %cst_58 = arith.constant 1.000000e+00 : f32
    %82 = vector.broadcast %cst_58 : f32 to vector<2x32xf32>
    %83 = arith.addf %82, %81 : vector<2x32xf32>
    %84 = arith.divf %82, %83 : vector<2x32xf32>
    %85 = arith.index_cast %36 : i32 to index
    %c0_59 = arith.constant 0 : index
    %c0_60 = arith.constant 0 : index
    %86 = vector.load %arg18[%85, %c0_59, %c0_60] : memref<8x2x32xf32, #tpu.memory_space<vmem>>, vector<1x2x32xf32>
    %87 = vector.shape_cast %86 : vector<1x2x32xf32> to vector<2x32xf32>
    %88 = arith.addf %87, %72 : vector<2x32xf32>
    %89 = arith.negf %88 : vector<2x32xf32>
    %90 = math.exp %89 : vector<2x32xf32>
    %cst_61 = arith.constant 1.000000e+00 : f32
    %91 = vector.broadcast %cst_61 : f32 to vector<2x32xf32>
    %92 = arith.addf %91, %90 : vector<2x32xf32>
    %93 = arith.divf %91, %92 : vector<2x32xf32>
    %94 = arith.index_cast %36 : i32 to index
    %c0_62 = arith.constant 0 : index
    %c0_63 = arith.constant 0 : index
    %95 = vector.load %arg19[%94, %c0_62, %c0_63] : memref<8x2x32xf32, #tpu.memory_space<vmem>>, vector<1x2x32xf32>
    %96 = vector.shape_cast %95 : vector<1x2x32xf32> to vector<2x32xf32>
    %97 = arith.mulf %84, %75 : vector<2x32xf32>
    %98 = arith.addf %96, %97 : vector<2x32xf32>
    %99 = math.tanh %98 : vector<2x32xf32>
    %cst_64 = arith.constant 1.000000e+00 : f32
    %100 = vector.broadcast %cst_64 : f32 to vector<2x32xf32>
    %101 = arith.subf %100, %93 : vector<2x32xf32>
    %102 = arith.mulf %101, %99 : vector<2x32xf32>
    %103 = arith.mulf %93, %33 : vector<2x32xf32>
    %104 = arith.addf %102, %103 : vector<2x32xf32>
    %105 = arith.index_cast %c0_i32 : i32 to index
    %c0_65 = arith.constant 0 : index
    %c0_66 = arith.constant 0 : index
    %106 = vector.load %arg20[%105, %c0_65, %c0_66] : memref<8x2x32xf32, #tpu.memory_space<vmem>>, vector<1x2x32xf32>
    %107 = vector.shape_cast %106 : vector<1x2x32xf32> to vector<2x32xf32>
    %108 = vector.shape_cast %70 : vector<2x32xf32> to vector<1x2x32xf32>
    tpu.vector_store %arg20[%105, %c0_65, %c0_66], %108 {strides = array<i32>} : memref<8x2x32xf32, #tpu.memory_space<vmem>>, vector<1x2x32xf32>,
    %109 = arith.index_cast %c0_i32 : i32 to index
    %c0_67 = arith.constant 0 : index
    %c0_68 = arith.constant 0 : index
    %110 = vector.load %arg21[%109, %c0_67, %c0_68] : memref<8x2x32xf32, #tpu.memory_space<vmem>>, vector<1x2x32xf32>
    %111 = vector.shape_cast %110 : vector<1x2x32xf32> to vector<2x32xf32>
    %112 = vector.shape_cast %104 : vector<2x32xf32> to vector<1x2x32xf32>
    tpu.vector_store %arg21[%109, %c0_67, %c0_68], %112 {strides = array<i32>} : memref<8x2x32xf32, #tpu.memory_space<vmem>>, vector<1x2x32xf32>,
    %c1_i32 = arith.constant 1 : i32
    %113 = arith.truncf %70 : vector<2x32xf32> to vector<2x32xbf16>
    %114 = arith.truncf %104 : vector<2x32xf32> to vector<2x32xbf16>
    %c7_i32_69 = arith.constant 7 : i32
    %115 = arith.subi %c7_i32_69, %c1_i32 : i32
    %cst_70 = arith.constant dense<0.000000e+00> : vector<2x32xf32>
    %116 = tpu.matmul %113, %25, %cst_70 {dimension_numbers = #tpu.dot_dimension_numbers<[1], [0], [0], [1], [0, 0, 1, 1], [], []>} : vector<2x32xbf16>, vector<32x32xbf16>, vector<2x32xf32> -> vector<2x32xf32>
    %cst_71 = arith.constant dense<0.000000e+00> : vector<2x32xf32>
    %117 = tpu.matmul %113, %26, %cst_71 {dimension_numbers = #tpu.dot_dimension_numbers<[1], [0], [0], [1], [0, 0, 1, 1], [], []>} : vector<2x32xbf16>, vector<32x32xbf16>, vector<2x32xf32> -> vector<2x32xf32>
    %cst_72 = arith.constant dense<0.000000e+00> : vector<2x32xf32>
    %118 = tpu.matmul %113, %27, %cst_72 {dimension_numbers = #tpu.dot_dimension_numbers<[1], [0], [0], [1], [0, 0, 1, 1], [], []>} : vector<2x32xbf16>, vector<32x32xbf16>, vector<2x32xf32> -> vector<2x32xf32>
    %119 = vector.broadcast %31 : vector<1x32xf32> to vector<2x32xf32>
    %120 = arith.addf %118, %119 : vector<2x32xf32>
    %121 = arith.index_cast %c1_i32 : i32 to index
    %c0_73 = arith.constant 0 : index
    %c0_74 = arith.constant 0 : index
    %122 = vector.load %arg14[%121, %c0_73, %c0_74] : memref<8x2x32xf32, #tpu.memory_space<vmem>>, vector<1x2x32xf32>
    %123 = vector.shape_cast %122 : vector<1x2x32xf32> to vector<2x32xf32>
    %124 = arith.addf %123, %116 : vector<2x32xf32>
    %125 = arith.negf %124 : vector<2x32xf32>
    %126 = math.exp %125 : vector<2x32xf32>
    %cst_75 = arith.constant 1.000000e+00 : f32
    %127 = vector.broadcast %cst_75 : f32 to vector<2x32xf32>
    %128 = arith.addf %127, %126 : vector<2x32xf32>
    %129 = arith.divf %127, %128 : vector<2x32xf32>
    %130 = arith.index_cast %c1_i32 : i32 to index
    %c0_76 = arith.constant 0 : index
    %c0_77 = arith.constant 0 : index
    %131 = vector.load %arg15[%130, %c0_76, %c0_77] : memref<8x2x32xf32, #tpu.memory_space<vmem>>, vector<1x2x32xf32>
    %132 = vector.shape_cast %131 : vector<1x2x32xf32> to vector<2x32xf32>
    %133 = arith.addf %132, %117 : vector<2x32xf32>
    %134 = arith.negf %133 : vector<2x32xf32>
    %135 = math.exp %134 : vector<2x32xf32>
    %cst_78 = arith.constant 1.000000e+00 : f32
    %136 = vector.broadcast %cst_78 : f32 to vector<2x32xf32>
    %137 = arith.addf %136, %135 : vector<2x32xf32>
    %138 = arith.divf %136, %137 : vector<2x32xf32>
    %139 = arith.index_cast %c1_i32 : i32 to index
    %c0_79 = arith.constant 0 : index
    %c0_80 = arith.constant 0 : index
    %140 = vector.load %arg16[%139, %c0_79, %c0_80] : memref<8x2x32xf32, #tpu.memory_space<vmem>>, vector<1x2x32xf32>
    %141 = vector.shape_cast %140 : vector<1x2x32xf32> to vector<2x32xf32>
    %142 = arith.mulf %129, %120 : vector<2x32xf32>
    %143 = arith.addf %141, %142 : vector<2x32xf32>
    %144 = math.tanh %143 : vector<2x32xf32>
    %cst_81 = arith.constant 1.000000e+00 : f32
    %145 = vector.broadcast %cst_81 : f32 to vector<2x32xf32>
    %146 = arith.subf %145, %138 : vector<2x32xf32>
    %147 = arith.mulf %146, %144 : vector<2x32xf32>
    %148 = arith.mulf %138, %70 : vector<2x32xf32>
    %149 = arith.addf %147, %148 : vector<2x32xf32>
    %cst_82 = arith.constant dense<0.000000e+00> : vector<2x32xf32>
    %150 = tpu.matmul %114, %28, %cst_82 {dimension_numbers = #tpu.dot_dimension_numbers<[1], [0], [0], [1], [0, 0, 1, 1], [], []>} : vector<2x32xbf16>, vector<32x32xbf16>, vector<2x32xf32> -> vector<2x32xf32>
    %cst_83 = arith.constant dense<0.000000e+00> : vector<2x32xf32>
    %151 = tpu.matmul %114, %29, %cst_83 {dimension_numbers = #tpu.dot_dimension_numbers<[1], [0], [0], [1], [0, 0, 1, 1], [], []>} : vector<2x32xbf16>, vector<32x32xbf16>, vector<2x32xf32> -> vector<2x32xf32>
    %cst_84 = arith.constant dense<0.000000e+00> : vector<2x32xf32>
    %152 = tpu.matmul %114, %30, %cst_84 {dimension_numbers = #tpu.dot_dimension_numbers<[1], [0], [0], [1], [0, 0, 1, 1], [], []>} : vector<2x32xbf16>, vector<32x32xbf16>, vector<2x32xf32> -> vector<2x32xf32>
    %153 = vector.broadcast %32 : vector<1x32xf32> to vector<2x32xf32>
    %154 = arith.addf %152, %153 : vector<2x32xf32>
    %155 = arith.index_cast %115 : i32 to index
    %c0_85 = arith.constant 0 : index
    %c0_86 = arith.constant 0 : index
    %156 = vector.load %arg17[%155, %c0_85, %c0_86] : memref<8x2x32xf32, #tpu.memory_space<vmem>>, vector<1x2x32xf32>
    %157 = vector.shape_cast %156 : vector<1x2x32xf32> to vector<2x32xf32>
    %158 = arith.addf %157, %150 : vector<2x32xf32>
    %159 = arith.negf %158 : vector<2x32xf32>
    %160 = math.exp %159 : vector<2x32xf32>
    %cst_87 = arith.constant 1.000000e+00 : f32
    %161 = vector.broadcast %cst_87 : f32 to vector<2x32xf32>
    %162 = arith.addf %161, %160 : vector<2x32xf32>
    %163 = arith.divf %161, %162 : vector<2x32xf32>
    %164 = arith.index_cast %115 : i32 to index
    %c0_88 = arith.constant 0 : index
    %c0_89 = arith.constant 0 : index
    %165 = vector.load %arg18[%164, %c0_88, %c0_89] : memref<8x2x32xf32, #tpu.memory_space<vmem>>, vector<1x2x32xf32>
    %166 = vector.shape_cast %165 : vector<1x2x32xf32> to vector<2x32xf32>
    %167 = arith.addf %166, %151 : vector<2x32xf32>
    %168 = arith.negf %167 : vector<2x32xf32>
    %169 = math.exp %168 : vector<2x32xf32>
    %cst_90 = arith.constant 1.000000e+00 : f32
    %170 = vector.broadcast %cst_90 : f32 to vector<2x32xf32>
    %171 = arith.addf %170, %169 : vector<2x32xf32>
    %172 = arith.divf %170, %171 : vector<2x32xf32>
    %173 = arith.index_cast %115 : i32 to index
    %c0_91 = arith.constant 0 : index
    %c0_92 = arith.constant 0 : index
    %174 = vector.load %arg19[%173, %c0_91, %c0_92] : memref<8x2x32xf32, #tpu.memory_space<vmem>>, vector<1x2x32xf32>
    %175 = vector.shape_cast %174 : vector<1x2x32xf32> to vector<2x32xf32>
    %176 = arith.mulf %163, %154 : vector<2x32xf32>
    %177 = arith.addf %175, %176 : vector<2x32xf32>
    %178 = math.tanh %177 : vector<2x32xf32>
    %cst_93 = arith.constant 1.000000e+00 : f32
    %179 = vector.broadcast %cst_93 : f32 to vector<2x32xf32>
    %180 = arith.subf %179, %172 : vector<2x32xf32>
    %181 = arith.mulf %180, %178 : vector<2x32xf32>
    %182 = arith.mulf %172, %104 : vector<2x32xf32>
    %183 = arith.addf %181, %182 : vector<2x32xf32>
    %184 = arith.index_cast %c1_i32 : i32 to index
    %c0_94 = arith.constant 0 : index
    %c0_95 = arith.constant 0 : index
    %185 = vector.load %arg20[%184, %c0_94, %c0_95] : memref<8x2x32xf32, #tpu.memory_space<vmem>>, vector<1x2x32xf32>
    %186 = vector.shape_cast %185 : vector<1x2x32xf32> to vector<2x32xf32>
    %187 = vector.shape_cast %149 : vector<2x32xf32> to vector<1x2x32xf32>
    tpu.vector_store %arg20[%184, %c0_94, %c0_95], %187 {strides = array<i32>} : memref<8x2x32xf32, #tpu.memory_space<vmem>>, vector<1x2x32xf32>,
    %188 = arith.index_cast %c1_i32 : i32 to index
    %c0_96 = arith.constant 0 : index
    %c0_97 = arith.constant 0 : index
    %189 = vector.load %arg21[%188, %c0_96, %c0_97] : memref<8x2x32xf32, #tpu.memory_space<vmem>>, vector<1x2x32xf32>
    %190 = vector.shape_cast %189 : vector<1x2x32xf32> to vector<2x32xf32>
    %191 = vector.shape_cast %183 : vector<2x32xf32> to vector<1x2x32xf32>
    tpu.vector_store %arg21[%188, %c0_96, %c0_97], %191 {strides = array<i32>} : memref<8x2x32xf32, #tpu.memory_space<vmem>>, vector<1x2x32xf32>,
    %c2_i32 = arith.constant 2 : i32
    %192 = arith.truncf %149 : vector<2x32xf32> to vector<2x32xbf16>
    %193 = arith.truncf %183 : vector<2x32xf32> to vector<2x32xbf16>
    %c7_i32_98 = arith.constant 7 : i32
    %194 = arith.subi %c7_i32_98, %c2_i32 : i32
    %cst_99 = arith.constant dense<0.000000e+00> : vector<2x32xf32>
    %195 = tpu.matmul %192, %25, %cst_99 {dimension_numbers = #tpu.dot_dimension_numbers<[1], [0], [0], [1], [0, 0, 1, 1], [], []>} : vector<2x32xbf16>, vector<32x32xbf16>, vector<2x32xf32> -> vector<2x32xf32>
    %cst_100 = arith.constant dense<0.000000e+00> : vector<2x32xf32>
    %196 = tpu.matmul %192, %26, %cst_100 {dimension_numbers = #tpu.dot_dimension_numbers<[1], [0], [0], [1], [0, 0, 1, 1], [], []>} : vector<2x32xbf16>, vector<32x32xbf16>, vector<2x32xf32> -> vector<2x32xf32>
    %cst_101 = arith.constant dense<0.000000e+00> : vector<2x32xf32>
    %197 = tpu.matmul %192, %27, %cst_101 {dimension_numbers = #tpu.dot_dimension_numbers<[1], [0], [0], [1], [0, 0, 1, 1], [], []>} : vector<2x32xbf16>, vector<32x32xbf16>, vector<2x32xf32> -> vector<2x32xf32>
    %198 = vector.broadcast %31 : vector<1x32xf32> to vector<2x32xf32>
    %199 = arith.addf %197, %198 : vector<2x32xf32>
    %200 = arith.index_cast %c2_i32 : i32 to index
    %c0_102 = arith.constant 0 : index
    %c0_103 = arith.constant 0 : index
    %201 = vector.load %arg14[%200, %c0_102, %c0_103] : memref<8x2x32xf32, #tpu.memory_space<vmem>>, vector<1x2x32xf32>
    %202 = vector.shape_cast %201 : vector<1x2x32xf32> to vector<2x32xf32>
    %203 = arith.addf %202, %195 : vector<2x32xf32>
    %204 = arith.negf %203 : vector<2x32xf32>
    %205 = math.exp %204 : vector<2x32xf32>
    %cst_104 = arith.constant 1.000000e+00 : f32
    %206 = vector.broadcast %cst_104 : f32 to vector<2x32xf32>
    %207 = arith.addf %206, %205 : vector<2x32xf32>
    %208 = arith.divf %206, %207 : vector<2x32xf32>
    %209 = arith.index_cast %c2_i32 : i32 to index
    %c0_105 = arith.constant 0 : index
    %c0_106 = arith.constant 0 : index
    %210 = vector.load %arg15[%209, %c0_105, %c0_106] : memref<8x2x32xf32, #tpu.memory_space<vmem>>, vector<1x2x32xf32>
    %211 = vector.shape_cast %210 : vector<1x2x32xf32> to vector<2x32xf32>
    %212 = arith.addf %211, %196 : vector<2x32xf32>
    %213 = arith.negf %212 : vector<2x32xf32>
    %214 = math.exp %213 : vector<2x32xf32>
    %cst_107 = arith.constant 1.000000e+00 : f32
    %215 = vector.broadcast %cst_107 : f32 to vector<2x32xf32>
    %216 = arith.addf %215, %214 : vector<2x32xf32>
    %217 = arith.divf %215, %216 : vector<2x32xf32>
    %218 = arith.index_cast %c2_i32 : i32 to index
    %c0_108 = arith.constant 0 : index
    %c0_109 = arith.constant 0 : index
    %219 = vector.load %arg16[%218, %c0_108, %c0_109] : memref<8x2x32xf32, #tpu.memory_space<vmem>>, vector<1x2x32xf32>
    %220 = vector.shape_cast %219 : vector<1x2x32xf32> to vector<2x32xf32>
    %221 = arith.mulf %208, %199 : vector<2x32xf32>
    %222 = arith.addf %220, %221 : vector<2x32xf32>
    %223 = math.tanh %222 : vector<2x32xf32>
    %cst_110 = arith.constant 1.000000e+00 : f32
    %224 = vector.broadcast %cst_110 : f32 to vector<2x32xf32>
    %225 = arith.subf %224, %217 : vector<2x32xf32>
    %226 = arith.mulf %225, %223 : vector<2x32xf32>
    %227 = arith.mulf %217, %149 : vector<2x32xf32>
    %228 = arith.addf %226, %227 : vector<2x32xf32>
    %cst_111 = arith.constant dense<0.000000e+00> : vector<2x32xf32>
    %229 = tpu.matmul %193, %28, %cst_111 {dimension_numbers = #tpu.dot_dimension_numbers<[1], [0], [0], [1], [0, 0, 1, 1], [], []>} : vector<2x32xbf16>, vector<32x32xbf16>, vector<2x32xf32> -> vector<2x32xf32>
    %cst_112 = arith.constant dense<0.000000e+00> : vector<2x32xf32>
    %230 = tpu.matmul %193, %29, %cst_112 {dimension_numbers = #tpu.dot_dimension_numbers<[1], [0], [0], [1], [0, 0, 1, 1], [], []>} : vector<2x32xbf16>, vector<32x32xbf16>, vector<2x32xf32> -> vector<2x32xf32>
    %cst_113 = arith.constant dense<0.000000e+00> : vector<2x32xf32>
    %231 = tpu.matmul %193, %30, %cst_113 {dimension_numbers = #tpu.dot_dimension_numbers<[1], [0], [0], [1], [0, 0, 1, 1], [], []>} : vector<2x32xbf16>, vector<32x32xbf16>, vector<2x32xf32> -> vector<2x32xf32>
    %232 = vector.broadcast %32 : vector<1x32xf32> to vector<2x32xf32>
    %233 = arith.addf %231, %232 : vector<2x32xf32>
    %234 = arith.index_cast %194 : i32 to index
    %c0_114 = arith.constant 0 : index
    %c0_115 = arith.constant 0 : index
    %235 = vector.load %arg17[%234, %c0_114, %c0_115] : memref<8x2x32xf32, #tpu.memory_space<vmem>>, vector<1x2x32xf32>
    %236 = vector.shape_cast %235 : vector<1x2x32xf32> to vector<2x32xf32>
    %237 = arith.addf %236, %229 : vector<2x32xf32>
    %238 = arith.negf %237 : vector<2x32xf32>
    %239 = math.exp %238 : vector<2x32xf32>
    %cst_116 = arith.constant 1.000000e+00 : f32
    %240 = vector.broadcast %cst_116 : f32 to vector<2x32xf32>
    %241 = arith.addf %240, %239 : vector<2x32xf32>
    %242 = arith.divf %240, %241 : vector<2x32xf32>
    %243 = arith.index_cast %194 : i32 to index
    %c0_117 = arith.constant 0 : index
    %c0_118 = arith.constant 0 : index
    %244 = vector.load %arg18[%243, %c0_117, %c0_118] : memref<8x2x32xf32, #tpu.memory_space<vmem>>, vector<1x2x32xf32>
    %245 = vector.shape_cast %244 : vector<1x2x32xf32> to vector<2x32xf32>
    %246 = arith.addf %245, %230 : vector<2x32xf32>
    %247 = arith.negf %246 : vector<2x32xf32>
    %248 = math.exp %247 : vector<2x32xf32>
    %cst_119 = arith.constant 1.000000e+00 : f32
    %249 = vector.broadcast %cst_119 : f32 to vector<2x32xf32>
    %250 = arith.addf %249, %248 : vector<2x32xf32>
    %251 = arith.divf %249, %250 : vector<2x32xf32>
    %252 = arith.index_cast %194 : i32 to index
    %c0_120 = arith.constant 0 : index
    %c0_121 = arith.constant 0 : index
    %253 = vector.load %arg19[%252, %c0_120, %c0_121] : memref<8x2x32xf32, #tpu.memory_space<vmem>>, vector<1x2x32xf32>
    %254 = vector.shape_cast %253 : vector<1x2x32xf32> to vector<2x32xf32>
    %255 = arith.mulf %242, %233 : vector<2x32xf32>
    %256 = arith.addf %254, %255 : vector<2x32xf32>
    %257 = math.tanh %256 : vector<2x32xf32>
    %cst_122 = arith.constant 1.000000e+00 : f32
    %258 = vector.broadcast %cst_122 : f32 to vector<2x32xf32>
    %259 = arith.subf %258, %251 : vector<2x32xf32>
    %260 = arith.mulf %259, %257 : vector<2x32xf32>
    %261 = arith.mulf %251, %183 : vector<2x32xf32>
    %262 = arith.addf %260, %261 : vector<2x32xf32>
    %263 = arith.index_cast %c2_i32 : i32 to index
    %c0_123 = arith.constant 0 : index
    %c0_124 = arith.constant 0 : index
    %264 = vector.load %arg20[%263, %c0_123, %c0_124] : memref<8x2x32xf32, #tpu.memory_space<vmem>>, vector<1x2x32xf32>
    %265 = vector.shape_cast %264 : vector<1x2x32xf32> to vector<2x32xf32>
    %266 = vector.shape_cast %228 : vector<2x32xf32> to vector<1x2x32xf32>
    tpu.vector_store %arg20[%263, %c0_123, %c0_124], %266 {strides = array<i32>} : memref<8x2x32xf32, #tpu.memory_space<vmem>>, vector<1x2x32xf32>,
    %267 = arith.index_cast %c2_i32 : i32 to index
    %c0_125 = arith.constant 0 : index
    %c0_126 = arith.constant 0 : index
    %268 = vector.load %arg21[%267, %c0_125, %c0_126] : memref<8x2x32xf32, #tpu.memory_space<vmem>>, vector<1x2x32xf32>
    %269 = vector.shape_cast %268 : vector<1x2x32xf32> to vector<2x32xf32>
    %270 = vector.shape_cast %262 : vector<2x32xf32> to vector<1x2x32xf32>
    tpu.vector_store %arg21[%267, %c0_125, %c0_126], %270 {strides = array<i32>} : memref<8x2x32xf32, #tpu.memory_space<vmem>>, vector<1x2x32xf32>,
    %c3_i32 = arith.constant 3 : i32
    %271 = arith.truncf %228 : vector<2x32xf32> to vector<2x32xbf16>
    %272 = arith.truncf %262 : vector<2x32xf32> to vector<2x32xbf16>
    %c7_i32_127 = arith.constant 7 : i32
    %273 = arith.subi %c7_i32_127, %c3_i32 : i32
    %cst_128 = arith.constant dense<0.000000e+00> : vector<2x32xf32>
    %274 = tpu.matmul %271, %25, %cst_128 {dimension_numbers = #tpu.dot_dimension_numbers<[1], [0], [0], [1], [0, 0, 1, 1], [], []>} : vector<2x32xbf16>, vector<32x32xbf16>, vector<2x32xf32> -> vector<2x32xf32>
    %cst_129 = arith.constant dense<0.000000e+00> : vector<2x32xf32>
    %275 = tpu.matmul %271, %26, %cst_129 {dimension_numbers = #tpu.dot_dimension_numbers<[1], [0], [0], [1], [0, 0, 1, 1], [], []>} : vector<2x32xbf16>, vector<32x32xbf16>, vector<2x32xf32> -> vector<2x32xf32>
    %cst_130 = arith.constant dense<0.000000e+00> : vector<2x32xf32>
    %276 = tpu.matmul %271, %27, %cst_130 {dimension_numbers = #tpu.dot_dimension_numbers<[1], [0], [0], [1], [0, 0, 1, 1], [], []>} : vector<2x32xbf16>, vector<32x32xbf16>, vector<2x32xf32> -> vector<2x32xf32>
    %277 = vector.broadcast %31 : vector<1x32xf32> to vector<2x32xf32>
    %278 = arith.addf %276, %277 : vector<2x32xf32>
    %279 = arith.index_cast %c3_i32 : i32 to index
    %c0_131 = arith.constant 0 : index
    %c0_132 = arith.constant 0 : index
    %280 = vector.load %arg14[%279, %c0_131, %c0_132] : memref<8x2x32xf32, #tpu.memory_space<vmem>>, vector<1x2x32xf32>
    %281 = vector.shape_cast %280 : vector<1x2x32xf32> to vector<2x32xf32>
    %282 = arith.addf %281, %274 : vector<2x32xf32>
    %283 = arith.negf %282 : vector<2x32xf32>
    %284 = math.exp %283 : vector<2x32xf32>
    %cst_133 = arith.constant 1.000000e+00 : f32
    %285 = vector.broadcast %cst_133 : f32 to vector<2x32xf32>
    %286 = arith.addf %285, %284 : vector<2x32xf32>
    %287 = arith.divf %285, %286 : vector<2x32xf32>
    %288 = arith.index_cast %c3_i32 : i32 to index
    %c0_134 = arith.constant 0 : index
    %c0_135 = arith.constant 0 : index
    %289 = vector.load %arg15[%288, %c0_134, %c0_135] : memref<8x2x32xf32, #tpu.memory_space<vmem>>, vector<1x2x32xf32>
    %290 = vector.shape_cast %289 : vector<1x2x32xf32> to vector<2x32xf32>
    %291 = arith.addf %290, %275 : vector<2x32xf32>
    %292 = arith.negf %291 : vector<2x32xf32>
    %293 = math.exp %292 : vector<2x32xf32>
    %cst_136 = arith.constant 1.000000e+00 : f32
    %294 = vector.broadcast %cst_136 : f32 to vector<2x32xf32>
    %295 = arith.addf %294, %293 : vector<2x32xf32>
    %296 = arith.divf %294, %295 : vector<2x32xf32>
    %297 = arith.index_cast %c3_i32 : i32 to index
    %c0_137 = arith.constant 0 : index
    %c0_138 = arith.constant 0 : index
    %298 = vector.load %arg16[%297, %c0_137, %c0_138] : memref<8x2x32xf32, #tpu.memory_space<vmem>>, vector<1x2x32xf32>
    %299 = vector.shape_cast %298 : vector<1x2x32xf32> to vector<2x32xf32>
    %300 = arith.mulf %287, %278 : vector<2x32xf32>
    %301 = arith.addf %299, %300 : vector<2x32xf32>
    %302 = math.tanh %301 : vector<2x32xf32>
    %cst_139 = arith.constant 1.000000e+00 : f32
    %303 = vector.broadcast %cst_139 : f32 to vector<2x32xf32>
    %304 = arith.subf %303, %296 : vector<2x32xf32>
    %305 = arith.mulf %304, %302 : vector<2x32xf32>
    %306 = arith.mulf %296, %228 : vector<2x32xf32>
    %307 = arith.addf %305, %306 : vector<2x32xf32>
    %cst_140 = arith.constant dense<0.000000e+00> : vector<2x32xf32>
    %308 = tpu.matmul %272, %28, %cst_140 {dimension_numbers = #tpu.dot_dimension_numbers<[1], [0], [0], [1], [0, 0, 1, 1], [], []>} : vector<2x32xbf16>, vector<32x32xbf16>, vector<2x32xf32> -> vector<2x32xf32>
    %cst_141 = arith.constant dense<0.000000e+00> : vector<2x32xf32>
    %309 = tpu.matmul %272, %29, %cst_141 {dimension_numbers = #tpu.dot_dimension_numbers<[1], [0], [0], [1], [0, 0, 1, 1], [], []>} : vector<2x32xbf16>, vector<32x32xbf16>, vector<2x32xf32> -> vector<2x32xf32>
    %cst_142 = arith.constant dense<0.000000e+00> : vector<2x32xf32>
    %310 = tpu.matmul %272, %30, %cst_142 {dimension_numbers = #tpu.dot_dimension_numbers<[1], [0], [0], [1], [0, 0, 1, 1], [], []>} : vector<2x32xbf16>, vector<32x32xbf16>, vector<2x32xf32> -> vector<2x32xf32>
    %311 = vector.broadcast %32 : vector<1x32xf32> to vector<2x32xf32>
    %312 = arith.addf %310, %311 : vector<2x32xf32>
    %313 = arith.index_cast %273 : i32 to index
    %c0_143 = arith.constant 0 : index
    %c0_144 = arith.constant 0 : index
    %314 = vector.load %arg17[%313, %c0_143, %c0_144] : memref<8x2x32xf32, #tpu.memory_space<vmem>>, vector<1x2x32xf32>
    %315 = vector.shape_cast %314 : vector<1x2x32xf32> to vector<2x32xf32>
    %316 = arith.addf %315, %308 : vector<2x32xf32>
    %317 = arith.negf %316 : vector<2x32xf32>
    %318 = math.exp %317 : vector<2x32xf32>
    %cst_145 = arith.constant 1.000000e+00 : f32
    %319 = vector.broadcast %cst_145 : f32 to vector<2x32xf32>
    %320 = arith.addf %319, %318 : vector<2x32xf32>
    %321 = arith.divf %319, %320 : vector<2x32xf32>
    %322 = arith.index_cast %273 : i32 to index
    %c0_146 = arith.constant 0 : index
    %c0_147 = arith.constant 0 : index
    %323 = vector.load %arg18[%322, %c0_146, %c0_147] : memref<8x2x32xf32, #tpu.memory_space<vmem>>, vector<1x2x32xf32>
    %324 = vector.shape_cast %323 : vector<1x2x32xf32> to vector<2x32xf32>
    %325 = arith.addf %324, %309 : vector<2x32xf32>
    %326 = arith.negf %325 : vector<2x32xf32>
    %327 = math.exp %326 : vector<2x32xf32>
    %cst_148 = arith.constant 1.000000e+00 : f32
    %328 = vector.broadcast %cst_148 : f32 to vector<2x32xf32>
    %329 = arith.addf %328, %327 : vector<2x32xf32>
    %330 = arith.divf %328, %329 : vector<2x32xf32>
    %331 = arith.index_cast %273 : i32 to index
    %c0_149 = arith.constant 0 : index
    %c0_150 = arith.constant 0 : index
    %332 = vector.load %arg19[%331, %c0_149, %c0_150] : memref<8x2x32xf32, #tpu.memory_space<vmem>>, vector<1x2x32xf32>
    %333 = vector.shape_cast %332 : vector<1x2x32xf32> to vector<2x32xf32>
    %334 = arith.mulf %321, %312 : vector<2x32xf32>
    %335 = arith.addf %333, %334 : vector<2x32xf32>
    %336 = math.tanh %335 : vector<2x32xf32>
    %cst_151 = arith.constant 1.000000e+00 : f32
    %337 = vector.broadcast %cst_151 : f32 to vector<2x32xf32>
    %338 = arith.subf %337, %330 : vector<2x32xf32>
    %339 = arith.mulf %338, %336 : vector<2x32xf32>
    %340 = arith.mulf %330, %262 : vector<2x32xf32>
    %341 = arith.addf %339, %340 : vector<2x32xf32>
    %342 = arith.index_cast %c3_i32 : i32 to index
    %c0_152 = arith.constant 0 : index
    %c0_153 = arith.constant 0 : index
    %343 = vector.load %arg20[%342, %c0_152, %c0_153] : memref<8x2x32xf32, #tpu.memory_space<vmem>>, vector<1x2x32xf32>
    %344 = vector.shape_cast %343 : vector<1x2x32xf32> to vector<2x32xf32>
    %345 = vector.shape_cast %307 : vector<2x32xf32> to vector<1x2x32xf32>
    tpu.vector_store %arg20[%342, %c0_152, %c0_153], %345 {strides = array<i32>} : memref<8x2x32xf32, #tpu.memory_space<vmem>>, vector<1x2x32xf32>,
    %346 = arith.index_cast %c3_i32 : i32 to index
    %c0_154 = arith.constant 0 : index
    %c0_155 = arith.constant 0 : index
    %347 = vector.load %arg21[%346, %c0_154, %c0_155] : memref<8x2x32xf32, #tpu.memory_space<vmem>>, vector<1x2x32xf32>
    %348 = vector.shape_cast %347 : vector<1x2x32xf32> to vector<2x32xf32>
    %349 = vector.shape_cast %341 : vector<2x32xf32> to vector<1x2x32xf32>
    tpu.vector_store %arg21[%346, %c0_154, %c0_155], %349 {strides = array<i32>} : memref<8x2x32xf32, #tpu.memory_space<vmem>>, vector<1x2x32xf32>,
    %c4_i32 = arith.constant 4 : i32
    %350 = arith.truncf %307 : vector<2x32xf32> to vector<2x32xbf16>
    %351 = arith.truncf %341 : vector<2x32xf32> to vector<2x32xbf16>
    %c7_i32_156 = arith.constant 7 : i32
    %352 = arith.subi %c7_i32_156, %c4_i32 : i32
    %cst_157 = arith.constant dense<0.000000e+00> : vector<2x32xf32>
    %353 = tpu.matmul %350, %25, %cst_157 {dimension_numbers = #tpu.dot_dimension_numbers<[1], [0], [0], [1], [0, 0, 1, 1], [], []>} : vector<2x32xbf16>, vector<32x32xbf16>, vector<2x32xf32> -> vector<2x32xf32>
    %cst_158 = arith.constant dense<0.000000e+00> : vector<2x32xf32>
    %354 = tpu.matmul %350, %26, %cst_158 {dimension_numbers = #tpu.dot_dimension_numbers<[1], [0], [0], [1], [0, 0, 1, 1], [], []>} : vector<2x32xbf16>, vector<32x32xbf16>, vector<2x32xf32> -> vector<2x32xf32>
    %cst_159 = arith.constant dense<0.000000e+00> : vector<2x32xf32>
    %355 = tpu.matmul %350, %27, %cst_159 {dimension_numbers = #tpu.dot_dimension_numbers<[1], [0], [0], [1], [0, 0, 1, 1], [], []>} : vector<2x32xbf16>, vector<32x32xbf16>, vector<2x32xf32> -> vector<2x32xf32>
    %356 = vector.broadcast %31 : vector<1x32xf32> to vector<2x32xf32>
    %357 = arith.addf %355, %356 : vector<2x32xf32>
    %358 = arith.index_cast %c4_i32 : i32 to index
    %c0_160 = arith.constant 0 : index
    %c0_161 = arith.constant 0 : index
    %359 = vector.load %arg14[%358, %c0_160, %c0_161] : memref<8x2x32xf32, #tpu.memory_space<vmem>>, vector<1x2x32xf32>
    %360 = vector.shape_cast %359 : vector<1x2x32xf32> to vector<2x32xf32>
    %361 = arith.addf %360, %353 : vector<2x32xf32>
    %362 = arith.negf %361 : vector<2x32xf32>
    %363 = math.exp %362 : vector<2x32xf32>
    %cst_162 = arith.constant 1.000000e+00 : f32
    %364 = vector.broadcast %cst_162 : f32 to vector<2x32xf32>
    %365 = arith.addf %364, %363 : vector<2x32xf32>
    %366 = arith.divf %364, %365 : vector<2x32xf32>
    %367 = arith.index_cast %c4_i32 : i32 to index
    %c0_163 = arith.constant 0 : index
    %c0_164 = arith.constant 0 : index
    %368 = vector.load %arg15[%367, %c0_163, %c0_164] : memref<8x2x32xf32, #tpu.memory_space<vmem>>, vector<1x2x32xf32>
    %369 = vector.shape_cast %368 : vector<1x2x32xf32> to vector<2x32xf32>
    %370 = arith.addf %369, %354 : vector<2x32xf32>
    %371 = arith.negf %370 : vector<2x32xf32>
    %372 = math.exp %371 : vector<2x32xf32>
    %cst_165 = arith.constant 1.000000e+00 : f32
    %373 = vector.broadcast %cst_165 : f32 to vector<2x32xf32>
    %374 = arith.addf %373, %372 : vector<2x32xf32>
    %375 = arith.divf %373, %374 : vector<2x32xf32>
    %376 = arith.index_cast %c4_i32 : i32 to index
    %c0_166 = arith.constant 0 : index
    %c0_167 = arith.constant 0 : index
    %377 = vector.load %arg16[%376, %c0_166, %c0_167] : memref<8x2x32xf32, #tpu.memory_space<vmem>>, vector<1x2x32xf32>
    %378 = vector.shape_cast %377 : vector<1x2x32xf32> to vector<2x32xf32>
    %379 = arith.mulf %366, %357 : vector<2x32xf32>
    %380 = arith.addf %378, %379 : vector<2x32xf32>
    %381 = math.tanh %380 : vector<2x32xf32>
    %cst_168 = arith.constant 1.000000e+00 : f32
    %382 = vector.broadcast %cst_168 : f32 to vector<2x32xf32>
    %383 = arith.subf %382, %375 : vector<2x32xf32>
    %384 = arith.mulf %383, %381 : vector<2x32xf32>
    %385 = arith.mulf %375, %307 : vector<2x32xf32>
    %386 = arith.addf %384, %385 : vector<2x32xf32>
    %cst_169 = arith.constant dense<0.000000e+00> : vector<2x32xf32>
    %387 = tpu.matmul %351, %28, %cst_169 {dimension_numbers = #tpu.dot_dimension_numbers<[1], [0], [0], [1], [0, 0, 1, 1], [], []>} : vector<2x32xbf16>, vector<32x32xbf16>, vector<2x32xf32> -> vector<2x32xf32>
    %cst_170 = arith.constant dense<0.000000e+00> : vector<2x32xf32>
    %388 = tpu.matmul %351, %29, %cst_170 {dimension_numbers = #tpu.dot_dimension_numbers<[1], [0], [0], [1], [0, 0, 1, 1], [], []>} : vector<2x32xbf16>, vector<32x32xbf16>, vector<2x32xf32> -> vector<2x32xf32>
    %cst_171 = arith.constant dense<0.000000e+00> : vector<2x32xf32>
    %389 = tpu.matmul %351, %30, %cst_171 {dimension_numbers = #tpu.dot_dimension_numbers<[1], [0], [0], [1], [0, 0, 1, 1], [], []>} : vector<2x32xbf16>, vector<32x32xbf16>, vector<2x32xf32> -> vector<2x32xf32>
    %390 = vector.broadcast %32 : vector<1x32xf32> to vector<2x32xf32>
    %391 = arith.addf %389, %390 : vector<2x32xf32>
    %392 = arith.index_cast %352 : i32 to index
    %c0_172 = arith.constant 0 : index
    %c0_173 = arith.constant 0 : index
    %393 = vector.load %arg17[%392, %c0_172, %c0_173] : memref<8x2x32xf32, #tpu.memory_space<vmem>>, vector<1x2x32xf32>
    %394 = vector.shape_cast %393 : vector<1x2x32xf32> to vector<2x32xf32>
    %395 = arith.addf %394, %387 : vector<2x32xf32>
    %396 = arith.negf %395 : vector<2x32xf32>
    %397 = math.exp %396 : vector<2x32xf32>
    %cst_174 = arith.constant 1.000000e+00 : f32
    %398 = vector.broadcast %cst_174 : f32 to vector<2x32xf32>
    %399 = arith.addf %398, %397 : vector<2x32xf32>
    %400 = arith.divf %398, %399 : vector<2x32xf32>
    %401 = arith.index_cast %352 : i32 to index
    %c0_175 = arith.constant 0 : index
    %c0_176 = arith.constant 0 : index
    %402 = vector.load %arg18[%401, %c0_175, %c0_176] : memref<8x2x32xf32, #tpu.memory_space<vmem>>, vector<1x2x32xf32>
    %403 = vector.shape_cast %402 : vector<1x2x32xf32> to vector<2x32xf32>
    %404 = arith.addf %403, %388 : vector<2x32xf32>
    %405 = arith.negf %404 : vector<2x32xf32>
    %406 = math.exp %405 : vector<2x32xf32>
    %cst_177 = arith.constant 1.000000e+00 : f32
    %407 = vector.broadcast %cst_177 : f32 to vector<2x32xf32>
    %408 = arith.addf %407, %406 : vector<2x32xf32>
    %409 = arith.divf %407, %408 : vector<2x32xf32>
    %410 = arith.index_cast %352 : i32 to index
    %c0_178 = arith.constant 0 : index
    %c0_179 = arith.constant 0 : index
    %411 = vector.load %arg19[%410, %c0_178, %c0_179] : memref<8x2x32xf32, #tpu.memory_space<vmem>>, vector<1x2x32xf32>
    %412 = vector.shape_cast %411 : vector<1x2x32xf32> to vector<2x32xf32>
    %413 = arith.mulf %400, %391 : vector<2x32xf32>
    %414 = arith.addf %412, %413 : vector<2x32xf32>
    %415 = math.tanh %414 : vector<2x32xf32>
    %cst_180 = arith.constant 1.000000e+00 : f32
    %416 = vector.broadcast %cst_180 : f32 to vector<2x32xf32>
    %417 = arith.subf %416, %409 : vector<2x32xf32>
    %418 = arith.mulf %417, %415 : vector<2x32xf32>
    %419 = arith.mulf %409, %341 : vector<2x32xf32>
    %420 = arith.addf %418, %419 : vector<2x32xf32>
    %421 = arith.index_cast %c4_i32 : i32 to index
    %c0_181 = arith.constant 0 : index
    %c0_182 = arith.constant 0 : index
    %422 = vector.load %arg20[%421, %c0_181, %c0_182] : memref<8x2x32xf32, #tpu.memory_space<vmem>>, vector<1x2x32xf32>
    %423 = vector.shape_cast %422 : vector<1x2x32xf32> to vector<2x32xf32>
    %424 = vector.shape_cast %386 : vector<2x32xf32> to vector<1x2x32xf32>
    tpu.vector_store %arg20[%421, %c0_181, %c0_182], %424 {strides = array<i32>} : memref<8x2x32xf32, #tpu.memory_space<vmem>>, vector<1x2x32xf32>,
    %425 = arith.index_cast %c4_i32 : i32 to index
    %c0_183 = arith.constant 0 : index
    %c0_184 = arith.constant 0 : index
    %426 = vector.load %arg21[%425, %c0_183, %c0_184] : memref<8x2x32xf32, #tpu.memory_space<vmem>>, vector<1x2x32xf32>
    %427 = vector.shape_cast %426 : vector<1x2x32xf32> to vector<2x32xf32>
    %428 = vector.shape_cast %420 : vector<2x32xf32> to vector<1x2x32xf32>
    tpu.vector_store %arg21[%425, %c0_183, %c0_184], %428 {strides = array<i32>} : memref<8x2x32xf32, #tpu.memory_space<vmem>>, vector<1x2x32xf32>,
    %c5_i32 = arith.constant 5 : i32
    %429 = arith.truncf %386 : vector<2x32xf32> to vector<2x32xbf16>
    %430 = arith.truncf %420 : vector<2x32xf32> to vector<2x32xbf16>
    %c7_i32_185 = arith.constant 7 : i32
    %431 = arith.subi %c7_i32_185, %c5_i32 : i32
    %cst_186 = arith.constant dense<0.000000e+00> : vector<2x32xf32>
    %432 = tpu.matmul %429, %25, %cst_186 {dimension_numbers = #tpu.dot_dimension_numbers<[1], [0], [0], [1], [0, 0, 1, 1], [], []>} : vector<2x32xbf16>, vector<32x32xbf16>, vector<2x32xf32> -> vector<2x32xf32>
    %cst_187 = arith.constant dense<0.000000e+00> : vector<2x32xf32>
    %433 = tpu.matmul %429, %26, %cst_187 {dimension_numbers = #tpu.dot_dimension_numbers<[1], [0], [0], [1], [0, 0, 1, 1], [], []>} : vector<2x32xbf16>, vector<32x32xbf16>, vector<2x32xf32> -> vector<2x32xf32>
    %cst_188 = arith.constant dense<0.000000e+00> : vector<2x32xf32>
    %434 = tpu.matmul %429, %27, %cst_188 {dimension_numbers = #tpu.dot_dimension_numbers<[1], [0], [0], [1], [0, 0, 1, 1], [], []>} : vector<2x32xbf16>, vector<32x32xbf16>, vector<2x32xf32> -> vector<2x32xf32>
    %435 = vector.broadcast %31 : vector<1x32xf32> to vector<2x32xf32>
    %436 = arith.addf %434, %435 : vector<2x32xf32>
    %437 = arith.index_cast %c5_i32 : i32 to index
    %c0_189 = arith.constant 0 : index
    %c0_190 = arith.constant 0 : index
    %438 = vector.load %arg14[%437, %c0_189, %c0_190] : memref<8x2x32xf32, #tpu.memory_space<vmem>>, vector<1x2x32xf32>
    %439 = vector.shape_cast %438 : vector<1x2x32xf32> to vector<2x32xf32>
    %440 = arith.addf %439, %432 : vector<2x32xf32>
    %441 = arith.negf %440 : vector<2x32xf32>
    %442 = math.exp %441 : vector<2x32xf32>
    %cst_191 = arith.constant 1.000000e+00 : f32
    %443 = vector.broadcast %cst_191 : f32 to vector<2x32xf32>
    %444 = arith.addf %443, %442 : vector<2x32xf32>
    %445 = arith.divf %443, %444 : vector<2x32xf32>
    %446 = arith.index_cast %c5_i32 : i32 to index
    %c0_192 = arith.constant 0 : index
    %c0_193 = arith.constant 0 : index
    %447 = vector.load %arg15[%446, %c0_192, %c0_193] : memref<8x2x32xf32, #tpu.memory_space<vmem>>, vector<1x2x32xf32>
    %448 = vector.shape_cast %447 : vector<1x2x32xf32> to vector<2x32xf32>
    %449 = arith.addf %448, %433 : vector<2x32xf32>
    %450 = arith.negf %449 : vector<2x32xf32>
    %451 = math.exp %450 : vector<2x32xf32>
    %cst_194 = arith.constant 1.000000e+00 : f32
    %452 = vector.broadcast %cst_194 : f32 to vector<2x32xf32>
    %453 = arith.addf %452, %451 : vector<2x32xf32>
    %454 = arith.divf %452, %453 : vector<2x32xf32>
    %455 = arith.index_cast %c5_i32 : i32 to index
    %c0_195 = arith.constant 0 : index
    %c0_196 = arith.constant 0 : index
    %456 = vector.load %arg16[%455, %c0_195, %c0_196] : memref<8x2x32xf32, #tpu.memory_space<vmem>>, vector<1x2x32xf32>
    %457 = vector.shape_cast %456 : vector<1x2x32xf32> to vector<2x32xf32>
    %458 = arith.mulf %445, %436 : vector<2x32xf32>
    %459 = arith.addf %457, %458 : vector<2x32xf32>
    %460 = math.tanh %459 : vector<2x32xf32>
    %cst_197 = arith.constant 1.000000e+00 : f32
    %461 = vector.broadcast %cst_197 : f32 to vector<2x32xf32>
    %462 = arith.subf %461, %454 : vector<2x32xf32>
    %463 = arith.mulf %462, %460 : vector<2x32xf32>
    %464 = arith.mulf %454, %386 : vector<2x32xf32>
    %465 = arith.addf %463, %464 : vector<2x32xf32>
    %cst_198 = arith.constant dense<0.000000e+00> : vector<2x32xf32>
    %466 = tpu.matmul %430, %28, %cst_198 {dimension_numbers = #tpu.dot_dimension_numbers<[1], [0], [0], [1], [0, 0, 1, 1], [], []>} : vector<2x32xbf16>, vector<32x32xbf16>, vector<2x32xf32> -> vector<2x32xf32>
    %cst_199 = arith.constant dense<0.000000e+00> : vector<2x32xf32>
    %467 = tpu.matmul %430, %29, %cst_199 {dimension_numbers = #tpu.dot_dimension_numbers<[1], [0], [0], [1], [0, 0, 1, 1], [], []>} : vector<2x32xbf16>, vector<32x32xbf16>, vector<2x32xf32> -> vector<2x32xf32>
    %cst_200 = arith.constant dense<0.000000e+00> : vector<2x32xf32>
    %468 = tpu.matmul %430, %30, %cst_200 {dimension_numbers = #tpu.dot_dimension_numbers<[1], [0], [0], [1], [0, 0, 1, 1], [], []>} : vector<2x32xbf16>, vector<32x32xbf16>, vector<2x32xf32> -> vector<2x32xf32>
    %469 = vector.broadcast %32 : vector<1x32xf32> to vector<2x32xf32>
    %470 = arith.addf %468, %469 : vector<2x32xf32>
    %471 = arith.index_cast %431 : i32 to index
    %c0_201 = arith.constant 0 : index
    %c0_202 = arith.constant 0 : index
    %472 = vector.load %arg17[%471, %c0_201, %c0_202] : memref<8x2x32xf32, #tpu.memory_space<vmem>>, vector<1x2x32xf32>
    %473 = vector.shape_cast %472 : vector<1x2x32xf32> to vector<2x32xf32>
    %474 = arith.addf %473, %466 : vector<2x32xf32>
    %475 = arith.negf %474 : vector<2x32xf32>
    %476 = math.exp %475 : vector<2x32xf32>
    %cst_203 = arith.constant 1.000000e+00 : f32
    %477 = vector.broadcast %cst_203 : f32 to vector<2x32xf32>
    %478 = arith.addf %477, %476 : vector<2x32xf32>
    %479 = arith.divf %477, %478 : vector<2x32xf32>
    %480 = arith.index_cast %431 : i32 to index
    %c0_204 = arith.constant 0 : index
    %c0_205 = arith.constant 0 : index
    %481 = vector.load %arg18[%480, %c0_204, %c0_205] : memref<8x2x32xf32, #tpu.memory_space<vmem>>, vector<1x2x32xf32>
    %482 = vector.shape_cast %481 : vector<1x2x32xf32> to vector<2x32xf32>
    %483 = arith.addf %482, %467 : vector<2x32xf32>
    %484 = arith.negf %483 : vector<2x32xf32>
    %485 = math.exp %484 : vector<2x32xf32>
    %cst_206 = arith.constant 1.000000e+00 : f32
    %486 = vector.broadcast %cst_206 : f32 to vector<2x32xf32>
    %487 = arith.addf %486, %485 : vector<2x32xf32>
    %488 = arith.divf %486, %487 : vector<2x32xf32>
    %489 = arith.index_cast %431 : i32 to index
    %c0_207 = arith.constant 0 : index
    %c0_208 = arith.constant 0 : index
    %490 = vector.load %arg19[%489, %c0_207, %c0_208] : memref<8x2x32xf32, #tpu.memory_space<vmem>>, vector<1x2x32xf32>
    %491 = vector.shape_cast %490 : vector<1x2x32xf32> to vector<2x32xf32>
    %492 = arith.mulf %479, %470 : vector<2x32xf32>
    %493 = arith.addf %491, %492 : vector<2x32xf32>
    %494 = math.tanh %493 : vector<2x32xf32>
    %cst_209 = arith.constant 1.000000e+00 : f32
    %495 = vector.broadcast %cst_209 : f32 to vector<2x32xf32>
    %496 = arith.subf %495, %488 : vector<2x32xf32>
    %497 = arith.mulf %496, %494 : vector<2x32xf32>
    %498 = arith.mulf %488, %420 : vector<2x32xf32>
    %499 = arith.addf %497, %498 : vector<2x32xf32>
    %500 = arith.index_cast %c5_i32 : i32 to index
    %c0_210 = arith.constant 0 : index
    %c0_211 = arith.constant 0 : index
    %501 = vector.load %arg20[%500, %c0_210, %c0_211] : memref<8x2x32xf32, #tpu.memory_space<vmem>>, vector<1x2x32xf32>
    %502 = vector.shape_cast %501 : vector<1x2x32xf32> to vector<2x32xf32>
    %503 = vector.shape_cast %465 : vector<2x32xf32> to vector<1x2x32xf32>
    tpu.vector_store %arg20[%500, %c0_210, %c0_211], %503 {strides = array<i32>} : memref<8x2x32xf32, #tpu.memory_space<vmem>>, vector<1x2x32xf32>,
    %504 = arith.index_cast %c5_i32 : i32 to index
    %c0_212 = arith.constant 0 : index
    %c0_213 = arith.constant 0 : index
    %505 = vector.load %arg21[%504, %c0_212, %c0_213] : memref<8x2x32xf32, #tpu.memory_space<vmem>>, vector<1x2x32xf32>
    %506 = vector.shape_cast %505 : vector<1x2x32xf32> to vector<2x32xf32>
    %507 = vector.shape_cast %499 : vector<2x32xf32> to vector<1x2x32xf32>
    tpu.vector_store %arg21[%504, %c0_212, %c0_213], %507 {strides = array<i32>} : memref<8x2x32xf32, #tpu.memory_space<vmem>>, vector<1x2x32xf32>,
    %c6_i32 = arith.constant 6 : i32
    %508 = arith.truncf %465 : vector<2x32xf32> to vector<2x32xbf16>
    %509 = arith.truncf %499 : vector<2x32xf32> to vector<2x32xbf16>
    %c7_i32_214 = arith.constant 7 : i32
    %510 = arith.subi %c7_i32_214, %c6_i32 : i32
    %cst_215 = arith.constant dense<0.000000e+00> : vector<2x32xf32>
    %511 = tpu.matmul %508, %25, %cst_215 {dimension_numbers = #tpu.dot_dimension_numbers<[1], [0], [0], [1], [0, 0, 1, 1], [], []>} : vector<2x32xbf16>, vector<32x32xbf16>, vector<2x32xf32> -> vector<2x32xf32>
    %cst_216 = arith.constant dense<0.000000e+00> : vector<2x32xf32>
    %512 = tpu.matmul %508, %26, %cst_216 {dimension_numbers = #tpu.dot_dimension_numbers<[1], [0], [0], [1], [0, 0, 1, 1], [], []>} : vector<2x32xbf16>, vector<32x32xbf16>, vector<2x32xf32> -> vector<2x32xf32>
    %cst_217 = arith.constant dense<0.000000e+00> : vector<2x32xf32>
    %513 = tpu.matmul %508, %27, %cst_217 {dimension_numbers = #tpu.dot_dimension_numbers<[1], [0], [0], [1], [0, 0, 1, 1], [], []>} : vector<2x32xbf16>, vector<32x32xbf16>, vector<2x32xf32> -> vector<2x32xf32>
    %514 = vector.broadcast %31 : vector<1x32xf32> to vector<2x32xf32>
    %515 = arith.addf %513, %514 : vector<2x32xf32>
    %516 = arith.index_cast %c6_i32 : i32 to index
    %c0_218 = arith.constant 0 : index
    %c0_219 = arith.constant 0 : index
    %517 = vector.load %arg14[%516, %c0_218, %c0_219] : memref<8x2x32xf32, #tpu.memory_space<vmem>>, vector<1x2x32xf32>
    %518 = vector.shape_cast %517 : vector<1x2x32xf32> to vector<2x32xf32>
    %519 = arith.addf %518, %511 : vector<2x32xf32>
    %520 = arith.negf %519 : vector<2x32xf32>
    %521 = math.exp %520 : vector<2x32xf32>
    %cst_220 = arith.constant 1.000000e+00 : f32
    %522 = vector.broadcast %cst_220 : f32 to vector<2x32xf32>
    %523 = arith.addf %522, %521 : vector<2x32xf32>
    %524 = arith.divf %522, %523 : vector<2x32xf32>
    %525 = arith.index_cast %c6_i32 : i32 to index
    %c0_221 = arith.constant 0 : index
    %c0_222 = arith.constant 0 : index
    %526 = vector.load %arg15[%525, %c0_221, %c0_222] : memref<8x2x32xf32, #tpu.memory_space<vmem>>, vector<1x2x32xf32>
    %527 = vector.shape_cast %526 : vector<1x2x32xf32> to vector<2x32xf32>
    %528 = arith.addf %527, %512 : vector<2x32xf32>
    %529 = arith.negf %528 : vector<2x32xf32>
    %530 = math.exp %529 : vector<2x32xf32>
    %cst_223 = arith.constant 1.000000e+00 : f32
    %531 = vector.broadcast %cst_223 : f32 to vector<2x32xf32>
    %532 = arith.addf %531, %530 : vector<2x32xf32>
    %533 = arith.divf %531, %532 : vector<2x32xf32>
    %534 = arith.index_cast %c6_i32 : i32 to index
    %c0_224 = arith.constant 0 : index
    %c0_225 = arith.constant 0 : index
    %535 = vector.load %arg16[%534, %c0_224, %c0_225] : memref<8x2x32xf32, #tpu.memory_space<vmem>>, vector<1x2x32xf32>
    %536 = vector.shape_cast %535 : vector<1x2x32xf32> to vector<2x32xf32>
    %537 = arith.mulf %524, %515 : vector<2x32xf32>
    %538 = arith.addf %536, %537 : vector<2x32xf32>
    %539 = math.tanh %538 : vector<2x32xf32>
    %cst_226 = arith.constant 1.000000e+00 : f32
    %540 = vector.broadcast %cst_226 : f32 to vector<2x32xf32>
    %541 = arith.subf %540, %533 : vector<2x32xf32>
    %542 = arith.mulf %541, %539 : vector<2x32xf32>
    %543 = arith.mulf %533, %465 : vector<2x32xf32>
    %544 = arith.addf %542, %543 : vector<2x32xf32>
    %cst_227 = arith.constant dense<0.000000e+00> : vector<2x32xf32>
    %545 = tpu.matmul %509, %28, %cst_227 {dimension_numbers = #tpu.dot_dimension_numbers<[1], [0], [0], [1], [0, 0, 1, 1], [], []>} : vector<2x32xbf16>, vector<32x32xbf16>, vector<2x32xf32> -> vector<2x32xf32>
    %cst_228 = arith.constant dense<0.000000e+00> : vector<2x32xf32>
    %546 = tpu.matmul %509, %29, %cst_228 {dimension_numbers = #tpu.dot_dimension_numbers<[1], [0], [0], [1], [0, 0, 1, 1], [], []>} : vector<2x32xbf16>, vector<32x32xbf16>, vector<2x32xf32> -> vector<2x32xf32>
    %cst_229 = arith.constant dense<0.000000e+00> : vector<2x32xf32>
    %547 = tpu.matmul %509, %30, %cst_229 {dimension_numbers = #tpu.dot_dimension_numbers<[1], [0], [0], [1], [0, 0, 1, 1], [], []>} : vector<2x32xbf16>, vector<32x32xbf16>, vector<2x32xf32> -> vector<2x32xf32>
    %548 = vector.broadcast %32 : vector<1x32xf32> to vector<2x32xf32>
    %549 = arith.addf %547, %548 : vector<2x32xf32>
    %550 = arith.index_cast %510 : i32 to index
    %c0_230 = arith.constant 0 : index
    %c0_231 = arith.constant 0 : index
    %551 = vector.load %arg17[%550, %c0_230, %c0_231] : memref<8x2x32xf32, #tpu.memory_space<vmem>>, vector<1x2x32xf32>
    %552 = vector.shape_cast %551 : vector<1x2x32xf32> to vector<2x32xf32>
    %553 = arith.addf %552, %545 : vector<2x32xf32>
    %554 = arith.negf %553 : vector<2x32xf32>
    %555 = math.exp %554 : vector<2x32xf32>
    %cst_232 = arith.constant 1.000000e+00 : f32
    %556 = vector.broadcast %cst_232 : f32 to vector<2x32xf32>
    %557 = arith.addf %556, %555 : vector<2x32xf32>
    %558 = arith.divf %556, %557 : vector<2x32xf32>
    %559 = arith.index_cast %510 : i32 to index
    %c0_233 = arith.constant 0 : index
    %c0_234 = arith.constant 0 : index
    %560 = vector.load %arg18[%559, %c0_233, %c0_234] : memref<8x2x32xf32, #tpu.memory_space<vmem>>, vector<1x2x32xf32>
    %561 = vector.shape_cast %560 : vector<1x2x32xf32> to vector<2x32xf32>
    %562 = arith.addf %561, %546 : vector<2x32xf32>
    %563 = arith.negf %562 : vector<2x32xf32>
    %564 = math.exp %563 : vector<2x32xf32>
    %cst_235 = arith.constant 1.000000e+00 : f32
    %565 = vector.broadcast %cst_235 : f32 to vector<2x32xf32>
    %566 = arith.addf %565, %564 : vector<2x32xf32>
    %567 = arith.divf %565, %566 : vector<2x32xf32>
    %568 = arith.index_cast %510 : i32 to index
    %c0_236 = arith.constant 0 : index
    %c0_237 = arith.constant 0 : index
    %569 = vector.load %arg19[%568, %c0_236, %c0_237] : memref<8x2x32xf32, #tpu.memory_space<vmem>>, vector<1x2x32xf32>
    %570 = vector.shape_cast %569 : vector<1x2x32xf32> to vector<2x32xf32>
    %571 = arith.mulf %558, %549 : vector<2x32xf32>
    %572 = arith.addf %570, %571 : vector<2x32xf32>
    %573 = math.tanh %572 : vector<2x32xf32>
    %cst_238 = arith.constant 1.000000e+00 : f32
    %574 = vector.broadcast %cst_238 : f32 to vector<2x32xf32>
    %575 = arith.subf %574, %567 : vector<2x32xf32>
    %576 = arith.mulf %575, %573 : vector<2x32xf32>
    %577 = arith.mulf %567, %499 : vector<2x32xf32>
    %578 = arith.addf %576, %577 : vector<2x32xf32>
    %579 = arith.index_cast %c6_i32 : i32 to index
    %c0_239 = arith.constant 0 : index
    %c0_240 = arith.constant 0 : index
    %580 = vector.load %arg20[%579, %c0_239, %c0_240] : memref<8x2x32xf32, #tpu.memory_space<vmem>>, vector<1x2x32xf32>
    %581 = vector.shape_cast %580 : vector<1x2x32xf32> to vector<2x32xf32>
    %582 = vector.shape_cast %544 : vector<2x32xf32> to vector<1x2x32xf32>
    tpu.vector_store %arg20[%579, %c0_239, %c0_240], %582 {strides = array<i32>} : memref<8x2x32xf32, #tpu.memory_space<vmem>>, vector<1x2x32xf32>,
    %583 = arith.index_cast %c6_i32 : i32 to index
    %c0_241 = arith.constant 0 : index
    %c0_242 = arith.constant 0 : index
    %584 = vector.load %arg21[%583, %c0_241, %c0_242] : memref<8x2x32xf32, #tpu.memory_space<vmem>>, vector<1x2x32xf32>
    %585 = vector.shape_cast %584 : vector<1x2x32xf32> to vector<2x32xf32>
    %586 = vector.shape_cast %578 : vector<2x32xf32> to vector<1x2x32xf32>
    tpu.vector_store %arg21[%583, %c0_241, %c0_242], %586 {strides = array<i32>} : memref<8x2x32xf32, #tpu.memory_space<vmem>>, vector<1x2x32xf32>,
    %c7_i32_243 = arith.constant 7 : i32
    %587 = arith.truncf %544 : vector<2x32xf32> to vector<2x32xbf16>
    %588 = arith.truncf %578 : vector<2x32xf32> to vector<2x32xbf16>
    %c7_i32_244 = arith.constant 7 : i32
    %589 = arith.subi %c7_i32_244, %c7_i32_243 : i32
    %cst_245 = arith.constant dense<0.000000e+00> : vector<2x32xf32>
    %590 = tpu.matmul %587, %25, %cst_245 {dimension_numbers = #tpu.dot_dimension_numbers<[1], [0], [0], [1], [0, 0, 1, 1], [], []>} : vector<2x32xbf16>, vector<32x32xbf16>, vector<2x32xf32> -> vector<2x32xf32>
    %cst_246 = arith.constant dense<0.000000e+00> : vector<2x32xf32>
    %591 = tpu.matmul %587, %26, %cst_246 {dimension_numbers = #tpu.dot_dimension_numbers<[1], [0], [0], [1], [0, 0, 1, 1], [], []>} : vector<2x32xbf16>, vector<32x32xbf16>, vector<2x32xf32> -> vector<2x32xf32>
    %cst_247 = arith.constant dense<0.000000e+00> : vector<2x32xf32>
    %592 = tpu.matmul %587, %27, %cst_247 {dimension_numbers = #tpu.dot_dimension_numbers<[1], [0], [0], [1], [0, 0, 1, 1], [], []>} : vector<2x32xbf16>, vector<32x32xbf16>, vector<2x32xf32> -> vector<2x32xf32>
    %593 = vector.broadcast %31 : vector<1x32xf32> to vector<2x32xf32>
    %594 = arith.addf %592, %593 : vector<2x32xf32>
    %595 = arith.index_cast %c7_i32_243 : i32 to index
    %c0_248 = arith.constant 0 : index
    %c0_249 = arith.constant 0 : index
    %596 = vector.load %arg14[%595, %c0_248, %c0_249] : memref<8x2x32xf32, #tpu.memory_space<vmem>>, vector<1x2x32xf32>
    %597 = vector.shape_cast %596 : vector<1x2x32xf32> to vector<2x32xf32>
    %598 = arith.addf %597, %590 : vector<2x32xf32>
    %599 = arith.negf %598 : vector<2x32xf32>
    %600 = math.exp %599 : vector<2x32xf32>
    %cst_250 = arith.constant 1.000000e+00 : f32
    %601 = vector.broadcast %cst_250 : f32 to vector<2x32xf32>
    %602 = arith.addf %601, %600 : vector<2x32xf32>
    %603 = arith.divf %601, %602 : vector<2x32xf32>
    %604 = arith.index_cast %c7_i32_243 : i32 to index
    %c0_251 = arith.constant 0 : index
    %c0_252 = arith.constant 0 : index
    %605 = vector.load %arg15[%604, %c0_251, %c0_252] : memref<8x2x32xf32, #tpu.memory_space<vmem>>, vector<1x2x32xf32>
    %606 = vector.shape_cast %605 : vector<1x2x32xf32> to vector<2x32xf32>
    %607 = arith.addf %606, %591 : vector<2x32xf32>
    %608 = arith.negf %607 : vector<2x32xf32>
    %609 = math.exp %608 : vector<2x32xf32>
    %cst_253 = arith.constant 1.000000e+00 : f32
    %610 = vector.broadcast %cst_253 : f32 to vector<2x32xf32>
    %611 = arith.addf %610, %609 : vector<2x32xf32>
    %612 = arith.divf %610, %611 : vector<2x32xf32>
    %613 = arith.index_cast %c7_i32_243 : i32 to index
    %c0_254 = arith.constant 0 : index
    %c0_255 = arith.constant 0 : index
    %614 = vector.load %arg16[%613, %c0_254, %c0_255] : memref<8x2x32xf32, #tpu.memory_space<vmem>>, vector<1x2x32xf32>
    %615 = vector.shape_cast %614 : vector<1x2x32xf32> to vector<2x32xf32>
    %616 = arith.mulf %603, %594 : vector<2x32xf32>
    %617 = arith.addf %615, %616 : vector<2x32xf32>
    %618 = math.tanh %617 : vector<2x32xf32>
    %cst_256 = arith.constant 1.000000e+00 : f32
    %619 = vector.broadcast %cst_256 : f32 to vector<2x32xf32>
    %620 = arith.subf %619, %612 : vector<2x32xf32>
    %621 = arith.mulf %620, %618 : vector<2x32xf32>
    %622 = arith.mulf %612, %544 : vector<2x32xf32>
    %623 = arith.addf %621, %622 : vector<2x32xf32>
    %cst_257 = arith.constant dense<0.000000e+00> : vector<2x32xf32>
    %624 = tpu.matmul %588, %28, %cst_257 {dimension_numbers = #tpu.dot_dimension_numbers<[1], [0], [0], [1], [0, 0, 1, 1], [], []>} : vector<2x32xbf16>, vector<32x32xbf16>, vector<2x32xf32> -> vector<2x32xf32>
    %cst_258 = arith.constant dense<0.000000e+00> : vector<2x32xf32>
    %625 = tpu.matmul %588, %29, %cst_258 {dimension_numbers = #tpu.dot_dimension_numbers<[1], [0], [0], [1], [0, 0, 1, 1], [], []>} : vector<2x32xbf16>, vector<32x32xbf16>, vector<2x32xf32> -> vector<2x32xf32>
    %cst_259 = arith.constant dense<0.000000e+00> : vector<2x32xf32>
    %626 = tpu.matmul %588, %30, %cst_259 {dimension_numbers = #tpu.dot_dimension_numbers<[1], [0], [0], [1], [0, 0, 1, 1], [], []>} : vector<2x32xbf16>, vector<32x32xbf16>, vector<2x32xf32> -> vector<2x32xf32>
    %627 = vector.broadcast %32 : vector<1x32xf32> to vector<2x32xf32>
    %628 = arith.addf %626, %627 : vector<2x32xf32>
    %629 = arith.index_cast %589 : i32 to index
    %c0_260 = arith.constant 0 : index
    %c0_261 = arith.constant 0 : index
    %630 = vector.load %arg17[%629, %c0_260, %c0_261] : memref<8x2x32xf32, #tpu.memory_space<vmem>>, vector<1x2x32xf32>
    %631 = vector.shape_cast %630 : vector<1x2x32xf32> to vector<2x32xf32>
    %632 = arith.addf %631, %624 : vector<2x32xf32>
    %633 = arith.negf %632 : vector<2x32xf32>
    %634 = math.exp %633 : vector<2x32xf32>
    %cst_262 = arith.constant 1.000000e+00 : f32
    %635 = vector.broadcast %cst_262 : f32 to vector<2x32xf32>
    %636 = arith.addf %635, %634 : vector<2x32xf32>
    %637 = arith.divf %635, %636 : vector<2x32xf32>
    %638 = arith.index_cast %589 : i32 to index
    %c0_263 = arith.constant 0 : index
    %c0_264 = arith.constant 0 : index
    %639 = vector.load %arg18[%638, %c0_263, %c0_264] : memref<8x2x32xf32, #tpu.memory_space<vmem>>, vector<1x2x32xf32>
    %640 = vector.shape_cast %639 : vector<1x2x32xf32> to vector<2x32xf32>
    %641 = arith.addf %640, %625 : vector<2x32xf32>
    %642 = arith.negf %641 : vector<2x32xf32>
    %643 = math.exp %642 : vector<2x32xf32>
    %cst_265 = arith.constant 1.000000e+00 : f32
    %644 = vector.broadcast %cst_265 : f32 to vector<2x32xf32>
    %645 = arith.addf %644, %643 : vector<2x32xf32>
    %646 = arith.divf %644, %645 : vector<2x32xf32>
    %647 = arith.index_cast %589 : i32 to index
    %c0_266 = arith.constant 0 : index
    %c0_267 = arith.constant 0 : index
    %648 = vector.load %arg19[%647, %c0_266, %c0_267] : memref<8x2x32xf32, #tpu.memory_space<vmem>>, vector<1x2x32xf32>
    %649 = vector.shape_cast %648 : vector<1x2x32xf32> to vector<2x32xf32>
    %650 = arith.mulf %637, %628 : vector<2x32xf32>
    %651 = arith.addf %649, %650 : vector<2x32xf32>
    %652 = math.tanh %651 : vector<2x32xf32>
    %cst_268 = arith.constant 1.000000e+00 : f32
    %653 = vector.broadcast %cst_268 : f32 to vector<2x32xf32>
    %654 = arith.subf %653, %646 : vector<2x32xf32>
    %655 = arith.mulf %654, %652 : vector<2x32xf32>
    %656 = arith.mulf %646, %578 : vector<2x32xf32>
    %657 = arith.addf %655, %656 : vector<2x32xf32>
    %658 = arith.index_cast %c7_i32_243 : i32 to index
    %c0_269 = arith.constant 0 : index
    %c0_270 = arith.constant 0 : index
    %659 = vector.load %arg20[%658, %c0_269, %c0_270] : memref<8x2x32xf32, #tpu.memory_space<vmem>>, vector<1x2x32xf32>
    %660 = vector.shape_cast %659 : vector<1x2x32xf32> to vector<2x32xf32>
    %661 = vector.shape_cast %623 : vector<2x32xf32> to vector<1x2x32xf32>
    tpu.vector_store %arg20[%658, %c0_269, %c0_270], %661 {strides = array<i32>} : memref<8x2x32xf32, #tpu.memory_space<vmem>>, vector<1x2x32xf32>,
    %662 = arith.index_cast %c7_i32_243 : i32 to index
    %c0_271 = arith.constant 0 : index
    %c0_272 = arith.constant 0 : index
    %663 = vector.load %arg21[%662, %c0_271, %c0_272] : memref<8x2x32xf32, #tpu.memory_space<vmem>>, vector<1x2x32xf32>
    %664 = vector.shape_cast %663 : vector<1x2x32xf32> to vector<2x32xf32>
    %665 = vector.shape_cast %657 : vector<2x32xf32> to vector<1x2x32xf32>
    tpu.vector_store %arg21[%662, %c0_271, %c0_272], %665 {strides = array<i32>} : memref<8x2x32xf32, #tpu.memory_space<vmem>>, vector<1x2x32xf32>,
    %c8_i32 = arith.constant 8 : i32
    %c0_273 = arith.constant 0 : index
    %c0_274 = arith.constant 0 : index
    %c0_275 = arith.constant 0 : index
    %666 = vector.load %arg20[%c0_273, %c0_274, %c0_275] : memref<8x2x32xf32, #tpu.memory_space<vmem>>, vector<8x2x32xf32>
    %667 = math.tanh %666 : vector<8x2x32xf32>
    %cst_276 = arith.constant dense<0xFF800000> : vector<2x32xf32>
    %668 = vector.multi_reduction <maximumf>, %667, %cst_276 [0] : vector<8x2x32xf32> to vector<2x32xf32>
    %c0_277 = arith.constant 0 : index
    %c0_278 = arith.constant 0 : index
    %c0_279 = arith.constant 0 : index
    %669 = vector.load %arg21[%c0_277, %c0_278, %c0_279] : memref<8x2x32xf32, #tpu.memory_space<vmem>>, vector<8x2x32xf32>
    %670 = math.tanh %669 : vector<8x2x32xf32>
    %cst_280 = arith.constant dense<0xFF800000> : vector<2x32xf32>
    %671 = vector.multi_reduction <maximumf>, %670, %cst_280 [0] : vector<8x2x32xf32> to vector<2x32xf32>
    %672 = tpu.concatenate %668, %671 in 1 : vector<2x32xf32>, vector<2x32xf32> -> vector<2x64xf32>
    %c0_281 = arith.constant 0 : index
    %c0_282 = arith.constant 0 : index
    %673 = vector.load %arg11[%c0_281, %c0_282] : memref<64x5xf32, #tpu.memory_space<vmem>>, vector<64x5xf32>
    %cst_283 = arith.constant dense<0.000000e+00> : vector<2x5xf32>
    %674 = tpu.matmul %672, %673, %cst_283 {dimension_numbers = #tpu.dot_dimension_numbers<[1], [0], [0], [1], [0, 0, 1, 1], [], []>} : vector<2x64xf32>, vector<64x5xf32>, vector<2x5xf32> -> vector<2x5xf32>
    %c0_284 = arith.constant 0 : index
    %c0_285 = arith.constant 0 : index
    %675 = vector.load %arg12[%c0_284, %c0_285] : memref<1x5xf32, #tpu.memory_space<vmem>>, vector<1x5xf32>
    %676 = vector.broadcast %675 : vector<1x5xf32> to vector<2x5xf32>
    %677 = arith.addf %674, %676 : vector<2x5xf32>
    %c0_286 = arith.constant 0 : index
    %c0_287 = arith.constant 0 : index
    %678 = vector.load %arg13[%c0_286, %c0_287] : memref<2x5xf32, #tpu.memory_space<vmem>>, vector<2x5xf32>
    tpu.vector_store %arg13[%c0_286, %c0_287], %677 {strides = array<i32>} : memref<2x5xf32, #tpu.memory_space<vmem>>, vector<2x5xf32>,
    return
  }
}

</mosaic_0001>

<llo_original>
// kernel: bigru_forward.1
$region0: #{bigru_forward.1}
  #allocation0 [shape = 'u32[]', space=smem, size = 0x4, offset = 0x4, fixed_abs, tag = 'smem constant byte address 0x4 - core index']
  #allocation1 [shape = 'u32[144,128]{1,0:T(1,128)}', space=vmem, size = 0x12000, scoped, tag = 'internal scratch']
  #allocation2 [shape = 'f32[8,2,32]{2,1,0:T(2,128)}', space=vmem, size = 0x2000, scoped, tag = 'scratch operand']
  #allocation3 [shape = 'f32[8,2,32]{2,1,0:T(2,128)}', space=vmem, size = 0x2000, scoped, tag = 'scratch operand']
  #allocation4 [shape = 'f32[8,2,32]{2,1,0:T(2,128)}', space=vmem, size = 0x2000, scoped, tag = 'scratch operand']
  #allocation5 [shape = 'f32[8,2,32]{2,1,0:T(2,128)}', space=vmem, size = 0x2000, scoped, tag = 'scratch operand']
  #allocation6 [shape = 'f32[8,2,32]{2,1,0:T(2,128)}', space=vmem, size = 0x2000, scoped, tag = 'scratch operand']
  #allocation7 [shape = 'f32[8,2,32]{2,1,0:T(2,128)}', space=vmem, size = 0x2000, scoped, tag = 'scratch operand']
  #allocation8 [shape = 'f32[8,2,32]{2,1,0:T(2,128)}', space=vmem, size = 0x2000, scoped, tag = 'scratch operand']
  #allocation9 [shape = 'f32[8,2,32]{2,1,0:T(2,128)}', space=vmem, size = 0x2000, scoped, tag = 'scratch operand']
  %s0 = inlined_call_operand.vmem [shape: bf16[8,2,32], index: 0, kind: input, shape index: {}]
  %s1 = inlined_call_operand.vmem [shape: bf16[32,192], index: 1, kind: input, shape index: {}]
  %s2 = inlined_call_operand.vmem [shape: f32[1,192], index: 2, kind: input, shape index: {}]
  %s3 = inlined_call_operand.vmem [shape: bf16[32,32], index: 3, kind: input, shape index: {}]
  %s4 = inlined_call_operand.vmem [shape: bf16[32,32], index: 4, kind: input, shape index: {}]
  %s5 = inlined_call_operand.vmem [shape: bf16[32,32], index: 5, kind: input, shape index: {}]
  %s6 = inlined_call_operand.vmem [shape: bf16[32,32], index: 6, kind: input, shape index: {}]
  %s7 = inlined_call_operand.vmem [shape: bf16[32,32], index: 7, kind: input, shape index: {}]
  %s8 = inlined_call_operand.vmem [shape: bf16[32,32], index: 8, kind: input, shape index: {}]
  %s9 = inlined_call_operand.vmem [shape: f32[1,32], index: 9, kind: input, shape index: {}]
  %s10 = inlined_call_operand.vmem [shape: f32[1,32], index: 10, kind: input, shape index: {}]
  %s11 = inlined_call_operand.vmem [shape: f32[64,5], index: 11, kind: input, shape index: {}]
  %s12 = inlined_call_operand.vmem [shape: f32[1,5], index: 12, kind: input, shape index: {}]
  %s13 = inlined_call_operand.hbm [shape: f32[2,5], index: 13, kind: output, shape index: {}]
  %s14 = sld [smem:[#allocation0]]
  $region62: #{bigru_forward.1} parent=0
    _
  %s16 = ssub.s32 1, %s14
  %s17 = scalar_select 0, %s16, %s14
  $region1: #{bigru_forward.1} parent=0
    #allocation10 [shape = 'u8[1024]{0}', space=vmem, size = 0x400, scoped, tag = 'output window, operand 0, single buffered']
    #allocation11 [shape = 's32[1]{0}', space=sflag, size = 0x4, scoped, tag = 'scoped memory for bigru_forward.1']
    %18 = vsyncpa [#allocation11], 0
    // Predicated region
    $region2: #{bigru_forward.1} parent=1 // pred_check
      _
    $region3: #{bigru_forward.1} parent=1 // pred_check_branch
      %20 = sbr.rel (0) target = $region5
    $region4: #{bigru_forward.1} parent=1 // pred_region
      _
    $region5: #{bigru_forward.1} parent=1 // pred_fallthru
      _
    // Predicated region
    $region6: #{bigru_forward.1} parent=1 // pred_check
      _
    $region7: #{bigru_forward.1} parent=1 // pred_check_branch
      %22 = sbr.rel (0) target = $region9
    $region8: #{bigru_forward.1} parent=1 // pred_region
      _
    $region9: #{bigru_forward.1} parent=1 // pred_fallthru
      _
    // Predicated region
    $region10: #{bigru_forward.1} parent=1 // pred_check
      _
    $region11: #{bigru_forward.1} parent=1 // pred_check_branch
      %24 = sbr.rel (0) target = $region13
    $region12: #{bigru_forward.1} parent=1 // pred_region
      _
    $region13: #{bigru_forward.1} parent=1 // pred_fallthru
      _
    // Predicated region
    $region14: #{bigru_forward.1} parent=1 // pred_check
      _
    $region15: #{bigru_forward.1} parent=1 // pred_check_branch
      %26 = sbr.rel (0) target = $region17
    $region16: #{bigru_forward.1} parent=1 // pred_region
      _
    $region17: #{bigru_forward.1} parent=1 // pred_fallthru
      _
    // Predicated region
    $region18: #{bigru_forward.1} parent=1 // pred_check
      _
    $region19: #{bigru_forward.1} parent=1 // pred_check_branch
      %28 = sbr.rel (0) target = $region21
    $region20: #{bigru_forward.1} parent=1 // pred_region
      _
    $region21: #{bigru_forward.1} parent=1 // pred_fallthru
      _
    // Predicated region
    $region22: #{bigru_forward.1} parent=1 // pred_check
      _
    $region23: #{bigru_forward.1} parent=1 // pred_check_branch
      %30 = sbr.rel (0) target = $region25
    $region24: #{bigru_forward.1} parent=1 // pred_region
      _
    $region25: #{bigru_forward.1} parent=1 // pred_fallthru
      _
    // Predicated region
    $region26: #{bigru_forward.1} parent=1 // pred_check
      _
    $region27: #{bigru_forward.1} parent=1 // pred_check_branch
      %32 = sbr.rel (0) target = $region29
    $region28: #{bigru_forward.1} parent=1 // pred_region
      _
    $region29: #{bigru_forward.1} parent=1 // pred_fallthru
      _
    // Predicated region
    $region30: #{bigru_forward.1} parent=1 // pred_check
      _
    $region31: #{bigru_forward.1} parent=1 // pred_check_branch
      %34 = sbr.rel (0) target = $region33
    $region32: #{bigru_forward.1} parent=1 // pred_region
      _
    $region33: #{bigru_forward.1} parent=1 // pred_fallthru
      _
    // Predicated region
    $region34: #{bigru_forward.1} parent=1 // pred_check
      _
    $region35: #{bigru_forward.1} parent=1 // pred_check_branch
      %36 = sbr.rel (0) target = $region37
    $region36: #{bigru_forward.1} parent=1 // pred_region
      _
    $region37: #{bigru_forward.1} parent=1 // pred_fallthru
      _
    // Predicated region
    $region38: #{bigru_forward.1} parent=1 // pred_check
      _
    $region39: #{bigru_forward.1} parent=1 // pred_check_branch
      %38 = sbr.rel (0) target = $region41
    $region40: #{bigru_forward.1} parent=1 // pred_region
      _
    $region41: #{bigru_forward.1} parent=1 // pred_fallthru
      _
    // Predicated region
    $region42: #{bigru_forward.1} parent=1 // pred_check
      _
    $region43: #{bigru_forward.1} parent=1 // pred_check_branch
      %40 = sbr.rel (0) target = $region45
    $region44: #{bigru_forward.1} parent=1 // pred_region
      _
    $region45: #{bigru_forward.1} parent=1 // pred_fallthru
      _
    // Predicated region
    $region46: #{bigru_forward.1} parent=1 // pred_check
      _
    $region47: #{bigru_forward.1} parent=1 // pred_check_branch
      %42 = sbr.rel (0) target = $region49
    $region48: #{bigru_forward.1} parent=1 // pred_region
      _
    $region49: #{bigru_forward.1} parent=1 // pred_fallthru
      _
    // Predicated region
    $region50: #{bigru_forward.1} parent=1 // pred_check
      _
    $region51: #{bigru_forward.1} parent=1 // pred_check_branch
      %44 = sbr.rel (0) target = $region53
    $region52: #{bigru_forward.1} parent=1 // pred_region
      _
    $region53: #{bigru_forward.1} parent=1 // pred_fallthru
      _
    %v46 = vld [vmem:[%s0] sm:$0x1]
    %v47 = vld [vmem:[%s0 + $0x1] sm:$0x1]
    %v48 = vld [vmem:[%s0 + $0x2] sm:$0x1]
    %v49 = vld [vmem:[%s0 + $0x3] sm:$0x1]
    %v50 = vld [vmem:[%s0 + $0x4] sm:$0x1]
    %v51 = vld [vmem:[%s0 + $0x5] sm:$0x1]
    %v52 = vld [vmem:[%s0 + $0x6] sm:$0x1]
    %v53 = vld [vmem:[%s0 + $0x7] sm:$0x1]
    %v54 = vld [vmem:[%s1] sm:$0xff]
    %v55 = vld [vmem:[%s1 + $0x8] sm:$0xff]
    %v56 = vld [vmem:[%s1 + $0x10] sm:$0xff]
    %v57 = vld [vmem:[%s1 + $0x18] sm:$0xff]
    %v58 = vld [vmem:[%s2] sm:$0x3]
    %v60 = vlaneseq
    %v61 = vshrl.u32 %v60, 7
    %v62 = vsub.s32 0, %v61
    %v63 = vrot.slane %v58, %v62
    %v64 = vlaneseq
    %v65 = vshrl.u32 %v64, 7
    %v66 = vsub.s32 1, %v65
    %v67 = vrot.slane %v58, %v66
    %v78 = vcombine.low %v46, %v47
    %v79 = vcombine.low %v48, %v49
    %v80 = vcombine.low %v50, %v51
    %v81 = vcombine.low %v52, %v53
    %v83 = vunpack.c.l.s4 1966171168
    %v84 = vunpack.c.0.s8 %v83
    %v85 = vlaneseq
    %v86 = vshrl.u32 %v85, 7
    %v87 = vsub.s32 %v84, %v86
    %v88 = vrot.slane %v78, %v87
    %v90 = vunpack.c.l.s4 1966171168
    %v91 = vunpack.c.0.s8 %v90
    %v92 = vlaneseq
    %v93 = vshrl.u32 %v92, 7
    %v94 = vsub.s32 %v91, %v93
    %v95 = vrot.slane %v79, %v94
    %v97 = vunpack.c.l.s4 1966171168
    %v98 = vunpack.c.0.s8 %v97
    %v99 = vlaneseq
    %v100 = vshrl.u32 %v99, 7
    %v101 = vsub.s32 %v98, %v100
    %v102 = vrot.slane %v80, %v101
    %v104 = vunpack.c.l.s4 1966171168
    %v105 = vunpack.c.0.s8 %v104
    %v106 = vlaneseq
    %v107 = vshrl.u32 %v106, 7
    %v108 = vsub.s32 %v105, %v107
    %v109 = vrot.slane %v81, %v108
    %v110 = vcombine.low %v88, %v95
    %v111 = vcombine.low %v102, %v109
    %v113 = vunpack.c.l.s4 1966171168
    %v114 = vunpack.c.0.s8 %v113
    %v115 = vlaneseq
    %v116 = vshrl.u32 %v115, 7
    %v117 = vsub.s32 %v114, %v116
    %v118 = vrot.slane %v110, %v117
    %v120 = vunpack.c.l.s4 1966171168
    %v121 = vunpack.c.0.s8 %v120
    %v122 = vlaneseq
    %v123 = vshrl.u32 %v122, 7
    %v124 = vsub.s32 %v121, %v123
    %v125 = vrot.slane %v111, %v124
    %v126 = vcombine.low %v118, %v125
    %v131 = vunpack.c.l.b16 %v54
    %v132 = vunpack.c.h.b16 %v54
    %v133 = vunpack.c.l.b16 %v55
    %v134 = vunpack.c.h.b16 %v55
    %v135 = vunpack.c.l.b16 %v56
    %v136 = vunpack.c.h.b16 %v56
    %v137 = vunpack.c.l.b16 %v57
    %v138 = vunpack.c.h.b16 %v57
    %v139 = vpack.c.b16 %v133, %v131
    %v140 = vpack.c.b16 %v134, %v132
    %v141 = vpack.c.b16 %v137, %v135
    %v142 = vpack.c.b16 %v138, %v136
    %vm147 = vcmask 261120
    %v149 = vsel %vm147, %v126, 0
    %151 = vmatprep.subr.bf16.mxu0 %v140
    %152 = vmatpush1.bf16.msra.mxu0 %v139
    %153 = vmatprep.subr.bf16.mxu0 %v142
    %154 = vmatpush1.bf16.msra.mxu0 %v141
    %155 = vmatprep.subr.bf16.mxu0 0
    %156 = vmatpush1.bf16.msra.mxu0 0
    %157 = vmatprep.subr.bf16.mxu0 0
    %158 = vmatpush1.bf16.msra.mxu0 0
    %159 = vmatprep.subr.bf16.mxu0 0
    %160 = vmatpush1.bf16.msra.mxu0 0
    %161 = vmatprep.subr.bf16.mxu0 0
    %162 = vmatpush1.bf16.msra.mxu0 0
    %163 = vmatprep.subr.bf16.mxu0 0
    %164 = vmatpush1.bf16.msra.mxu0 0
    %165 = vmatprep.subr.bf16.mxu0 0
    %166 = vmatpush1.bf16.msra.mxu0 0
    %167 = vmatprep.subr.bf16.mxu0 0
    %168 = vmatpush1.bf16.msra.mxu0 0
    %169 = vmatprep.subr.bf16.mxu0 0
    %170 = vmatpush1.bf16.msra.mxu0 0
    %171 = vmatprep.subr.bf16.mxu0 0
    %172 = vmatpush1.bf16.msra.mxu0 0
    %173 = vmatprep.subr.bf16.mxu0 0
    %174 = vmatpush1.bf16.msra.mxu0 0
    %175 = vmatprep.subr.bf16.mxu0 0
    %176 = vmatpush1.bf16.msra.mxu0 0
    %177 = vmatprep.subr.bf16.mxu0 0
    %178 = vmatpush1.bf16.msra.mxu0 0
    %179 = vmatprep.subr.bf16.mxu0 0
    %180 = vmatpush1.bf16.msra.mxu0 0
    %181 = vmatprep.subr.bf16.mxu0 0
    %182 = vmatpush1.bf16.msra.mxu0 0
    %183 = vmatprep.mubr.bf16.mxu0 0
    %184 = vmatmul.mubr.bf16.gmra.mrb[0].mxu0 %v149
    %v185 = vpop.f32.mrb[0].mxu0
    %v186 = vadd.f32 %v63, %v185
    %v187 = vpop.f32.mrb[0].mxu0
    %v188 = vadd.f32 %v67, %v187
    %v189 = vpop.f32.mrb[0].mxu0
    %v190 = vadd.f32 %v63, %v189
    %v191 = vpop.f32.mrb[0].mxu0
    %v192 = vadd.f32 %v67, %v191
    %193 = vdwg.mxu0
    %v196 = vcombine.high %v186, %v186
    %v198 = vunpack.c.l.s4 1983009808
    %v199 = vunpack.c.0.s8 %v198
    %v200 = vlaneseq
    %v201 = vshrl.u32 %v200, 7
    %v202 = vsub.s32 %v199, %v201
    %v203 = vrot.slane %v186, %v202
    %v205 = vunpack.c.l.s4 1983009808
    %v206 = vunpack.c.0.s8 %v205
    %v207 = vlaneseq
    %v208 = vshrl.u32 %v207, 7
    %v209 = vsub.s32 %v206, %v208
    %v210 = vrot.slane %v196, %v209
    %v211 = vcombine.high %v203, %v203
    %v212 = vcombine.high %v210, %v210
    %v213 = vcombine.high %v190, %v190
    %v215 = vunpack.c.l.s4 1983009808
    %v216 = vunpack.c.0.s8 %v215
    %v217 = vlaneseq
    %v218 = vshrl.u32 %v217, 7
    %v219 = vsub.s32 %v216, %v218
    %v220 = vrot.slane %v190, %v219
    %v222 = vunpack.c.l.s4 1983009808
    %v223 = vunpack.c.0.s8 %v222
    %v224 = vlaneseq
    %v225 = vshrl.u32 %v224, 7
    %v226 = vsub.s32 %v223, %v225
    %v227 = vrot.slane %v213, %v226
    %v228 = vcombine.high %v220, %v220
    %v229 = vcombine.high %v227, %v227
    %vm238 = vcmask 254976
    %239 = vst.msk [vmem:[#allocation2] sm:$0x3] %vm238, %v203
    %240 = vst.msk [vmem:[#allocation2 + $0x2] sm:$0x3] %vm238, %v211
    %241 = vst.msk [vmem:[#allocation2 + $0x4] sm:$0x3] %vm238, %v210
    %242 = vst.msk [vmem:[#allocation2 + $0x6] sm:$0x3] %vm238, %v212
    %243 = vst.msk [vmem:[#allocation2 + $0x8] sm:$0x3] %vm238, %v220
    %244 = vst.msk [vmem:[#allocation2 + $0xa] sm:$0x3] %vm238, %v228
    %245 = vst.msk [vmem:[#allocation2 + $0xc] sm:$0x3] %vm238, %v227
    %246 = vst.msk [vmem:[#allocation2 + $0xe] sm:$0x3] %vm238, %v229
    %v248 = vunpack.c.l.s4 1983009808
    %v249 = vunpack.c.0.s8 %v248
    %v250 = vlaneseq
    %v251 = vshrl.u32 %v250, 7
    %v252 = vsub.s32 %v249, %v251
    %v253 = vrot.slane %v203, %v252
    %v255 = vunpack.c.l.s4 1983009808
    %v256 = vunpack.c.0.s8 %v255
    %v257 = vlaneseq
    %v258 = vshrl.u32 %v257, 7
    %v259 = vsub.s32 %v256, %v258
    %v260 = vrot.slane %v211, %v259
    %v262 = vunpack.c.l.s4 1983009808
    %v263 = vunpack.c.0.s8 %v262
    %v264 = vlaneseq
    %v265 = vshrl.u32 %v264, 7
    %v266 = vsub.s32 %v263, %v265
    %v267 = vrot.slane %v210, %v266
    %v269 = vunpack.c.l.s4 1983009808
    %v270 = vunpack.c.0.s8 %v269
    %v271 = vlaneseq
    %v272 = vshrl.u32 %v271, 7
    %v273 = vsub.s32 %v270, %v272
    %v274 = vrot.slane %v212, %v273
    %v276 = vunpack.c.l.s4 1983009808
    %v277 = vunpack.c.0.s8 %v276
    %v278 = vlaneseq
    %v279 = vshrl.u32 %v278, 7
    %v280 = vsub.s32 %v277, %v279
    %v281 = vrot.slane %v220, %v280
    %v283 = vunpack.c.l.s4 1983009808
    %v284 = vunpack.c.0.s8 %v283
    %v285 = vlaneseq
    %v286 = vshrl.u32 %v285, 7
    %v287 = vsub.s32 %v284, %v286
    %v288 = vrot.slane %v228, %v287
    %v290 = vunpack.c.l.s4 1983009808
    %v291 = vunpack.c.0.s8 %v290
    %v292 = vlaneseq
    %v293 = vshrl.u32 %v292, 7
    %v294 = vsub.s32 %v291, %v293
    %v295 = vrot.slane %v227, %v294
    %v297 = vunpack.c.l.s4 1983009808
    %v298 = vunpack.c.0.s8 %v297
    %v299 = vlaneseq
    %v300 = vshrl.u32 %v299, 7
    %v301 = vsub.s32 %v298, %v300
    %v302 = vrot.slane %v229, %v301
    %303 = vrot.lane.b32.xlu0 %v253, 96
    %v304 = vpop.permute.xlu0 %303
    %305 = vrot.lane.b32.xlu0 %v260, 96
    %v306 = vpop.permute.xlu0 %305
    %307 = vrot.lane.b32.xlu0 %v267, 96
    %v308 = vpop.permute.xlu0 %307
    %309 = vrot.lane.b32.xlu0 %v274, 96
    %v310 = vpop.permute.xlu0 %309
    %311 = vrot.lane.b32.xlu0 %v281, 96
    %v312 = vpop.permute.xlu0 %311
    %313 = vrot.lane.b32.xlu0 %v288, 96
    %v314 = vpop.permute.xlu0 %313
    %315 = vrot.lane.b32.xlu0 %v295, 96
    %v316 = vpop.permute.xlu0 %315
    %317 = vrot.lane.b32.xlu0 %v302, 96
    %v318 = vpop.permute.xlu0 %317
    %327 = vst.msk [vmem:[#allocation3] sm:$0x3] %vm238, %v304
    %328 = vst.msk [vmem:[#allocation3 + $0x2] sm:$0x3] %vm238, %v306
    %329 = vst.msk [vmem:[#allocation3 + $0x4] sm:$0x3] %vm238, %v308
    %330 = vst.msk [vmem:[#allocation3 + $0x6] sm:$0x3] %vm238, %v310
    %331 = vst.msk [vmem:[#allocation3 + $0x8] sm:$0x3] %vm238, %v312
    %332 = vst.msk [vmem:[#allocation3 + $0xa] sm:$0x3] %vm238, %v314
    %333 = vst.msk [vmem:[#allocation3 + $0xc] sm:$0x3] %vm238, %v316
    %334 = vst.msk [vmem:[#allocation3 + $0xe] sm:$0x3] %vm238, %v318
    %335 = vrot.lane.b32.xlu0 %v253, 64
    %v336 = vpop.permute.xlu0 %335
    %337 = vrot.lane.b32.xlu0 %v260, 64
    %v338 = vpop.permute.xlu0 %337
    %339 = vrot.lane.b32.xlu0 %v267, 64
    %v340 = vpop.permute.xlu0 %339
    %341 = vrot.lane.b32.xlu0 %v274, 64
    %v342 = vpop.permute.xlu0 %341
    %343 = vrot.lane.b32.xlu0 %v281, 64
    %v344 = vpop.permute.xlu0 %343
    %345 = vrot.lane.b32.xlu0 %v288, 64
    %v346 = vpop.permute.xlu0 %345
    %347 = vrot.lane.b32.xlu0 %v295, 64
    %v348 = vpop.permute.xlu0 %347
    %349 = vrot.lane.b32.xlu0 %v302, 64
    %v350 = vpop.permute.xlu0 %349
    %359 = vst.msk [vmem:[#allocation4] sm:$0x3] %vm238, %v336
    %360 = vst.msk [vmem:[#allocation4 + $0x2] sm:$0x3] %vm238, %v338
    %361 = vst.msk [vmem:[#allocation4 + $0x4] sm:$0x3] %vm238, %v340
    %362 = vst.msk [vmem:[#allocation4 + $0x6] sm:$0x3] %vm238, %v342
    %363 = vst.msk [vmem:[#allocation4 + $0x8] sm:$0x3] %vm238, %v344
    %364 = vst.msk [vmem:[#allocation4 + $0xa] sm:$0x3] %vm238, %v346
    %365 = vst.msk [vmem:[#allocation4 + $0xc] sm:$0x3] %vm238, %v348
    %366 = vst.msk [vmem:[#allocation4 + $0xe] sm:$0x3] %vm238, %v350
    %367 = vrot.lane.b32.xlu0 %v253, 32
    %v368 = vpop.permute.xlu0 %367
    %369 = vrot.lane.b32.xlu0 %v260, 32
    %v370 = vpop.permute.xlu0 %369
    %371 = vrot.lane.b32.xlu0 %v267, 32
    %v372 = vpop.permute.xlu0 %371
    %373 = vrot.lane.b32.xlu0 %v274, 32
    %v374 = vpop.permute.xlu0 %373
    %375 = vrot.lane.b32.xlu0 %v281, 32
    %v376 = vpop.permute.xlu0 %375
    %377 = vrot.lane.b32.xlu0 %v288, 32
    %v378 = vpop.permute.xlu0 %377
    %379 = vrot.lane.b32.xlu0 %v295, 32
    %v380 = vpop.permute.xlu0 %379
    %381 = vrot.lane.b32.xlu0 %v302, 32
    %v382 = vpop.permute.xlu0 %381
    %391 = vst.msk [vmem:[#allocation5] sm:$0x3] %vm238, %v368
    %392 = vst.msk [vmem:[#allocation5 + $0x2] sm:$0x3] %vm238, %v370
    %393 = vst.msk [vmem:[#allocation5 + $0x4] sm:$0x3] %vm238, %v372
    %394 = vst.msk [vmem:[#allocation5 + $0x6] sm:$0x3] %vm238, %v374
    %395 = vst.msk [vmem:[#allocation5 + $0x8] sm:$0x3] %vm238, %v376
    %396 = vst.msk [vmem:[#allocation5 + $0xa] sm:$0x3] %vm238, %v378
    %397 = vst.msk [vmem:[#allocation5 + $0xc] sm:$0x3] %vm238, %v380
    %398 = vst.msk [vmem:[#allocation5 + $0xe] sm:$0x3] %vm238, %v382
    %v401 = vcombine.high %v188, %v188
    %v403 = vunpack.c.l.s4 1983009808
    %v404 = vunpack.c.0.s8 %v403
    %v405 = vlaneseq
    %v406 = vshrl.u32 %v405, 7
    %v407 = vsub.s32 %v404, %v406
    %v408 = vrot.slane %v188, %v407
    %v410 = vunpack.c.l.s4 1983009808
    %v411 = vunpack.c.0.s8 %v410
    %v412 = vlaneseq
    %v413 = vshrl.u32 %v412, 7
    %v414 = vsub.s32 %v411, %v413
    %v415 = vrot.slane %v401, %v414
    %v416 = vcombine.high %v408, %v408
    %v417 = vcombine.high %v415, %v415
    %v418 = vcombine.high %v192, %v192
    %v420 = vunpack.c.l.s4 1983009808
    %v421 = vunpack.c.0.s8 %v420
    %v422 = vlaneseq
    %v423 = vshrl.u32 %v422, 7
    %v424 = vsub.s32 %v421, %v423
    %v425 = vrot.slane %v192, %v424
    %v427 = vunpack.c.l.s4 1983009808
    %v428 = vunpack.c.0.s8 %v427
    %v429 = vlaneseq
    %v430 = vshrl.u32 %v429, 7
    %v431 = vsub.s32 %v428, %v430
    %v432 = vrot.slane %v418, %v431
    %v433 = vcombine.high %v425, %v425
    %v434 = vcombine.high %v432, %v432
    %443 = vst.msk [vmem:[#allocation6] sm:$0x3] %vm238, %v408
    %444 = vst.msk [vmem:[#allocation6 + $0x2] sm:$0x3] %vm238, %v416
    %445 = vst.msk [vmem:[#allocation6 + $0x4] sm:$0x3] %vm238, %v415
    %446 = vst.msk [vmem:[#allocation6 + $0x6] sm:$0x3] %vm238, %v417
    %447 = vst.msk [vmem:[#allocation6 + $0x8] sm:$0x3] %vm238, %v425
    %448 = vst.msk [vmem:[#allocation6 + $0xa] sm:$0x3] %vm238, %v433
    %449 = vst.msk [vmem:[#allocation6 + $0xc] sm:$0x3] %vm238, %v432
    %450 = vst.msk [vmem:[#allocation6 + $0xe] sm:$0x3] %vm238, %v434
    %v452 = vunpack.c.l.s4 1983009808
    %v453 = vunpack.c.0.s8 %v452
    %v454 = vlaneseq
    %v455 = vshrl.u32 %v454, 7
    %v456 = vsub.s32 %v453, %v455
    %v457 = vrot.slane %v408, %v456
    %v459 = vunpack.c.l.s4 1983009808
    %v460 = vunpack.c.0.s8 %v459
    %v461 = vlaneseq
    %v462 = vshrl.u32 %v461, 7
    %v463 = vsub.s32 %v460, %v462
    %v464 = vrot.slane %v416, %v463
    %v466 = vunpack.c.l.s4 1983009808
    %v467 = vunpack.c.0.s8 %v466
    %v468 = vlaneseq
    %v469 = vshrl.u32 %v468, 7
    %v470 = vsub.s32 %v467, %v469
    %v471 = vrot.slane %v415, %v470
    %v473 = vunpack.c.l.s4 1983009808
    %v474 = vunpack.c.0.s8 %v473
    %v475 = vlaneseq
    %v476 = vshrl.u32 %v475, 7
    %v477 = vsub.s32 %v474, %v476
    %v478 = vrot.slane %v417, %v477
    %v480 = vunpack.c.l.s4 1983009808
    %v481 = vunpack.c.0.s8 %v480
    %v482 = vlaneseq
    %v483 = vshrl.u32 %v482, 7
    %v484 = vsub.s32 %v481, %v483
    %v485 = vrot.slane %v425, %v484
    %v487 = vunpack.c.l.s4 1983009808
    %v488 = vunpack.c.0.s8 %v487
    %v489 = vlaneseq
    %v490 = vshrl.u32 %v489, 7
    %v491 = vsub.s32 %v488, %v490
    %v492 = vrot.slane %v433, %v491
    %v494 = vunpack.c.l.s4 1983009808
    %v495 = vunpack.c.0.s8 %v494
    %v496 = vlaneseq
    %v497 = vshrl.u32 %v496, 7
    %v498 = vsub.s32 %v495, %v497
    %v499 = vrot.slane %v432, %v498
    %v501 = vunpack.c.l.s4 1983009808
    %v502 = vunpack.c.0.s8 %v501
    %v503 = vlaneseq
    %v504 = vshrl.u32 %v503, 7
    %v505 = vsub.s32 %v502, %v504
    %v506 = vrot.slane %v434, %v505
    %507 = vrot.lane.b32.xlu0 %v457, 96
    %v508 = vpop.permute.xlu0 %507
    %509 = vrot.lane.b32.xlu0 %v464, 96
    %v510 = vpop.permute.xlu0 %509
    %511 = vrot.lane.b32.xlu0 %v471, 96
    %v512 = vpop.permute.xlu0 %511
    %513 = vrot.lane.b32.xlu0 %v478, 96
    %v514 = vpop.permute.xlu0 %513
    %515 = vrot.lane.b32.xlu0 %v485, 96
    %v516 = vpop.permute.xlu0 %515
    %517 = vrot.lane.b32.xlu0 %v492, 96
    %v518 = vpop.permute.xlu0 %517
    %519 = vrot.lane.b32.xlu0 %v499, 96
    %v520 = vpop.permute.xlu0 %519
    %521 = vrot.lane.b32.xlu0 %v506, 96
    %v522 = vpop.permute.xlu0 %521
    %531 = vst.msk [vmem:[#allocation7] sm:$0x3] %vm238, %v508
    %532 = vst.msk [vmem:[#allocation7 + $0x2] sm:$0x3] %vm238, %v510
    %533 = vst.msk [vmem:[#allocation7 + $0x4] sm:$0x3] %vm238, %v512
    %534 = vst.msk [vmem:[#allocation7 + $0x6] sm:$0x3] %vm238, %v514
    %535 = vst.msk [vmem:[#allocation7 + $0x8] sm:$0x3] %vm238, %v516
    %536 = vst.msk [vmem:[#allocation7 + $0xa] sm:$0x3] %vm238, %v518
    %537 = vst.msk [vmem:[#allocation7 + $0xc] sm:$0x3] %vm238, %v520
    %538 = vst.msk [vmem:[#allocation7 + $0xe] sm:$0x3] %vm238, %v522
    %v539 = vld [vmem:[%s3] sm:$0xf]
    %v540 = vld [vmem:[%s3 + $0x4] sm:$0xf]
    %v541 = vld [vmem:[%s3 + $0x8] sm:$0xf]
    %v542 = vld [vmem:[%s3 + $0xc] sm:$0xf]
    %v543 = vld [vmem:[%s4] sm:$0xf]
    %v544 = vld [vmem:[%s4 + $0x4] sm:$0xf]
    %v545 = vld [vmem:[%s4 + $0x8] sm:$0xf]
    %v546 = vld [vmem:[%s4 + $0xc] sm:$0xf]
    %v547 = vld [vmem:[%s5] sm:$0xf]
    %v548 = vld [vmem:[%s5 + $0x4] sm:$0xf]
    %v549 = vld [vmem:[%s5 + $0x8] sm:$0xf]
    %v550 = vld [vmem:[%s5 + $0xc] sm:$0xf]
    %v551 = vld [vmem:[%s6] sm:$0xf]
    %v552 = vld [vmem:[%s6 + $0x4] sm:$0xf]
    %v553 = vld [vmem:[%s6 + $0x8] sm:$0xf]
    %v554 = vld [vmem:[%s6 + $0xc] sm:$0xf]
    %v555 = vld [vmem:[%s7] sm:$0xf]
    %v556 = vld [vmem:[%s7 + $0x4] sm:$0xf]
    %v557 = vld [vmem:[%s7 + $0x8] sm:$0xf]
    %v558 = vld [vmem:[%s7 + $0xc] sm:$0xf]
    %v559 = vld [vmem:[%s8] sm:$0xf]
    %v560 = vld [vmem:[%s8 + $0x4] sm:$0xf]
    %v561 = vld [vmem:[%s8 + $0x8] sm:$0xf]
    %v562 = vld [vmem:[%s8 + $0xc] sm:$0xf]
    %v563 = vld [vmem:[%s9] sm:$0x1]
    %v564 = vld [vmem:[%s10] sm:$0x1]
    %v569 = vunpack.c.l.b16 %v539
    %v570 = vunpack.c.l.b16 %v540
    %v571 = vunpack.c.l.b16 %v541
    %v572 = vunpack.c.l.b16 %v542
    %v573 = vpack.c.b16 %v570, %v569
    %v574 = vpack.c.b16 %v572, %v571
    %v578 = vsel %vm147, 0, 0
    %580 = vmatprep.subr.bf16.mxu0 0
    %581 = vmatpush1.bf16.msra.mxu0 %v573
    %582 = vmatprep.subr.bf16.mxu0 0
    %583 = vmatpush1.bf16.msra.mxu0 %v574
    %584 = vmatprep.subr.bf16.mxu0 0
    %585 = vmatpush1.bf16.msra.mxu0 0
    %586 = vmatprep.subr.bf16.mxu0 0
    %587 = vmatpush1.bf16.msra.mxu0 0
    %588 = vmatprep.subr.bf16.mxu0 0
    %589 = vmatpush1.bf16.msra.mxu0 0
    %590 = vmatprep.subr.bf16.mxu0 0
    %591 = vmatpush1.bf16.msra.mxu0 0
    %592 = vmatprep.subr.bf16.mxu0 0
    %593 = vmatpush1.bf16.msra.mxu0 0
    %594 = vmatprep.subr.bf16.mxu0 0
    %595 = vmatpush1.bf16.msra.mxu0 0
    %596 = vmatprep.subr.bf16.mxu0 0
    %597 = vmatpush1.bf16.msra.mxu0 0
    %598 = vmatprep.subr.bf16.mxu0 0
    %599 = vmatpush1.bf16.msra.mxu0 0
    %600 = vmatprep.subr.bf16.mxu0 0
    %601 = vmatpush1.bf16.msra.mxu0 0
    %602 = vmatprep.subr.bf16.mxu0 0
    %603 = vmatpush1.bf16.msra.mxu0 0
    %604 = vmatprep.subr.bf16.mxu0 0
    %605 = vmatpush1.bf16.msra.mxu0 0
    %606 = vmatprep.subr.bf16.mxu0 0
    %607 = vmatpush1.bf16.msra.mxu0 0
    %608 = vmatprep.subr.bf16.mxu0 0
    %609 = vmatpush1.bf16.msra.mxu0 0
    %610 = vmatprep.subr.bf16.mxu0 0
    %611 = vmatpush1.bf16.msra.mxu0 0
    %612 = vmatprep.mubr.bf16.mxu0 0
    %613 = vmatmul.mubr.bf16.gmra.mrb[0].mxu0 %v578
    %v614 = vpop.f32.mrb[0].mxu0
    %v615 = vadd.f32 0.0, %v614
    %v616 = vpop.f32.mrb[0].mxu0
    %v617 = vpop.f32.mrb[0].mxu0
    %v618 = vpop.f32.mrb[0].mxu0
    %619 = vdwg.mxu0
    %v624 = vunpack.c.l.b16 %v543
    %v625 = vunpack.c.l.b16 %v544
    %v626 = vunpack.c.l.b16 %v545
    %v627 = vunpack.c.l.b16 %v546
    %v628 = vpack.c.b16 %v625, %v624
    %v629 = vpack.c.b16 %v627, %v626
    %632 = vmatprep.subr.bf16.mxu0 0
    %633 = vmatpush1.bf16.msra.mxu0 %v628
    %634 = vmatprep.subr.bf16.mxu0 0
    %635 = vmatpush1.bf16.msra.mxu0 %v629
    %636 = vmatprep.subr.bf16.mxu0 0
    %637 = vmatpush1.bf16.msra.mxu0 0
    %638 = vmatprep.subr.bf16.mxu0 0
    %639 = vmatpush1.bf16.msra.mxu0 0
    %640 = vmatprep.subr.bf16.mxu0 0
    %641 = vmatpush1.bf16.msra.mxu0 0
    %642 = vmatprep.subr.bf16.mxu0 0
    %643 = vmatpush1.bf16.msra.mxu0 0
    %644 = vmatprep.subr.bf16.mxu0 0
    %645 = vmatpush1.bf16.msra.mxu0 0
    %646 = vmatprep.subr.bf16.mxu0 0
    %647 = vmatpush1.bf16.msra.mxu0 0
    %648 = vmatprep.subr.bf16.mxu0 0
    %649 = vmatpush1.bf16.msra.mxu0 0
    %650 = vmatprep.subr.bf16.mxu0 0
    %651 = vmatpush1.bf16.msra.mxu0 0
    %652 = vmatprep.subr.bf16.mxu0 0
    %653 = vmatpush1.bf16.msra.mxu0 0
    %654 = vmatprep.subr.bf16.mxu0 0
    %655 = vmatpush1.bf16.msra.mxu0 0
    %656 = vmatprep.subr.bf16.mxu0 0
    %657 = vmatpush1.bf16.msra.mxu0 0
    %658 = vmatprep.subr.bf16.mxu0 0
    %659 = vmatpush1.bf16.msra.mxu0 0
    %660 = vmatprep.subr.bf16.mxu0 0
    %661 = vmatpush1.bf16.msra.mxu0 0
    %662 = vmatprep.subr.bf16.mxu0 0
    %663 = vmatpush1.bf16.msra.mxu0 0
    %664 = vmatprep.mubr.bf16.mxu0 0
    %665 = vmatmul.mubr.bf16.gmra.mrb[0].mxu0 %v578
    %v666 = vpop.f32.mrb[0].mxu0
    %v667 = vadd.f32 0.0, %v666
    %v668 = vpop.f32.mrb[0].mxu0
    %v669 = vpop.f32.mrb[0].mxu0
    %v670 = vpop.f32.mrb[0].mxu0
    %671 = vdwg.mxu0
    %v673 = vlaneseq
    %v674 = vshrl.u32 %v673, 7
    %v675 = vsub.s32 0, %v674
    %v676 = vrot.slane %v563, %v675
    %v682 = vunpack.c.l.b16 %v547
    %v683 = vunpack.c.l.b16 %v548
    %v684 = vunpack.c.l.b16 %v549
    %v685 = vunpack.c.l.b16 %v550
    %v686 = vpack.c.b16 %v683, %v682
    %v687 = vpack.c.b16 %v685, %v684
    %690 = vmatprep.subr.bf16.mxu0 0
    %691 = vmatpush1.bf16.msra.mxu0 %v686
    %692 = vmatprep.subr.bf16.mxu0 0
    %693 = vmatpush1.bf16.msra.mxu0 %v687
    %694 = vmatprep.subr.bf16.mxu0 0
    %695 = vmatpush1.bf16.msra.mxu0 0
    %696 = vmatprep.subr.bf16.mxu0 0
    %697 = vmatpush1.bf16.msra.mxu0 0
    %698 = vmatprep.subr.bf16.mxu0 0
    %699 = vmatpush1.bf16.msra.mxu0 0
    %700 = vmatprep.subr.bf16.mxu0 0
    %701 = vmatpush1.bf16.msra.mxu0 0
    %702 = vmatprep.subr.bf16.mxu0 0
    %703 = vmatpush1.bf16.msra.mxu0 0
    %704 = vmatprep.subr.bf16.mxu0 0
    %705 = vmatpush1.bf16.msra.mxu0 0
    %706 = vmatprep.subr.bf16.mxu0 0
    %707 = vmatpush1.bf16.msra.mxu0 0
    %708 = vmatprep.subr.bf16.mxu0 0
    %709 = vmatpush1.bf16.msra.mxu0 0
    %710 = vmatprep.subr.bf16.mxu0 0
    %711 = vmatpush1.bf16.msra.mxu0 0
    %712 = vmatprep.subr.bf16.mxu0 0
    %713 = vmatpush1.bf16.msra.mxu0 0
    %714 = vmatprep.subr.bf16.mxu0 0
    %715 = vmatpush1.bf16.msra.mxu0 0
    %716 = vmatprep.subr.bf16.mxu0 0
    %717 = vmatpush1.bf16.msra.mxu0 0
    %718 = vmatprep.subr.bf16.mxu0 0
    %719 = vmatpush1.bf16.msra.mxu0 0
    %720 = vmatprep.subr.bf16.mxu0 0
    %721 = vmatpush1.bf16.msra.mxu0 0
    %722 = vmatprep.mubr.bf16.mxu0 0
    %723 = vmatmul.mubr.bf16.gmra.mrb[0].mxu0 %v578
    %v724 = vpop.f32.mrb[0].mxu0
    %v725 = vadd.f32 %v676, %v724
    %v726 = vpop.f32.mrb[0].mxu0
    %v727 = vpop.f32.mrb[0].mxu0
    %v728 = vpop.f32.mrb[0].mxu0
    %729 = vdwg.mxu0
    %v730 = vld [vmem:[#allocation2] sm:$0x3]
    %v731 = vadd.f32 %v730, %v615
    %v732 = vxor.u32 %v731, 2147483648
    %v733 = vmul.f32 %v732, 1.442695
    %v734 = vpow.pop %v733
    %v735 = vadd.f32 %v734, 1.0
    %v736 = vrcp.pop %v735
    %v737 = vmul.f32 1.0, %v736
    %v738 = vld [vmem:[#allocation3] sm:$0x3]
    %v739 = vadd.f32 %v738, %v667
    %v740 = vxor.u32 %v739, 2147483648
    %v741 = vmul.f32 %v740, 1.442695
    %v742 = vpow.pop %v741
    %v743 = vadd.f32 %v742, 1.0
    %v744 = vrcp.pop %v743
    %v745 = vmul.f32 1.0, %v744
    %v746 = vld [vmem:[#allocation4] sm:$0x3]
    %v747 = vmul.f32 %v737, %v725
    %v748 = vadd.f32 %v746, %v747
    %v749 = vtanh.pop %v748
    %v750 = vsub.f32 1.0, %v745
    %v751 = vmul.f32 %v750, %v749
    %v752 = vmul.f32 %v745, 0.0
    %v753 = vadd.f32 %v751, %v752
    %v758 = vunpack.c.l.b16 %v551
    %v759 = vunpack.c.l.b16 %v552
    %v760 = vunpack.c.l.b16 %v553
    %v761 = vunpack.c.l.b16 %v554
    %v762 = vpack.c.b16 %v759, %v758
    %v763 = vpack.c.b16 %v761, %v760
    %766 = vmatprep.subr.bf16.mxu0 0
    %767 = vmatpush1.bf16.msra.mxu0 %v762
    %768 = vmatprep.subr.bf16.mxu0 0
    %769 = vmatpush1.bf16.msra.mxu0 %v763
    %770 = vmatprep.subr.bf16.mxu0 0
    %771 = vmatpush1.bf16.msra.mxu0 0
    %772 = vmatprep.subr.bf16.mxu0 0
    %773 = vmatpush1.bf16.msra.mxu0 0
    %774 = vmatprep.subr.bf16.mxu0 0
    %775 = vmatpush1.bf16.msra.mxu0 0
    %776 = vmatprep.subr.bf16.mxu0 0
    %777 = vmatpush1.bf16.msra.mxu0 0
    %778 = vmatprep.subr.bf16.mxu0 0
    %779 = vmatpush1.bf16.msra.mxu0 0
    %780 = vmatprep.subr.bf16.mxu0 0
    %781 = vmatpush1.bf16.msra.mxu0 0
    %782 = vmatprep.subr.bf16.mxu0 0
    %783 = vmatpush1.bf16.msra.mxu0 0
    %784 = vmatprep.subr.bf16.mxu0 0
    %785 = vmatpush1.bf16.msra.mxu0 0
    %786 = vmatprep.subr.bf16.mxu0 0
    %787 = vmatpush1.bf16.msra.mxu0 0
    %788 = vmatprep.subr.bf16.mxu0 0
    %789 = vmatpush1.bf16.msra.mxu0 0
    %790 = vmatprep.subr.bf16.mxu0 0
    %791 = vmatpush1.bf16.msra.mxu0 0
    %792 = vmatprep.subr.bf16.mxu0 0
    %793 = vmatpush1.bf16.msra.mxu0 0
    %794 = vmatprep.subr.bf16.mxu0 0
    %795 = vmatpush1.bf16.msra.mxu0 0
    %796 = vmatprep.subr.bf16.mxu0 0
    %797 = vmatpush1.bf16.msra.mxu0 0
    %798 = vmatprep.mubr.bf16.mxu0 0
    %799 = vmatmul.mubr.bf16.gmra.mrb[0].mxu0 %v578
    %v800 = vpop.f32.mrb[0].mxu0
    %v801 = vadd.f32 0.0, %v800
    %v802 = vpop.f32.mrb[0].mxu0
    %v803 = vpop.f32.mrb[0].mxu0
    %v804 = vpop.f32.mrb[0].mxu0
    %805 = vdwg.mxu0
    %v810 = vunpack.c.l.b16 %v555
    %v811 = vunpack.c.l.b16 %v556
    %v812 = vunpack.c.l.b16 %v557
    %v813 = vunpack.c.l.b16 %v558
    %v814 = vpack.c.b16 %v811, %v810
    %v815 = vpack.c.b16 %v813, %v812
    %818 = vmatprep.subr.bf16.mxu0 0
    %819 = vmatpush1.bf16.msra.mxu0 %v814
    %820 = vmatprep.subr.bf16.mxu0 0
    %821 = vmatpush1.bf16.msra.mxu0 %v815
    %822 = vmatprep.subr.bf16.mxu0 0
    %823 = vmatpush1.bf16.msra.mxu0 0
    %824 = vmatprep.subr.bf16.mxu0 0
    %825 = vmatpush1.bf16.msra.mxu0 0
    %826 = vmatprep.subr.bf16.mxu0 0
    %827 = vmatpush1.bf16.msra.mxu0 0
    %828 = vmatprep.subr.bf16.mxu0 0
    %829 = vmatpush1.bf16.msra.mxu0 0
    %830 = vmatprep.subr.bf16.mxu0 0
    %831 = vmatpush1.bf16.msra.mxu0 0
    %832 = vmatprep.subr.bf16.mxu0 0
    %833 = vmatpush1.bf16.msra.mxu0 0
    %834 = vmatprep.subr.bf16.mxu0 0
    %835 = vmatpush1.bf16.msra.mxu0 0
    %836 = vmatprep.subr.bf16.mxu0 0
    %837 = vmatpush1.bf16.msra.mxu0 0
    %838 = vmatprep.subr.bf16.mxu0 0
    %839 = vmatpush1.bf16.msra.mxu0 0
    %840 = vmatprep.subr.bf16.mxu0 0
    %841 = vmatpush1.bf16.msra.mxu0 0
    %842 = vmatprep.subr.bf16.mxu0 0
    %843 = vmatpush1.bf16.msra.mxu0 0
    %844 = vmatprep.subr.bf16.mxu0 0
    %845 = vmatpush1.bf16.msra.mxu0 0
    %846 = vmatprep.subr.bf16.mxu0 0
    %847 = vmatpush1.bf16.msra.mxu0 0
    %848 = vmatprep.subr.bf16.mxu0 0
    %849 = vmatpush1.bf16.msra.mxu0 0
    %850 = vmatprep.mubr.bf16.mxu0 0
    %851 = vmatmul.mubr.bf16.gmra.mrb[0].mxu0 %v578
    %v852 = vpop.f32.mrb[0].mxu0
    %v853 = vadd.f32 0.0, %v852
    %v854 = vpop.f32.mrb[0].mxu0
    %v855 = vpop.f32.mrb[0].mxu0
    %v856 = vpop.f32.mrb[0].mxu0
    %857 = vdwg.mxu0
    %v859 = vlaneseq
    %v860 = vshrl.u32 %v859, 7
    %v861 = vsub.s32 0, %v860
    %v862 = vrot.slane %v564, %v861
    %v868 = vunpack.c.l.b16 %v559
    %v869 = vunpack.c.l.b16 %v560
    %v870 = vunpack.c.l.b16 %v561
    %v871 = vunpack.c.l.b16 %v562
    %v872 = vpack.c.b16 %v869, %v868
    %v873 = vpack.c.b16 %v871, %v870
    %876 = vmatprep.subr.bf16.mxu0 0
    %877 = vmatpush1.bf16.msra.mxu0 %v872
    %878 = vmatprep.subr.bf16.mxu0 0
    %879 = vmatpush1.bf16.msra.mxu0 %v873
    %880 = vmatprep.subr.bf16.mxu0 0
    %881 = vmatpush1.bf16.msra.mxu0 0
    %882 = vmatprep.subr.bf16.mxu0 0
    %883 = vmatpush1.bf16.msra.mxu0 0
    %884 = vmatprep.subr.bf16.mxu0 0
    %885 = vmatpush1.bf16.msra.mxu0 0
    %886 = vmatprep.subr.bf16.mxu0 0
    %887 = vmatpush1.bf16.msra.mxu0 0
    %888 = vmatprep.subr.bf16.mxu0 0
    %889 = vmatpush1.bf16.msra.mxu0 0
    %890 = vmatprep.subr.bf16.mxu0 0
    %891 = vmatpush1.bf16.msra.mxu0 0
    %892 = vmatprep.subr.bf16.mxu0 0
    %893 = vmatpush1.bf16.msra.mxu0 0
    %894 = vmatprep.subr.bf16.mxu0 0
    %895 = vmatpush1.bf16.msra.mxu0 0
    %896 = vmatprep.subr.bf16.mxu0 0
    %897 = vmatpush1.bf16.msra.mxu0 0
    %898 = vmatprep.subr.bf16.mxu0 0
    %899 = vmatpush1.bf16.msra.mxu0 0
    %900 = vmatprep.subr.bf16.mxu0 0
    %901 = vmatpush1.bf16.msra.mxu0 0
    %902 = vmatprep.subr.bf16.mxu0 0
    %903 = vmatpush1.bf16.msra.mxu0 0
    %904 = vmatprep.subr.bf16.mxu0 0
    %905 = vmatpush1.bf16.msra.mxu0 0
    %906 = vmatprep.subr.bf16.mxu0 0
    %907 = vmatpush1.bf16.msra.mxu0 0
    %908 = vmatprep.mubr.bf16.mxu0 0
    %909 = vmatmul.mubr.bf16.gmra.mrb[0].mxu0 %v578
    %v910 = vpop.f32.mrb[0].mxu0
    %v911 = vadd.f32 %v862, %v910
    %v912 = vpop.f32.mrb[0].mxu0
    %v913 = vpop.f32.mrb[0].mxu0
    %v914 = vpop.f32.mrb[0].mxu0
    %915 = vdwg.mxu0
    %s916 = scalar_lea.vmem [#allocation5], 14
    %v917 = vld [vmem:[%s916] sm:$0x3]
    %v918 = vadd.f32 %v917, %v801
    %v919 = vxor.u32 %v918, 2147483648
    %v920 = vmul.f32 %v919, 1.442695
    %v921 = vpow.pop %v920
    %v922 = vadd.f32 %v921, 1.0
    %v923 = vrcp.pop %v922
    %v924 = vmul.f32 1.0, %v923
    %s925 = scalar_lea.vmem [#allocation6], 14
    %v926 = vld [vmem:[%s925] sm:$0x3]
    %v927 = vadd.f32 %v926, %v853
    %v928 = vxor.u32 %v927, 2147483648
    %v929 = vmul.f32 %v928, 1.442695
    %v930 = vpow.pop %v929
    %v931 = vadd.f32 %v930, 1.0
    %v932 = vrcp.pop %v931
    %v933 = vmul.f32 1.0, %v932
    %s934 = scalar_lea.vmem [#allocation7], 14
    %v935 = vld [vmem:[%s934] sm:$0x3]
    %v936 = vmul.f32 %v924, %v911
    %v937 = vadd.f32 %v935, %v936
    %v938 = vtanh.pop %v937
    %v939 = vsub.f32 1.0, %v933
    %v940 = vmul.f32 %v939, %v938
    %v941 = vmul.f32 %v933, 0.0
    %v942 = vadd.f32 %v940, %v941
    %943 = vst.msk [vmem:[#allocation8] sm:$0x3] %vm238, %v753
    %944 = vst.msk [vmem:[#allocation9] sm:$0x3] %vm238, %v942
    %v945 = vpack.c.bf16 %v753, %v753
    %v946 = vpack.c.bf16 %v942, %v942
    %v948 = vsel %vm147, %v945, 0
    %950 = vmatprep.subr.bf16.mxu0 0
    %951 = vmatpush1.bf16.msra.mxu0 %v573
    %952 = vmatprep.subr.bf16.mxu0 0
    %953 = vmatpush1.bf16.msra.mxu0 %v574
    %954 = vmatprep.subr.bf16.mxu0 0
    %955 = vmatpush1.bf16.msra.mxu0 0
    %956 = vmatprep.subr.bf16.mxu0 0
    %957 = vmatpush1.bf16.msra.mxu0 0
    %958 = vmatprep.subr.bf16.mxu0 0
    %959 = vmatpush1.bf16.msra.mxu0 0
    %960 = vmatprep.subr.bf16.mxu0 0
    %961 = vmatpush1.bf16.msra.mxu0 0
    %962 = vmatprep.subr.bf16.mxu0 0
    %963 = vmatpush1.bf16.msra.mxu0 0
    %964 = vmatprep.subr.bf16.mxu0 0
    %965 = vmatpush1.bf16.msra.mxu0 0
    %966 = vmatprep.subr.bf16.mxu0 0
    %967 = vmatpush1.bf16.msra.mxu0 0
    %968 = vmatprep.subr.bf16.mxu0 0
    %969 = vmatpush1.bf16.msra.mxu0 0
    %970 = vmatprep.subr.bf16.mxu0 0
    %971 = vmatpush1.bf16.msra.mxu0 0
    %972 = vmatprep.subr.bf16.mxu0 0
    %973 = vmatpush1.bf16.msra.mxu0 0
    %974 = vmatprep.subr.bf16.mxu0 0
    %975 = vmatpush1.bf16.msra.mxu0 0
    %976 = vmatprep.subr.bf16.mxu0 0
    %977 = vmatpush1.bf16.msra.mxu0 0
    %978 = vmatprep.subr.bf16.mxu0 0
    %979 = vmatpush1.bf16.msra.mxu0 0
    %980 = vmatprep.subr.bf16.mxu0 0
    %981 = vmatpush1.bf16.msra.mxu0 0
    %982 = vmatprep.mubr.bf16.mxu0 0
    %983 = vmatmul.mubr.bf16.gmra.mrb[0].mxu0 %v948
    %v984 = vpop.f32.mrb[0].mxu0
    %v985 = vadd.f32 0.0, %v984
    %v986 = vpop.f32.mrb[0].mxu0
    %v987 = vpop.f32.mrb[0].mxu0
    %v988 = vpop.f32.mrb[0].mxu0
    %989 = vdwg.mxu0
    %990 = vmatprep.subr.bf16.mxu0 0
    %991 = vmatpush1.bf16.msra.mxu0 %v628
    %992 = vmatprep.subr.bf16.mxu0 0
    %993 = vmatpush1.bf16.msra.mxu0 %v629
    %994 = vmatprep.subr.bf16.mxu0 0
    %995 = vmatpush1.bf16.msra.mxu0 0
    %996 = vmatprep.subr.bf16.mxu0 0
    %997 = vmatpush1.bf16.msra.mxu0 0
    %998 = vmatprep.subr.bf16.mxu0 0
    %999 = vmatpush1.bf16.msra.mxu0 0
    %1000 = vmatprep.subr.bf16.mxu0 0
    %1001 = vmatpush1.bf16.msra.mxu0 0
    %1002 = vmatprep.subr.bf16.mxu0 0
    %1003 = vmatpush1.bf16.msra.mxu0 0
    %1004 = vmatprep.subr.bf16.mxu0 0
    %1005 = vmatpush1.bf16.msra.mxu0 0
    %1006 = vmatprep.subr.bf16.mxu0 0
    %1007 = vmatpush1.bf16.msra.mxu0 0
    %1008 = vmatprep.subr.bf16.mxu0 0
    %1009 = vmatpush1.bf16.msra.mxu0 0
    %1010 = vmatprep.subr.bf16.mxu0 0
    %1011 = vmatpush1.bf16.msra.mxu0 0
    %1012 = vmatprep.subr.bf16.mxu0 0
    %1013 = vmatpush1.bf16.msra.mxu0 0
    %1014 = vmatprep.subr.bf16.mxu0 0
    %1015 = vmatpush1.bf16.msra.mxu0 0
    %1016 = vmatprep.subr.bf16.mxu0 0
    %1017 = vmatpush1.bf16.msra.mxu0 0
    %1018 = vmatprep.subr.bf16.mxu0 0
    %1019 = vmatpush1.bf16.msra.mxu0 0
    %1020 = vmatprep.subr.bf16.mxu0 0
    %1021 = vmatpush1.bf16.msra.mxu0 0
    %1022 = vmatprep.mubr.bf16.mxu0 0
    %1023 = vmatmul.mubr.bf16.gmra.mrb[0].mxu0 %v948
    %v1024 = vpop.f32.mrb[0].mxu0
    %v1025 = vadd.f32 0.0, %v1024
    %v1026 = vpop.f32.mrb[0].mxu0
    %v1027 = vpop.f32.mrb[0].mxu0
    %v1028 = vpop.f32.mrb[0].mxu0
    %1029 = vdwg.mxu0
    %1030 = vmatprep.subr.bf16.mxu0 0
    %1031 = vmatpush1.bf16.msra.mxu0 %v686
    %1032 = vmatprep.subr.bf16.mxu0 0
    %1033 = vmatpush1.bf16.msra.mxu0 %v687
    %1034 = vmatprep.subr.bf16.mxu0 0
    %1035 = vmatpush1.bf16.msra.mxu0 0
    %1036 = vmatprep.subr.bf16.mxu0 0
    %1037 = vmatpush1.bf16.msra.mxu0 0
    %1038 = vmatprep.subr.bf16.mxu0 0
    %1039 = vmatpush1.bf16.msra.mxu0 0
    %1040 = vmatprep.subr.bf16.mxu0 0
    %1041 = vmatpush1.bf16.msra.mxu0 0
    %1042 = vmatprep.subr.bf16.mxu0 0
    %1043 = vmatpush1.bf16.msra.mxu0 0
    %1044 = vmatprep.subr.bf16.mxu0 0
    %1045 = vmatpush1.bf16.msra.mxu0 0
    %1046 = vmatprep.subr.bf16.mxu0 0
    %1047 = vmatpush1.bf16.msra.mxu0 0
    %1048 = vmatprep.subr.bf16.mxu0 0
    %1049 = vmatpush1.bf16.msra.mxu0 0
    %1050 = vmatprep.subr.bf16.mxu0 0
    %1051 = vmatpush1.bf16.msra.mxu0 0
    %1052 = vmatprep.subr.bf16.mxu0 0
    %1053 = vmatpush1.bf16.msra.mxu0 0
    %1054 = vmatprep.subr.bf16.mxu0 0
    %1055 = vmatpush1.bf16.msra.mxu0 0
    %1056 = vmatprep.subr.bf16.mxu0 0
    %1057 = vmatpush1.bf16.msra.mxu0 0
    %1058 = vmatprep.subr.bf16.mxu0 0
    %1059 = vmatpush1.bf16.msra.mxu0 0
    %1060 = vmatprep.subr.bf16.mxu0 0
    %1061 = vmatpush1.bf16.msra.mxu0 0
    %1062 = vmatprep.mubr.bf16.mxu0 0
    %1063 = vmatmul.mubr.bf16.gmra.mrb[0].mxu0 %v948
    %v1064 = vpop.f32.mrb[0].mxu0
    %v1065 = vadd.f32 %v676, %v1064
    %v1066 = vpop.f32.mrb[0].mxu0
    %v1067 = vpop.f32.mrb[0].mxu0
    %v1068 = vpop.f32.mrb[0].mxu0
    %1069 = vdwg.mxu0
    %s1070 = scalar_lea.vmem [#allocation2], 2
    %v1071 = vld [vmem:[%s1070] sm:$0x3]
    %v1072 = vadd.f32 %v1071, %v985
    %v1073 = vxor.u32 %v1072, 2147483648
    %v1074 = vmul.f32 %v1073, 1.442695
    %v1075 = vpow.pop %v1074
    %v1076 = vadd.f32 %v1075, 1.0
    %v1077 = vrcp.pop %v1076
    %v1078 = vmul.f32 1.0, %v1077
    %s1079 = scalar_lea.vmem [#allocation3], 2
    %v1080 = vld [vmem:[%s1079] sm:$0x3]
    %v1081 = vadd.f32 %v1080, %v1025
    %v1082 = vxor.u32 %v1081, 2147483648
    %v1083 = vmul.f32 %v1082, 1.442695
    %v1084 = vpow.pop %v1083
    %v1085 = vadd.f32 %v1084, 1.0
    %v1086 = vrcp.pop %v1085
    %v1087 = vmul.f32 1.0, %v1086
    %s1088 = scalar_lea.vmem [#allocation4], 2
    %v1089 = vld [vmem:[%s1088] sm:$0x3]
    %v1090 = vmul.f32 %v1078, %v1065
    %v1091 = vadd.f32 %v1089, %v1090
    %v1092 = vtanh.pop %v1091
    %v1093 = vsub.f32 1.0, %v1087
    %v1094 = vmul.f32 %v1093, %v1092
    %v1095 = vmul.f32 %v1087, %v753
    %v1096 = vadd.f32 %v1094, %v1095
    %v1098 = vsel %vm147, %v946, 0
    %1100 = vmatprep.subr.bf16.mxu0 0
    %1101 = vmatpush1.bf16.msra.mxu0 %v762
    %1102 = vmatprep.subr.bf16.mxu0 0
    %1103 = vmatpush1.bf16.msra.mxu0 %v763
    %1104 = vmatprep.subr.bf16.mxu0 0
    %1105 = vmatpush1.bf16.msra.mxu0 0
    %1106 = vmatprep.subr.bf16.mxu0 0
    %1107 = vmatpush1.bf16.msra.mxu0 0
    %1108 = vmatprep.subr.bf16.mxu0 0
    %1109 = vmatpush1.bf16.msra.mxu0 0
    %1110 = vmatprep.subr.bf16.mxu0 0
    %1111 = vmatpush1.bf16.msra.mxu0 0
    %1112 = vmatprep.subr.bf16.mxu0 0
    %1113 = vmatpush1.bf16.msra.mxu0 0
    %1114 = vmatprep.subr.bf16.mxu0 0
    %1115 = vmatpush1.bf16.msra.mxu0 0
    %1116 = vmatprep.subr.bf16.mxu0 0
    %1117 = vmatpush1.bf16.msra.mxu0 0
    %1118 = vmatprep.subr.bf16.mxu0 0
    %1119 = vmatpush1.bf16.msra.mxu0 0
    %1120 = vmatprep.subr.bf16.mxu0 0
    %1121 = vmatpush1.bf16.msra.mxu0 0
    %1122 = vmatprep.subr.bf16.mxu0 0
    %1123 = vmatpush1.bf16.msra.mxu0 0
    %1124 = vmatprep.subr.bf16.mxu0 0
    %1125 = vmatpush1.bf16.msra.mxu0 0
    %1126 = vmatprep.subr.bf16.mxu0 0
    %1127 = vmatpush1.bf16.msra.mxu0 0
    %1128 = vmatprep.subr.bf16.mxu0 0
    %1129 = vmatpush1.bf16.msra.mxu0 0
    %1130 = vmatprep.subr.bf16.mxu0 0
    %1131 = vmatpush1.bf16.msra.mxu0 0
    %1132 = vmatprep.mubr.bf16.mxu0 0
    %1133 = vmatmul.mubr.bf16.gmra.mrb[0].mxu0 %v1098
    %v1134 = vpop.f32.mrb[0].mxu0
    %v1135 = vadd.f32 0.0, %v1134
    %v1136 = vpop.f32.mrb[0].mxu0
    %v1137 = vpop.f32.mrb[0].mxu0
    %v1138 = vpop.f32.mrb[0].mxu0
    %1139 = vdwg.mxu0
    %1140 = vmatprep.subr.bf16.mxu0 0
    %1141 = vmatpush1.bf16.msra.mxu0 %v814
    %1142 = vmatprep.subr.bf16.mxu0 0
    %1143 = vmatpush1.bf16.msra.mxu0 %v815
    %1144 = vmatprep.subr.bf16.mxu0 0
    %1145 = vmatpush1.bf16.msra.mxu0 0
    %1146 = vmatprep.subr.bf16.mxu0 0
    %1147 = vmatpush1.bf16.msra.mxu0 0
    %1148 = vmatprep.subr.bf16.mxu0 0
    %1149 = vmatpush1.bf16.msra.mxu0 0
    %1150 = vmatprep.subr.bf16.mxu0 0
    %1151 = vmatpush1.bf16.msra.mxu0 0
    %1152 = vmatprep.subr.bf16.mxu0 0
    %1153 = vmatpush1.bf16.msra.mxu0 0
    %1154 = vmatprep.subr.bf16.mxu0 0
    %1155 = vmatpush1.bf16.msra.mxu0 0
    %1156 = vmatprep.subr.bf16.mxu0 0
    %1157 = vmatpush1.bf16.msra.mxu0 0
    %1158 = vmatprep.subr.bf16.mxu0 0
    %1159 = vmatpush1.bf16.msra.mxu0 0
    %1160 = vmatprep.subr.bf16.mxu0 0
    %1161 = vmatpush1.bf16.msra.mxu0 0
    %1162 = vmatprep.subr.bf16.mxu0 0
    %1163 = vmatpush1.bf16.msra.mxu0 0
    %1164 = vmatprep.subr.bf16.mxu0 0
    %1165 = vmatpush1.bf16.msra.mxu0 0
    %1166 = vmatprep.subr.bf16.mxu0 0
    %1167 = vmatpush1.bf16.msra.mxu0 0
    %1168 = vmatprep.subr.bf16.mxu0 0
    %1169 = vmatpush1.bf16.msra.mxu0 0
    %1170 = vmatprep.subr.bf16.mxu0 0
    %1171 = vmatpush1.bf16.msra.mxu0 0
    %1172 = vmatprep.mubr.bf16.mxu0 0
    %1173 = vmatmul.mubr.bf16.gmra.mrb[0].mxu0 %v1098
    %v1174 = vpop.f32.mrb[0].mxu0
    %v1175 = vadd.f32 0.0, %v1174
    %v1176 = vpop.f32.mrb[0].mxu0
    %v1177 = vpop.f32.mrb[0].mxu0
    %v1178 = vpop.f32.mrb[0].mxu0
    %1179 = vdwg.mxu0
    %1180 = vmatprep.subr.bf16.mxu0 0
    %1181 = vmatpush1.bf16.msra.mxu0 %v872
    %1182 = vmatprep.subr.bf16.mxu0 0
    %1183 = vmatpush1.bf16.msra.mxu0 %v873
    %1184 = vmatprep.subr.bf16.mxu0 0
    %1185 = vmatpush1.bf16.msra.mxu0 0
    %1186 = vmatprep.subr.bf16.mxu0 0
    %1187 = vmatpush1.bf16.msra.mxu0 0
    %1188 = vmatprep.subr.bf16.mxu0 0
    %1189 = vmatpush1.bf16.msra.mxu0 0
    %1190 = vmatprep.subr.bf16.mxu0 0
    %1191 = vmatpush1.bf16.msra.mxu0 0
    %1192 = vmatprep.subr.bf16.mxu0 0
    %1193 = vmatpush1.bf16.msra.mxu0 0
    %1194 = vmatprep.subr.bf16.mxu0 0
    %1195 = vmatpush1.bf16.msra.mxu0 0
    %1196 = vmatprep.subr.bf16.mxu0 0
    %1197 = vmatpush1.bf16.msra.mxu0 0
    %1198 = vmatprep.subr.bf16.mxu0 0
    %1199 = vmatpush1.bf16.msra.mxu0 0
    %1200 = vmatprep.subr.bf16.mxu0 0
    %1201 = vmatpush1.bf16.msra.mxu0 0
    %1202 = vmatprep.subr.bf16.mxu0 0
    %1203 = vmatpush1.bf16.msra.mxu0 0
    %1204 = vmatprep.subr.bf16.mxu0 0
    %1205 = vmatpush1.bf16.msra.mxu0 0
    %1206 = vmatprep.subr.bf16.mxu0 0
    %1207 = vmatpush1.bf16.msra.mxu0 0
    %1208 = vmatprep.subr.bf16.mxu0 0
    %1209 = vmatpush1.bf16.msra.mxu0 0
    %1210 = vmatprep.subr.bf16.mxu0 0
    %1211 = vmatpush1.bf16.msra.mxu0 0
    %1212 = vmatprep.mubr.bf16.mxu0 0
    %1213 = vmatmul.mubr.bf16.gmra.mrb[0].mxu0 %v1098
    %v1214 = vpop.f32.mrb[0].mxu0
    %v1215 = vadd.f32 %v862, %v1214
    %v1216 = vpop.f32.mrb[0].mxu0
    %v1217 = vpop.f32.mrb[0].mxu0
    %v1218 = vpop.f32.mrb[0].mxu0
    %1219 = vdwg.mxu0
    %s1220 = scalar_lea.vmem [#allocation5], 12
    %v1221 = vld [vmem:[%s1220] sm:$0x3]
    %v1222 = vadd.f32 %v1221, %v1135
    %v1223 = vxor.u32 %v1222, 2147483648
    %v1224 = vmul.f32 %v1223, 1.442695
    %v1225 = vpow.pop %v1224
    %v1226 = vadd.f32 %v1225, 1.0
    %v1227 = vrcp.pop %v1226
    %v1228 = vmul.f32 1.0, %v1227
    %s1229 = scalar_lea.vmem [#allocation6], 12
    %v1230 = vld [vmem:[%s1229] sm:$0x3]
    %v1231 = vadd.f32 %v1230, %v1175
    %v1232 = vxor.u32 %v1231, 2147483648
    %v1233 = vmul.f32 %v1232, 1.442695
    %v1234 = vpow.pop %v1233
    %v1235 = vadd.f32 %v1234, 1.0
    %v1236 = vrcp.pop %v1235
    %v1237 = vmul.f32 1.0, %v1236
    %s1238 = scalar_lea.vmem [#allocation7], 12
    %v1239 = vld [vmem:[%s1238] sm:$0x3]
    %v1240 = vmul.f32 %v1228, %v1215
    %v1241 = vadd.f32 %v1239, %v1240
    %v1242 = vtanh.pop %v1241
    %v1243 = vsub.f32 1.0, %v1237
    %v1244 = vmul.f32 %v1243, %v1242
    %v1245 = vmul.f32 %v1237, %v942
    %v1246 = vadd.f32 %v1244, %v1245
    %s1247 = scalar_lea.vmem [#allocation8], 2
    %1248 = vst.msk [vmem:[%s1247] sm:$0x3] %vm238, %v1096
    %s1249 = scalar_lea.vmem [#allocation9], 2
    %1250 = vst.msk [vmem:[%s1249] sm:$0x3] %vm238, %v1246
    %v1251 = vpack.c.bf16 %v1096, %v1096
    %v1252 = vpack.c.bf16 %v1246, %v1246
    %v1254 = vsel %vm147, %v1251, 0
    %1256 = vmatprep.subr.bf16.mxu0 0
    %1257 = vmatpush1.bf16.msra.mxu0 %v573
    %1258 = vmatprep.subr.bf16.mxu0 0
    %1259 = vmatpush1.bf16.msra.mxu0 %v574
    %1260 = vmatprep.subr.bf16.mxu0 0
    %1261 = vmatpush1.bf16.msra.mxu0 0
    %1262 = vmatprep.subr.bf16.mxu0 0
    %1263 = vmatpush1.bf16.msra.mxu0 0
    %1264 = vmatprep.subr.bf16.mxu0 0
    %1265 = vmatpush1.bf16.msra.mxu0 0
    %1266 = vmatprep.subr.bf16.mxu0 0
    %1267 = vmatpush1.bf16.msra.mxu0 0
    %1268 = vmatprep.subr.bf16.mxu0 0
    %1269 = vmatpush1.bf16.msra.mxu0 0
    %1270 = vmatprep.subr.bf16.mxu0 0
    %1271 = vmatpush1.bf16.msra.mxu0 0
    %1272 = vmatprep.subr.bf16.mxu0 0
    %1273 = vmatpush1.bf16.msra.mxu0 0
    %1274 = vmatprep.subr.bf16.mxu0 0
    %1275 = vmatpush1.bf16.msra.mxu0 0
    %1276 = vmatprep.subr.bf16.mxu0 0
    %1277 = vmatpush1.bf16.msra.mxu0 0
    %1278 = vmatprep.subr.bf16.mxu0 0
    %1279 = vmatpush1.bf16.msra.mxu0 0
    %1280 = vmatprep.subr.bf16.mxu0 0
    %1281 = vmatpush1.bf16.msra.mxu0 0
    %1282 = vmatprep.subr.bf16.mxu0 0
    %1283 = vmatpush1.bf16.msra.mxu0 0
    %1284 = vmatprep.subr.bf16.mxu0 0
    %1285 = vmatpush1.bf16.msra.mxu0 0
    %1286 = vmatprep.subr.bf16.mxu0 0
    %1287 = vmatpush1.bf16.msra.mxu0 0
    %1288 = vmatprep.mubr.bf16.mxu0 0
    %1289 = vmatmul.mubr.bf16.gmra.mrb[0].mxu0 %v1254
    %v1290 = vpop.f32.mrb[0].mxu0
    %v1291 = vadd.f32 0.0, %v1290
    %v1292 = vpop.f32.mrb[0].mxu0
    %v1293 = vpop.f32.mrb[0].mxu0
    %v1294 = vpop.f32.mrb[0].mxu0
    %1295 = vdwg.mxu0
    %1296 = vmatprep.subr.bf16.mxu0 0
    %1297 = vmatpush1.bf16.msra.mxu0 %v628
    %1298 = vmatprep.subr.bf16.mxu0 0
    %1299 = vmatpush1.bf16.msra.mxu0 %v629
    %1300 = vmatprep.subr.bf16.mxu0 0
    %1301 = vmatpush1.bf16.msra.mxu0 0
    %1302 = vmatprep.subr.bf16.mxu0 0
    %1303 = vmatpush1.bf16.msra.mxu0 0
    %1304 = vmatprep.subr.bf16.mxu0 0
    %1305 = vmatpush1.bf16.msra.mxu0 0
    %1306 = vmatprep.subr.bf16.mxu0 0
    %1307 = vmatpush1.bf16.msra.mxu0 0
    %1308 = vmatprep.subr.bf16.mxu0 0
    %1309 = vmatpush1.bf16.msra.mxu0 0
    %1310 = vmatprep.subr.bf16.mxu0 0
    %1311 = vmatpush1.bf16.msra.mxu0 0
    %1312 = vmatprep.subr.bf16.mxu0 0
    %1313 = vmatpush1.bf16.msra.mxu0 0
    %1314 = vmatprep.subr.bf16.mxu0 0
    %1315 = vmatpush1.bf16.msra.mxu0 0
    %1316 = vmatprep.subr.bf16.mxu0 0
    %1317 = vmatpush1.bf16.msra.mxu0 0
    %1318 = vmatprep.subr.bf16.mxu0 0
    %1319 = vmatpush1.bf16.msra.mxu0 0
    %1320 = vmatprep.subr.bf16.mxu0 0
    %1321 = vmatpush1.bf16.msra.mxu0 0
    %1322 = vmatprep.subr.bf16.mxu0 0
    %1323 = vmatpush1.bf16.msra.mxu0 0
    %1324 = vmatprep.subr.bf16.mxu0 0
    %1325 = vmatpush1.bf16.msra.mxu0 0
    %1326 = vmatprep.subr.bf16.mxu0 0
    %1327 = vmatpush1.bf16.msra.mxu0 0
    %1328 = vmatprep.mubr.bf16.mxu0 0
    %1329 = vmatmul.mubr.bf16.gmra.mrb[0].mxu0 %v1254
    %v1330 = vpop.f32.mrb[0].mxu0
    %v1331 = vadd.f32 0.0, %v1330
    %v1332 = vpop.f32.mrb[0].mxu0
    %v1333 = vpop.f32.mrb[0].mxu0
    %v1334 = vpop.f32.mrb[0].mxu0
    %1335 = vdwg.mxu0
    %1336 = vmatprep.subr.bf16.mxu0 0
    %1337 = vmatpush1.bf16.msra.mxu0 %v686
    %1338 = vmatprep.subr.bf16.mxu0 0
    %1339 = vmatpush1.bf16.msra.mxu0 %v687
    %1340 = vmatprep.subr.bf16.mxu0 0
    %1341 = vmatpush1.bf16.msra.mxu0 0
    %1342 = vmatprep.subr.bf16.mxu0 0
    %1343 = vmatpush1.bf16.msra.mxu0 0
    %1344 = vmatprep.subr.bf16.mxu0 0
    %1345 = vmatpush1.bf16.msra.mxu0 0
    %1346 = vmatprep.subr.bf16.mxu0 0
    %1347 = vmatpush1.bf16.msra.mxu0 0
    %1348 = vmatprep.subr.bf16.mxu0 0
    %1349 = vmatpush1.bf16.msra.mxu0 0
    %1350 = vmatprep.subr.bf16.mxu0 0
    %1351 = vmatpush1.bf16.msra.mxu0 0
    %1352 = vmatprep.subr.bf16.mxu0 0
    %1353 = vmatpush1.bf16.msra.mxu0 0
    %1354 = vmatprep.subr.bf16.mxu0 0
    %1355 = vmatpush1.bf16.msra.mxu0 0
    %1356 = vmatprep.subr.bf16.mxu0 0
    %1357 = vmatpush1.bf16.msra.mxu0 0
    %1358 = vmatprep.subr.bf16.mxu0 0
    %1359 = vmatpush1.bf16.msra.mxu0 0
    %1360 = vmatprep.subr.bf16.mxu0 0
    %1361 = vmatpush1.bf16.msra.mxu0 0
    %1362 = vmatprep.subr.bf16.mxu0 0
    %1363 = vmatpush1.bf16.msra.mxu0 0
    %1364 = vmatprep.subr.bf16.mxu0 0
    %1365 = vmatpush1.bf16.msra.mxu0 0
    %1366 = vmatprep.subr.bf16.mxu0 0
    %1367 = vmatpush1.bf16.msra.mxu0 0
    %1368 = vmatprep.mubr.bf16.mxu0 0
    %1369 = vmatmul.mubr.bf16.gmra.mrb[0].mxu0 %v1254
    %v1370 = vpop.f32.mrb[0].mxu0
    %v1371 = vadd.f32 %v676, %v1370
    %v1372 = vpop.f32.mrb[0].mxu0
    %v1373 = vpop.f32.mrb[0].mxu0
    %v1374 = vpop.f32.mrb[0].mxu0
    %1375 = vdwg.mxu0
    %s1376 = scalar_lea.vmem [#allocation2], 4
    %v1377 = vld [vmem:[%s1376] sm:$0x3]
    %v1378 = vadd.f32 %v1377, %v1291
    %v1379 = vxor.u32 %v1378, 2147483648
    %v1380 = vmul.f32 %v1379, 1.442695
    %v1381 = vpow.pop %v1380
    %v1382 = vadd.f32 %v1381, 1.0
    %v1383 = vrcp.pop %v1382
    %v1384 = vmul.f32 1.0, %v1383
    %s1385 = scalar_lea.vmem [#allocation3], 4
    %v1386 = vld [vmem:[%s1385] sm:$0x3]
    %v1387 = vadd.f32 %v1386, %v1331
    %v1388 = vxor.u32 %v1387, 2147483648
    %v1389 = vmul.f32 %v1388, 1.442695
    %v1390 = vpow.pop %v1389
    %v1391 = vadd.f32 %v1390, 1.0
    %v1392 = vrcp.pop %v1391
    %v1393 = vmul.f32 1.0, %v1392
    %s1394 = scalar_lea.vmem [#allocation4], 4
    %v1395 = vld [vmem:[%s1394] sm:$0x3]
    %v1396 = vmul.f32 %v1384, %v1371
    %v1397 = vadd.f32 %v1395, %v1396
    %v1398 = vtanh.pop %v1397
    %v1399 = vsub.f32 1.0, %v1393
    %v1400 = vmul.f32 %v1399, %v1398
    %v1401 = vmul.f32 %v1393, %v1096
    %v1402 = vadd.f32 %v1400, %v1401
    %v1404 = vsel %vm147, %v1252, 0
    %1406 = vmatprep.subr.bf16.mxu0 0
    %1407 = vmatpush1.bf16.msra.mxu0 %v762
    %1408 = vmatprep.subr.bf16.mxu0 0
    %1409 = vmatpush1.bf16.msra.mxu0 %v763
    %1410 = vmatprep.subr.bf16.mxu0 0
    %1411 = vmatpush1.bf16.msra.mxu0 0
    %1412 = vmatprep.subr.bf16.mxu0 0
    %1413 = vmatpush1.bf16.msra.mxu0 0
    %1414 = vmatprep.subr.bf16.mxu0 0
    %1415 = vmatpush1.bf16.msra.mxu0 0
    %1416 = vmatprep.subr.bf16.mxu0 0
    %1417 = vmatpush1.bf16.msra.mxu0 0
    %1418 = vmatprep.subr.bf16.mxu0 0
    %1419 = vmatpush1.bf16.msra.mxu0 0
    %1420 = vmatprep.subr.bf16.mxu0 0
    %1421 = vmatpush1.bf16.msra.mxu0 0
    %1422 = vmatprep.subr.bf16.mxu0 0
    %1423 = vmatpush1.bf16.msra.mxu0 0
    %1424 = vmatprep.subr.bf16.mxu0 0
    %1425 = vmatpush1.bf16.msra.mxu0 0
    %1426 = vmatprep.subr.bf16.mxu0 0
    %1427 = vmatpush1.bf16.msra.mxu0 0
    %1428 = vmatprep.subr.bf16.mxu0 0
    %1429 = vmatpush1.bf16.msra.mxu0 0
    %1430 = vmatprep.subr.bf16.mxu0 0
    %1431 = vmatpush1.bf16.msra.mxu0 0
    %1432 = vmatprep.subr.bf16.mxu0 0
    %1433 = vmatpush1.bf16.msra.mxu0 0
    %1434 = vmatprep.subr.bf16.mxu0 0
    %1435 = vmatpush1.bf16.msra.mxu0 0
    %1436 = vmatprep.subr.bf16.mxu0 0
    %1437 = vmatpush1.bf16.msra.mxu0 0
    %1438 = vmatprep.mubr.bf16.mxu0 0
    %1439 = vmatmul.mubr.bf16.gmra.mrb[0].mxu0 %v1404
    %v1440 = vpop.f32.mrb[0].mxu0
    %v1441 = vadd.f32 0.0, %v1440
    %v1442 = vpop.f32.mrb[0].mxu0
    %v1443 = vpop.f32.mrb[0].mxu0
    %v1444 = vpop.f32.mrb[0].mxu0
    %1445 = vdwg.mxu0
    %1446 = vmatprep.subr.bf16.mxu0 0
    %1447 = vmatpush1.bf16.msra.mxu0 %v814
    %1448 = vmatprep.subr.bf16.mxu0 0
    %1449 = vmatpush1.bf16.msra.mxu0 %v815
    %1450 = vmatprep.subr.bf16.mxu0 0
    %1451 = vmatpush1.bf16.msra.mxu0 0
    %1452 = vmatprep.subr.bf16.mxu0 0
    %1453 = vmatpush1.bf16.msra.mxu0 0
    %1454 = vmatprep.subr.bf16.mxu0 0
    %1455 = vmatpush1.bf16.msra.mxu0 0
    %1456 = vmatprep.subr.bf16.mxu0 0
    %1457 = vmatpush1.bf16.msra.mxu0 0
    %1458 = vmatprep.subr.bf16.mxu0 0
    %1459 = vmatpush1.bf16.msra.mxu0 0
    %1460 = vmatprep.subr.bf16.mxu0 0
    %1461 = vmatpush1.bf16.msra.mxu0 0
    %1462 = vmatprep.subr.bf16.mxu0 0
    %1463 = vmatpush1.bf16.msra.mxu0 0
    %1464 = vmatprep.subr.bf16.mxu0 0
    %1465 = vmatpush1.bf16.msra.mxu0 0
    %1466 = vmatprep.subr.bf16.mxu0 0
    %1467 = vmatpush1.bf16.msra.mxu0 0
    %1468 = vmatprep.subr.bf16.mxu0 0
    %1469 = vmatpush1.bf16.msra.mxu0 0
    %1470 = vmatprep.subr.bf16.mxu0 0
    %1471 = vmatpush1.bf16.msra.mxu0 0
    %1472 = vmatprep.subr.bf16.mxu0 0
    %1473 = vmatpush1.bf16.msra.mxu0 0
    %1474 = vmatprep.subr.bf16.mxu0 0
    %1475 = vmatpush1.bf16.msra.mxu0 0
    %1476 = vmatprep.subr.bf16.mxu0 0
    %1477 = vmatpush1.bf16.msra.mxu0 0
    %1478 = vmatprep.mubr.bf16.mxu0 0
    %1479 = vmatmul.mubr.bf16.gmra.mrb[0].mxu0 %v1404
    %v1480 = vpop.f32.mrb[0].mxu0
    %v1481 = vadd.f32 0.0, %v1480
    %v1482 = vpop.f32.mrb[0].mxu0
    %v1483 = vpop.f32.mrb[0].mxu0
    %v1484 = vpop.f32.mrb[0].mxu0
    %1485 = vdwg.mxu0
    %1486 = vmatprep.subr.bf16.mxu0 0
    %1487 = vmatpush1.bf16.msra.mxu0 %v872
    %1488 = vmatprep.subr.bf16.mxu0 0
    %1489 = vmatpush1.bf16.msra.mxu0 %v873
    %1490 = vmatprep.subr.bf16.mxu0 0
    %1491 = vmatpush1.bf16.msra.mxu0 0
    %1492 = vmatprep.subr.bf16.mxu0 0
    %1493 = vmatpush1.bf16.msra.mxu0 0
    %1494 = vmatprep.subr.bf16.mxu0 0
    %1495 = vmatpush1.bf16.msra.mxu0 0
    %1496 = vmatprep.subr.bf16.mxu0 0
    %1497 = vmatpush1.bf16.msra.mxu0 0
    %1498 = vmatprep.subr.bf16.mxu0 0
    %1499 = vmatpush1.bf16.msra.mxu0 0
    %1500 = vmatprep.subr.bf16.mxu0 0
    %1501 = vmatpush1.bf16.msra.mxu0 0
    %1502 = vmatprep.subr.bf16.mxu0 0
    %1503 = vmatpush1.bf16.msra.mxu0 0
    %1504 = vmatprep.subr.bf16.mxu0 0
    %1505 = vmatpush1.bf16.msra.mxu0 0
    %1506 = vmatprep.subr.bf16.mxu0 0
    %1507 = vmatpush1.bf16.msra.mxu0 0
    %1508 = vmatprep.subr.bf16.mxu0 0
    %1509 = vmatpush1.bf16.msra.mxu0 0
    %1510 = vmatprep.subr.bf16.mxu0 0
    %1511 = vmatpush1.bf16.msra.mxu0 0
    %1512 = vmatprep.subr.bf16.mxu0 0
    %1513 = vmatpush1.bf16.msra.mxu0 0
    %1514 = vmatprep.subr.bf16.mxu0 0
    %1515 = vmatpush1.bf16.msra.mxu0 0
    %1516 = vmatprep.subr.bf16.mxu0 0
    %1517 = vmatpush1.bf16.msra.mxu0 0
    %1518 = vmatprep.mubr.bf16.mxu0 0
    %1519 = vmatmul.mubr.bf16.gmra.mrb[0].mxu0 %v1404
    %v1520 = vpop.f32.mrb[0].mxu0
    %v1521 = vadd.f32 %v862, %v1520
    %v1522 = vpop.f32.mrb[0].mxu0
    %v1523 = vpop.f32.mrb[0].mxu0
    %v1524 = vpop.f32.mrb[0].mxu0
    %1525 = vdwg.mxu0
    %s1526 = scalar_lea.vmem [#allocation5], 10
    %v1527 = vld [vmem:[%s1526] sm:$0x3]
    %v1528 = vadd.f32 %v1527, %v1441
    %v1529 = vxor.u32 %v1528, 2147483648
    %v1530 = vmul.f32 %v1529, 1.442695
    %v1531 = vpow.pop %v1530
    %v1532 = vadd.f32 %v1531, 1.0
    %v1533 = vrcp.pop %v1532
    %v1534 = vmul.f32 1.0, %v1533
    %s1535 = scalar_lea.vmem [#allocation6], 10
    %v1536 = vld [vmem:[%s1535] sm:$0x3]
    %v1537 = vadd.f32 %v1536, %v1481
    %v1538 = vxor.u32 %v1537, 2147483648
    %v1539 = vmul.f32 %v1538, 1.442695
    %v1540 = vpow.pop %v1539
    %v1541 = vadd.f32 %v1540, 1.0
    %v1542 = vrcp.pop %v1541
    %v1543 = vmul.f32 1.0, %v1542
    %s1544 = scalar_lea.vmem [#allocation7], 10
    %v1545 = vld [vmem:[%s1544] sm:$0x3]
    %v1546 = vmul.f32 %v1534, %v1521
    %v1547 = vadd.f32 %v1545, %v1546
    %v1548 = vtanh.pop %v1547
    %v1549 = vsub.f32 1.0, %v1543
    %v1550 = vmul.f32 %v1549, %v1548
    %v1551 = vmul.f32 %v1543, %v1246
    %v1552 = vadd.f32 %v1550, %v1551
    %s1553 = scalar_lea.vmem [#allocation8], 4
    %1554 = vst.msk [vmem:[%s1553] sm:$0x3] %vm238, %v1402
    %s1555 = scalar_lea.vmem [#allocation9], 4
    %1556 = vst.msk [vmem:[%s1555] sm:$0x3] %vm238, %v1552
    %v1557 = vpack.c.bf16 %v1402, %v1402
    %v1558 = vpack.c.bf16 %v1552, %v1552
    %v1560 = vsel %vm147, %v1557, 0
    %1562 = vmatprep.subr.bf16.mxu0 0
    %1563 = vmatpush1.bf16.msra.mxu0 %v573
    %1564 = vmatprep.subr.bf16.mxu0 0
    %1565 = vmatpush1.bf16.msra.mxu0 %v574
    %1566 = vmatprep.subr.bf16.mxu0 0
    %1567 = vmatpush1.bf16.msra.mxu0 0
    %1568 = vmatprep.subr.bf16.mxu0 0
    %1569 = vmatpush1.bf16.msra.mxu0 0
    %1570 = vmatprep.subr.bf16.mxu0 0
    %1571 = vmatpush1.bf16.msra.mxu0 0
    %1572 = vmatprep.subr.bf16.mxu0 0
    %1573 = vmatpush1.bf16.msra.mxu0 0
    %1574 = vmatprep.subr.bf16.mxu0 0
    %1575 = vmatpush1.bf16.msra.mxu0 0
    %1576 = vmatprep.subr.bf16.mxu0 0
    %1577 = vmatpush1.bf16.msra.mxu0 0
    %1578 = vmatprep.subr.bf16.mxu0 0
    %1579 = vmatpush1.bf16.msra.mxu0 0
    %1580 = vmatprep.subr.bf16.mxu0 0
    %1581 = vmatpush1.bf16.msra.mxu0 0
    %1582 = vmatprep.subr.bf16.mxu0 0
    %1583 = vmatpush1.bf16.msra.mxu0 0
    %1584 = vmatprep.subr.bf16.mxu0 0
    %1585 = vmatpush1.bf16.msra.mxu0 0
    %1586 = vmatprep.subr.bf16.mxu0 0
    %1587 = vmatpush1.bf16.msra.mxu0 0
    %1588 = vmatprep.subr.bf16.mxu0 0
    %1589 = vmatpush1.bf16.msra.mxu0 0
    %1590 = vmatprep.subr.bf16.mxu0 0
    %1591 = vmatpush1.bf16.msra.mxu0 0
    %1592 = vmatprep.subr.bf16.mxu0 0
    %1593 = vmatpush1.bf16.msra.mxu0 0
    %1594 = vmatprep.mubr.bf16.mxu0 0
    %1595 = vmatmul.mubr.bf16.gmra.mrb[0].mxu0 %v1560
    %v1596 = vpop.f32.mrb[0].mxu0
    %v1597 = vadd.f32 0.0, %v1596
    %v1598 = vpop.f32.mrb[0].mxu0
    %v1599 = vpop.f32.mrb[0].mxu0
    %v1600 = vpop.f32.mrb[0].mxu0
    %1601 = vdwg.mxu0
    %1602 = vmatprep.subr.bf16.mxu0 0
    %1603 = vmatpush1.bf16.msra.mxu0 %v628
    %1604 = vmatprep.subr.bf16.mxu0 0
    %1605 = vmatpush1.bf16.msra.mxu0 %v629
    %1606 = vmatprep.subr.bf16.mxu0 0
    %1607 = vmatpush1.bf16.msra.mxu0 0
    %1608 = vmatprep.subr.bf16.mxu0 0
    %1609 = vmatpush1.bf16.msra.mxu0 0
    %1610 = vmatprep.subr.bf16.mxu0 0
    %1611 = vmatpush1.bf16.msra.mxu0 0
    %1612 = vmatprep.subr.bf16.mxu0 0
    %1613 = vmatpush1.bf16.msra.mxu0 0
    %1614 = vmatprep.subr.bf16.mxu0 0
    %1615 = vmatpush1.bf16.msra.mxu0 0
    %1616 = vmatprep.subr.bf16.mxu0 0
    %1617 = vmatpush1.bf16.msra.mxu0 0
    %1618 = vmatprep.subr.bf16.mxu0 0
    %1619 = vmatpush1.bf16.msra.mxu0 0
    %1620 = vmatprep.subr.bf16.mxu0 0
    %1621 = vmatpush1.bf16.msra.mxu0 0
    %1622 = vmatprep.subr.bf16.mxu0 0
    %1623 = vmatpush1.bf16.msra.mxu0 0
    %1624 = vmatprep.subr.bf16.mxu0 0
    %1625 = vmatpush1.bf16.msra.mxu0 0
    %1626 = vmatprep.subr.bf16.mxu0 0
    %1627 = vmatpush1.bf16.msra.mxu0 0
    %1628 = vmatprep.subr.bf16.mxu0 0
    %1629 = vmatpush1.bf16.msra.mxu0 0
    %1630 = vmatprep.subr.bf16.mxu0 0
    %1631 = vmatpush1.bf16.msra.mxu0 0
    %1632 = vmatprep.subr.bf16.mxu0 0
    %1633 = vmatpush1.bf16.msra.mxu0 0
    %1634 = vmatprep.mubr.bf16.mxu0 0
    %1635 = vmatmul.mubr.bf16.gmra.mrb[0].mxu0 %v1560
    %v1636 = vpop.f32.mrb[0].mxu0
    %v1637 = vadd.f32 0.0, %v1636
    %v1638 = vpop.f32.mrb[0].mxu0
    %v1639 = vpop.f32.mrb[0].mxu0
    %v1640 = vpop.f32.mrb[0].mxu0
    %1641 = vdwg.mxu0
    %1642 = vmatprep.subr.bf16.mxu0 0
    %1643 = vmatpush1.bf16.msra.mxu0 %v686
    %1644 = vmatprep.subr.bf16.mxu0 0
    %1645 = vmatpush1.bf16.msra.mxu0 %v687
    %1646 = vmatprep.subr.bf16.mxu0 0
    %1647 = vmatpush1.bf16.msra.mxu0 0
    %1648 = vmatprep.subr.bf16.mxu0 0
    %1649 = vmatpush1.bf16.msra.mxu0 0
    %1650 = vmatprep.subr.bf16.mxu0 0
    %1651 = vmatpush1.bf16.msra.mxu0 0
    %1652 = vmatprep.subr.bf16.mxu0 0
    %1653 = vmatpush1.bf16.msra.mxu0 0
    %1654 = vmatprep.subr.bf16.mxu0 0
    %1655 = vmatpush1.bf16.msra.mxu0 0
    %1656 = vmatprep.subr.bf16.mxu0 0
    %1657 = vmatpush1.bf16.msra.mxu0 0
    %1658 = vmatprep.subr.bf16.mxu0 0
    %1659 = vmatpush1.bf16.msra.mxu0 0
    %1660 = vmatprep.subr.bf16.mxu0 0
    %1661 = vmatpush1.bf16.msra.mxu0 0
    %1662 = vmatprep.subr.bf16.mxu0 0
    %1663 = vmatpush1.bf16.msra.mxu0 0
    %1664 = vmatprep.subr.bf16.mxu0 0
    %1665 = vmatpush1.bf16.msra.mxu0 0
    %1666 = vmatprep.subr.bf16.mxu0 0
    %1667 = vmatpush1.bf16.msra.mxu0 0
    %1668 = vmatprep.subr.bf16.mxu0 0
    %1669 = vmatpush1.bf16.msra.mxu0 0
    %1670 = vmatprep.subr.bf16.mxu0 0
    %1671 = vmatpush1.bf16.msra.mxu0 0
    %1672 = vmatprep.subr.bf16.mxu0 0
    %1673 = vmatpush1.bf16.msra.mxu0 0
    %1674 = vmatprep.mubr.bf16.mxu0 0
    %1675 = vmatmul.mubr.bf16.gmra.mrb[0].mxu0 %v1560
    %v1676 = vpop.f32.mrb[0].mxu0
    %v1677 = vadd.f32 %v676, %v1676
    %v1678 = vpop.f32.mrb[0].mxu0
    %v1679 = vpop.f32.mrb[0].mxu0
    %v1680 = vpop.f32.mrb[0].mxu0
    %1681 = vdwg.mxu0
    %s1682 = scalar_lea.vmem [#allocation2], 6
    %v1683 = vld [vmem:[%s1682] sm:$0x3]
    %v1684 = vadd.f32 %v1683, %v1597
    %v1685 = vxor.u32 %v1684, 2147483648
    %v1686 = vmul.f32 %v1685, 1.442695
    %v1687 = vpow.pop %v1686
    %v1688 = vadd.f32 %v1687, 1.0
    %v1689 = vrcp.pop %v1688
    %v1690 = vmul.f32 1.0, %v1689
    %s1691 = scalar_lea.vmem [#allocation3], 6
    %v1692 = vld [vmem:[%s1691] sm:$0x3]
    %v1693 = vadd.f32 %v1692, %v1637
    %v1694 = vxor.u32 %v1693, 2147483648
    %v1695 = vmul.f32 %v1694, 1.442695
    %v1696 = vpow.pop %v1695
    %v1697 = vadd.f32 %v1696, 1.0
    %v1698 = vrcp.pop %v1697
    %v1699 = vmul.f32 1.0, %v1698
    %s1700 = scalar_lea.vmem [#allocation4], 6
    %v1701 = vld [vmem:[%s1700] sm:$0x3]
    %v1702 = vmul.f32 %v1690, %v1677
    %v1703 = vadd.f32 %v1701, %v1702
    %v1704 = vtanh.pop %v1703
    %v1705 = vsub.f32 1.0, %v1699
    %v1706 = vmul.f32 %v1705, %v1704
    %v1707 = vmul.f32 %v1699, %v1402
    %v1708 = vadd.f32 %v1706, %v1707
    %v1710 = vsel %vm147, %v1558, 0
    %1712 = vmatprep.subr.bf16.mxu0 0
    %1713 = vmatpush1.bf16.msra.mxu0 %v762
    %1714 = vmatprep.subr.bf16.mxu0 0
    %1715 = vmatpush1.bf16.msra.mxu0 %v763
    %1716 = vmatprep.subr.bf16.mxu0 0
    %1717 = vmatpush1.bf16.msra.mxu0 0
    %1718 = vmatprep.subr.bf16.mxu0 0
    %1719 = vmatpush1.bf16.msra.mxu0 0
    %1720 = vmatprep.subr.bf16.mxu0 0
    %1721 = vmatpush1.bf16.msra.mxu0 0
    %1722 = vmatprep.subr.bf16.mxu0 0
    %1723 = vmatpush1.bf16.msra.mxu0 0
    %1724 = vmatprep.subr.bf16.mxu0 0
    %1725 = vmatpush1.bf16.msra.mxu0 0
    %1726 = vmatprep.subr.bf16.mxu0 0
    %1727 = vmatpush1.bf16.msra.mxu0 0
    %1728 = vmatprep.subr.bf16.mxu0 0
    %1729 = vmatpush1.bf16.msra.mxu0 0
    %1730 = vmatprep.subr.bf16.mxu0 0
    %1731 = vmatpush1.bf16.msra.mxu0 0
    %1732 = vmatprep.subr.bf16.mxu0 0
    %1733 = vmatpush1.bf16.msra.mxu0 0
    %1734 = vmatprep.subr.bf16.mxu0 0
    %1735 = vmatpush1.bf16.msra.mxu0 0
    %1736 = vmatprep.subr.bf16.mxu0 0
    %1737 = vmatpush1.bf16.msra.mxu0 0
    %1738 = vmatprep.subr.bf16.mxu0 0
    %1739 = vmatpush1.bf16.msra.mxu0 0
    %1740 = vmatprep.subr.bf16.mxu0 0
    %1741 = vmatpush1.bf16.msra.mxu0 0
    %1742 = vmatprep.subr.bf16.mxu0 0
    %1743 = vmatpush1.bf16.msra.mxu0 0
    %1744 = vmatprep.mubr.bf16.mxu0 0
    %1745 = vmatmul.mubr.bf16.gmra.mrb[0].mxu0 %v1710
    %v1746 = vpop.f32.mrb[0].mxu0
    %v1747 = vadd.f32 0.0, %v1746
    %v1748 = vpop.f32.mrb[0].mxu0
    %v1749 = vpop.f32.mrb[0].mxu0
    %v1750 = vpop.f32.mrb[0].mxu0
    %1751 = vdwg.mxu0
    %1752 = vmatprep.subr.bf16.mxu0 0
    %1753 = vmatpush1.bf16.msra.mxu0 %v814
    %1754 = vmatprep.subr.bf16.mxu0 0
    %1755 = vmatpush1.bf16.msra.mxu0 %v815
    %1756 = vmatprep.subr.bf16.mxu0 0
    %1757 = vmatpush1.bf16.msra.mxu0 0
    %1758 = vmatprep.subr.bf16.mxu0 0
    %1759 = vmatpush1.bf16.msra.mxu0 0
    %1760 = vmatprep.subr.bf16.mxu0 0
    %1761 = vmatpush1.bf16.msra.mxu0 0
    %1762 = vmatprep.subr.bf16.mxu0 0
    %1763 = vmatpush1.bf16.msra.mxu0 0
    %1764 = vmatprep.subr.bf16.mxu0 0
    %1765 = vmatpush1.bf16.msra.mxu0 0
    %1766 = vmatprep.subr.bf16.mxu0 0
    %1767 = vmatpush1.bf16.msra.mxu0 0
    %1768 = vmatprep.subr.bf16.mxu0 0
    %1769 = vmatpush1.bf16.msra.mxu0 0
    %1770 = vmatprep.subr.bf16.mxu0 0
    %1771 = vmatpush1.bf16.msra.mxu0 0
    %1772 = vmatprep.subr.bf16.mxu0 0
    %1773 = vmatpush1.bf16.msra.mxu0 0
    %1774 = vmatprep.subr.bf16.mxu0 0
    %1775 = vmatpush1.bf16.msra.mxu0 0
    %1776 = vmatprep.subr.bf16.mxu0 0
    %1777 = vmatpush1.bf16.msra.mxu0 0
    %1778 = vmatprep.subr.bf16.mxu0 0
    %1779 = vmatpush1.bf16.msra.mxu0 0
    %1780 = vmatprep.subr.bf16.mxu0 0
    %1781 = vmatpush1.bf16.msra.mxu0 0
    %1782 = vmatprep.subr.bf16.mxu0 0
    %1783 = vmatpush1.bf16.msra.mxu0 0
    %1784 = vmatprep.mubr.bf16.mxu0 0
    %1785 = vmatmul.mubr.bf16.gmra.mrb[0].mxu0 %v1710
    %v1786 = vpop.f32.mrb[0].mxu0
    %v1787 = vadd.f32 0.0, %v1786
    %v1788 = vpop.f32.mrb[0].mxu0
    %v1789 = vpop.f32.mrb[0].mxu0
    %v1790 = vpop.f32.mrb[0].mxu0
    %1791 = vdwg.mxu0
    %1792 = vmatprep.subr.bf16.mxu0 0
    %1793 = vmatpush1.bf16.msra.mxu0 %v872
    %1794 = vmatprep.subr.bf16.mxu0 0
    %1795 = vmatpush1.bf16.msra.mxu0 %v873
    %1796 = vmatprep.subr.bf16.mxu0 0
    %1797 = vmatpush1.bf16.msra.mxu0 0
    %1798 = vmatprep.subr.bf16.mxu0 0
    %1799 = vmatpush1.bf16.msra.mxu0 0
    %1800 = vmatprep.subr.bf16.mxu0 0
    %1801 = vmatpush1.bf16.msra.mxu0 0
    %1802 = vmatprep.subr.bf16.mxu0 0
    %1803 = vmatpush1.bf16.msra.mxu0 0
    %1804 = vmatprep.subr.bf16.mxu0 0
    %1805 = vmatpush1.bf16.msra.mxu0 0
    %1806 = vmatprep.subr.bf16.mxu0 0
    %1807 = vmatpush1.bf16.msra.mxu0 0
    %1808 = vmatprep.subr.bf16.mxu0 0
    %1809 = vmatpush1.bf16.msra.mxu0 0
    %1810 = vmatprep.subr.bf16.mxu0 0
    %1811 = vmatpush1.bf16.msra.mxu0 0
    %1812 = vmatprep.subr.bf16.mxu0 0
    %1813 = vmatpush1.bf16.msra.mxu0 0
    %1814 = vmatprep.subr.bf16.mxu0 0
    %1815 = vmatpush1.bf16.msra.mxu0 0
    %1816 = vmatprep.subr.bf16.mxu0 0
    %1817 = vmatpush1.bf16.msra.mxu0 0
    %1818 = vmatprep.subr.bf16.mxu0 0
    %1819 = vmatpush1.bf16.msra.mxu0 0
    %1820 = vmatprep.subr.bf16.mxu0 0
    %1821 = vmatpush1.bf16.msra.mxu0 0
    %1822 = vmatprep.subr.bf16.mxu0 0
    %1823 = vmatpush1.bf16.msra.mxu0 0
    %1824 = vmatprep.mubr.bf16.mxu0 0
    %1825 = vmatmul.mubr.bf16.gmra.mrb[0].mxu0 %v1710
    %v1826 = vpop.f32.mrb[0].mxu0
    %v1827 = vadd.f32 %v862, %v1826
    %v1828 = vpop.f32.mrb[0].mxu0
    %v1829 = vpop.f32.mrb[0].mxu0
    %v1830 = vpop.f32.mrb[0].mxu0
    %1831 = vdwg.mxu0
    %s1832 = scalar_lea.vmem [#allocation5], 8
    %v1833 = vld [vmem:[%s1832] sm:$0x3]
    %v1834 = vadd.f32 %v1833, %v1747
    %v1835 = vxor.u32 %v1834, 2147483648
    %v1836 = vmul.f32 %v1835, 1.442695
    %v1837 = vpow.pop %v1836
    %v1838 = vadd.f32 %v1837, 1.0
    %v1839 = vrcp.pop %v1838
    %v1840 = vmul.f32 1.0, %v1839
    %s1841 = scalar_lea.vmem [#allocation6], 8
    %v1842 = vld [vmem:[%s1841] sm:$0x3]
    %v1843 = vadd.f32 %v1842, %v1787
    %v1844 = vxor.u32 %v1843, 2147483648
    %v1845 = vmul.f32 %v1844, 1.442695
    %v1846 = vpow.pop %v1845
    %v1847 = vadd.f32 %v1846, 1.0
    %v1848 = vrcp.pop %v1847
    %v1849 = vmul.f32 1.0, %v1848
    %s1850 = scalar_lea.vmem [#allocation7], 8
    %v1851 = vld [vmem:[%s1850] sm:$0x3]
    %v1852 = vmul.f32 %v1840, %v1827
    %v1853 = vadd.f32 %v1851, %v1852
    %v1854 = vtanh.pop %v1853
    %v1855 = vsub.f32 1.0, %v1849
    %v1856 = vmul.f32 %v1855, %v1854
    %v1857 = vmul.f32 %v1849, %v1552
    %v1858 = vadd.f32 %v1856, %v1857
    %s1859 = scalar_lea.vmem [#allocation8], 6
    %1860 = vst.msk [vmem:[%s1859] sm:$0x3] %vm238, %v1708
    %s1861 = scalar_lea.vmem [#allocation9], 6
    %1862 = vst.msk [vmem:[%s1861] sm:$0x3] %vm238, %v1858
    %v1863 = vpack.c.bf16 %v1708, %v1708
    %v1864 = vpack.c.bf16 %v1858, %v1858
    %v1866 = vsel %vm147, %v1863, 0
    %1868 = vmatprep.subr.bf16.mxu0 0
    %1869 = vmatpush1.bf16.msra.mxu0 %v573
    %1870 = vmatprep.subr.bf16.mxu0 0
    %1871 = vmatpush1.bf16.msra.mxu0 %v574
    %1872 = vmatprep.subr.bf16.mxu0 0
    %1873 = vmatpush1.bf16.msra.mxu0 0
    %1874 = vmatprep.subr.bf16.mxu0 0
    %1875 = vmatpush1.bf16.msra.mxu0 0
    %1876 = vmatprep.subr.bf16.mxu0 0
    %1877 = vmatpush1.bf16.msra.mxu0 0
    %1878 = vmatprep.subr.bf16.mxu0 0
    %1879 = vmatpush1.bf16.msra.mxu0 0
    %1880 = vmatprep.subr.bf16.mxu0 0
    %1881 = vmatpush1.bf16.msra.mxu0 0
    %1882 = vmatprep.subr.bf16.mxu0 0
    %1883 = vmatpush1.bf16.msra.mxu0 0
    %1884 = vmatprep.subr.bf16.mxu0 0
    %1885 = vmatpush1.bf16.msra.mxu0 0
    %1886 = vmatprep.subr.bf16.mxu0 0
    %1887 = vmatpush1.bf16.msra.mxu0 0
    %1888 = vmatprep.subr.bf16.mxu0 0
    %1889 = vmatpush1.bf16.msra.mxu0 0
    %1890 = vmatprep.subr.bf16.mxu0 0
    %1891 = vmatpush1.bf16.msra.mxu0 0
    %1892 = vmatprep.subr.bf16.mxu0 0
    %1893 = vmatpush1.bf16.msra.mxu0 0
    %1894 = vmatprep.subr.bf16.mxu0 0
    %1895 = vmatpush1.bf16.msra.mxu0 0
    %1896 = vmatprep.subr.bf16.mxu0 0
    %1897 = vmatpush1.bf16.msra.mxu0 0
    %1898 = vmatprep.subr.bf16.mxu0 0
    %1899 = vmatpush1.bf16.msra.mxu0 0
    %1900 = vmatprep.mubr.bf16.mxu0 0
    %1901 = vmatmul.mubr.bf16.gmra.mrb[0].mxu0 %v1866
    %v1902 = vpop.f32.mrb[0].mxu0
    %v1903 = vadd.f32 0.0, %v1902
    %v1904 = vpop.f32.mrb[0].mxu0
    %v1905 = vpop.f32.mrb[0].mxu0
    %v1906 = vpop.f32.mrb[0].mxu0
    %1907 = vdwg.mxu0
    %1908 = vmatprep.subr.bf16.mxu0 0
    %1909 = vmatpush1.bf16.msra.mxu0 %v628
    %1910 = vmatprep.subr.bf16.mxu0 0
    %1911 = vmatpush1.bf16.msra.mxu0 %v629
    %1912 = vmatprep.subr.bf16.mxu0 0
    %1913 = vmatpush1.bf16.msra.mxu0 0
    %1914 = vmatprep.subr.bf16.mxu0 0
    %1915 = vmatpush1.bf16.msra.mxu0 0
    %1916 = vmatprep.subr.bf16.mxu0 0
    %1917 = vmatpush1.bf16.msra.mxu0 0
    %1918 = vmatprep.subr.bf16.mxu0 0
    %1919 = vmatpush1.bf16.msra.mxu0 0
    %1920 = vmatprep.subr.bf16.mxu0 0
    %1921 = vmatpush1.bf16.msra.mxu0 0
    %1922 = vmatprep.subr.bf16.mxu0 0
    %1923 = vmatpush1.bf16.msra.mxu0 0
    %1924 = vmatprep.subr.bf16.mxu0 0
    %1925 = vmatpush1.bf16.msra.mxu0 0
    %1926 = vmatprep.subr.bf16.mxu0 0
    %1927 = vmatpush1.bf16.msra.mxu0 0
    %1928 = vmatprep.subr.bf16.mxu0 0
    %1929 = vmatpush1.bf16.msra.mxu0 0
    %1930 = vmatprep.subr.bf16.mxu0 0
    %1931 = vmatpush1.bf16.msra.mxu0 0
    %1932 = vmatprep.subr.bf16.mxu0 0
    %1933 = vmatpush1.bf16.msra.mxu0 0
    %1934 = vmatprep.subr.bf16.mxu0 0
    %1935 = vmatpush1.bf16.msra.mxu0 0
    %1936 = vmatprep.subr.bf16.mxu0 0
    %1937 = vmatpush1.bf16.msra.mxu0 0
    %1938 = vmatprep.subr.bf16.mxu0 0
    %1939 = vmatpush1.bf16.msra.mxu0 0
    %1940 = vmatprep.mubr.bf16.mxu0 0
    %1941 = vmatmul.mubr.bf16.gmra.mrb[0].mxu0 %v1866
    %v1942 = vpop.f32.mrb[0].mxu0
    %v1943 = vadd.f32 0.0, %v1942
    %v1944 = vpop.f32.mrb[0].mxu0
    %v1945 = vpop.f32.mrb[0].mxu0
    %v1946 = vpop.f32.mrb[0].mxu0
    %1947 = vdwg.mxu0
    %1948 = vmatprep.subr.bf16.mxu0 0
    %1949 = vmatpush1.bf16.msra.mxu0 %v686
    %1950 = vmatprep.subr.bf16.mxu0 0
    %1951 = vmatpush1.bf16.msra.mxu0 %v687
    %1952 = vmatprep.subr.bf16.mxu0 0
    %1953 = vmatpush1.bf16.msra.mxu0 0
    %1954 = vmatprep.subr.bf16.mxu0 0
    %1955 = vmatpush1.bf16.msra.mxu0 0
    %1956 = vmatprep.subr.bf16.mxu0 0
    %1957 = vmatpush1.bf16.msra.mxu0 0
    %1958 = vmatprep.subr.bf16.mxu0 0
    %1959 = vmatpush1.bf16.msra.mxu0 0
    %1960 = vmatprep.subr.bf16.mxu0 0
    %1961 = vmatpush1.bf16.msra.mxu0 0
    %1962 = vmatprep.subr.bf16.mxu0 0
    %1963 = vmatpush1.bf16.msra.mxu0 0
    %1964 = vmatprep.subr.bf16.mxu0 0
    %1965 = vmatpush1.bf16.msra.mxu0 0
    %1966 = vmatprep.subr.bf16.mxu0 0
    %1967 = vmatpush1.bf16.msra.mxu0 0
    %1968 = vmatprep.subr.bf16.mxu0 0
    %1969 = vmatpush1.bf16.msra.mxu0 0
    %1970 = vmatprep.subr.bf16.mxu0 0
    %1971 = vmatpush1.bf16.msra.mxu0 0
    %1972 = vmatprep.subr.bf16.mxu0 0
    %1973 = vmatpush1.bf16.msra.mxu0 0
    %1974 = vmatprep.subr.bf16.mxu0 0
    %1975 = vmatpush1.bf16.msra.mxu0 0
    %1976 = vmatprep.subr.bf16.mxu0 0
    %1977 = vmatpush1.bf16.msra.mxu0 0
    %1978 = vmatprep.subr.bf16.mxu0 0
    %1979 = vmatpush1.bf16.msra.mxu0 0
    %1980 = vmatprep.mubr.bf16.mxu0 0
    %1981 = vmatmul.mubr.bf16.gmra.mrb[0].mxu0 %v1866
    %v1982 = vpop.f32.mrb[0].mxu0
    %v1983 = vadd.f32 %v676, %v1982
    %v1984 = vpop.f32.mrb[0].mxu0
    %v1985 = vpop.f32.mrb[0].mxu0
    %v1986 = vpop.f32.mrb[0].mxu0
    %1987 = vdwg.mxu0
    %s1988 = scalar_lea.vmem [#allocation2], 8
    %v1989 = vld [vmem:[%s1988] sm:$0x3]
    %v1990 = vadd.f32 %v1989, %v1903
    %v1991 = vxor.u32 %v1990, 2147483648
    %v1992 = vmul.f32 %v1991, 1.442695
    %v1993 = vpow.pop %v1992
    %v1994 = vadd.f32 %v1993, 1.0
    %v1995 = vrcp.pop %v1994
    %v1996 = vmul.f32 1.0, %v1995
    %s1997 = scalar_lea.vmem [#allocation3], 8
    %v1998 = vld [vmem:[%s1997] sm:$0x3]
    %v1999 = vadd.f32 %v1998, %v1943
    %v2000 = vxor.u32 %v1999, 2147483648
    %v2001 = vmul.f32 %v2000, 1.442695
    %v2002 = vpow.pop %v2001
    %v2003 = vadd.f32 %v2002, 1.0
    %v2004 = vrcp.pop %v2003
    %v2005 = vmul.f32 1.0, %v2004
    %s2006 = scalar_lea.vmem [#allocation4], 8
    %v2007 = vld [vmem:[%s2006] sm:$0x3]
    %v2008 = vmul.f32 %v1996, %v1983
    %v2009 = vadd.f32 %v2007, %v2008
    %v2010 = vtanh.pop %v2009
    %v2011 = vsub.f32 1.0, %v2005
    %v2012 = vmul.f32 %v2011, %v2010
    %v2013 = vmul.f32 %v2005, %v1708
    %v2014 = vadd.f32 %v2012, %v2013
    %v2016 = vsel %vm147, %v1864, 0
    %2018 = vmatprep.subr.bf16.mxu0 0
    %2019 = vmatpush1.bf16.msra.mxu0 %v762
    %2020 = vmatprep.subr.bf16.mxu0 0
    %2021 = vmatpush1.bf16.msra.mxu0 %v763
    %2022 = vmatprep.subr.bf16.mxu0 0
    %2023 = vmatpush1.bf16.msra.mxu0 0
    %2024 = vmatprep.subr.bf16.mxu0 0
    %2025 = vmatpush1.bf16.msra.mxu0 0
    %2026 = vmatprep.subr.bf16.mxu0 0
    %2027 = vmatpush1.bf16.msra.mxu0 0
    %2028 = vmatprep.subr.bf16.mxu0 0
    %2029 = vmatpush1.bf16.msra.mxu0 0
    %2030 = vmatprep.subr.bf16.mxu0 0
    %2031 = vmatpush1.bf16.msra.mxu0 0
    %2032 = vmatprep.subr.bf16.mxu0 0
    %2033 = vmatpush1.bf16.msra.mxu0 0
    %2034 = vmatprep.subr.bf16.mxu0 0
    %2035 = vmatpush1.bf16.msra.mxu0 0
    %2036 = vmatprep.subr.bf16.mxu0 0
    %2037 = vmatpush1.bf16.msra.mxu0 0
    %2038 = vmatprep.subr.bf16.mxu0 0
    %2039 = vmatpush1.bf16.msra.mxu0 0
    %2040 = vmatprep.subr.bf16.mxu0 0
    %2041 = vmatpush1.bf16.msra.mxu0 0
    %2042 = vmatprep.subr.bf16.mxu0 0
    %2043 = vmatpush1.bf16.msra.mxu0 0
    %2044 = vmatprep.subr.bf16.mxu0 0
    %2045 = vmatpush1.bf16.msra.mxu0 0
    %2046 = vmatprep.subr.bf16.mxu0 0
    %2047 = vmatpush1.bf16.msra.mxu0 0
    %2048 = vmatprep.subr.bf16.mxu0 0
    %2049 = vmatpush1.bf16.msra.mxu0 0
    %2050 = vmatprep.mubr.bf16.mxu0 0
    %2051 = vmatmul.mubr.bf16.gmra.mrb[0].mxu0 %v2016
    %v2052 = vpop.f32.mrb[0].mxu0
    %v2053 = vadd.f32 0.0, %v2052
    %v2054 = vpop.f32.mrb[0].mxu0
    %v2055 = vpop.f32.mrb[0].mxu0
    %v2056 = vpop.f32.mrb[0].mxu0
    %2057 = vdwg.mxu0
    %2058 = vmatprep.subr.bf16.mxu0 0
    %2059 = vmatpush1.bf16.msra.mxu0 %v814
    %2060 = vmatprep.subr.bf16.mxu0 0
    %2061 = vmatpush1.bf16.msra.mxu0 %v815
    %2062 = vmatprep.subr.bf16.mxu0 0
    %2063 = vmatpush1.bf16.msra.mxu0 0
    %2064 = vmatprep.subr.bf16.mxu0 0
    %2065 = vmatpush1.bf16.msra.mxu0 0
    %2066 = vmatprep.subr.bf16.mxu0 0
    %2067 = vmatpush1.bf16.msra.mxu0 0
    %2068 = vmatprep.subr.bf16.mxu0 0
    %2069 = vmatpush1.bf16.msra.mxu0 0
    %2070 = vmatprep.subr.bf16.mxu0 0
    %2071 = vmatpush1.bf16.msra.mxu0 0
    %2072 = vmatprep.subr.bf16.mxu0 0
    %2073 = vmatpush1.bf16.msra.mxu0 0
    %2074 = vmatprep.subr.bf16.mxu0 0
    %2075 = vmatpush1.bf16.msra.mxu0 0
    %2076 = vmatprep.subr.bf16.mxu0 0
    %2077 = vmatpush1.bf16.msra.mxu0 0
    %2078 = vmatprep.subr.bf16.mxu0 0
    %2079 = vmatpush1.bf16.msra.mxu0 0
    %2080 = vmatprep.subr.bf16.mxu0 0
    %2081 = vmatpush1.bf16.msra.mxu0 0
    %2082 = vmatprep.subr.bf16.mxu0 0
    %2083 = vmatpush1.bf16.msra.mxu0 0
    %2084 = vmatprep.subr.bf16.mxu0 0
    %2085 = vmatpush1.bf16.msra.mxu0 0
    %2086 = vmatprep.subr.bf16.mxu0 0
    %2087 = vmatpush1.bf16.msra.mxu0 0
    %2088 = vmatprep.subr.bf16.mxu0 0
    %2089 = vmatpush1.bf16.msra.mxu0 0
    %2090 = vmatprep.mubr.bf16.mxu0 0
    %2091 = vmatmul.mubr.bf16.gmra.mrb[0].mxu0 %v2016
    %v2092 = vpop.f32.mrb[0].mxu0
    %v2093 = vadd.f32 0.0, %v2092
    %v2094 = vpop.f32.mrb[0].mxu0
    %v2095 = vpop.f32.mrb[0].mxu0
    %v2096 = vpop.f32.mrb[0].mxu0
    %2097 = vdwg.mxu0
    %2098 = vmatprep.subr.bf16.mxu0 0
    %2099 = vmatpush1.bf16.msra.mxu0 %v872
    %2100 = vmatprep.subr.bf16.mxu0 0
    %2101 = vmatpush1.bf16.msra.mxu0 %v873
    %2102 = vmatprep.subr.bf16.mxu0 0
    %2103 = vmatpush1.bf16.msra.mxu0 0
    %2104 = vmatprep.subr.bf16.mxu0 0
    %2105 = vmatpush1.bf16.msra.mxu0 0
    %2106 = vmatprep.subr.bf16.mxu0 0
    %2107 = vmatpush1.bf16.msra.mxu0 0
    %2108 = vmatprep.subr.bf16.mxu0 0
    %2109 = vmatpush1.bf16.msra.mxu0 0
    %2110 = vmatprep.subr.bf16.mxu0 0
    %2111 = vmatpush1.bf16.msra.mxu0 0
    %2112 = vmatprep.subr.bf16.mxu0 0
    %2113 = vmatpush1.bf16.msra.mxu0 0
    %2114 = vmatprep.subr.bf16.mxu0 0
    %2115 = vmatpush1.bf16.msra.mxu0 0
    %2116 = vmatprep.subr.bf16.mxu0 0
    %2117 = vmatpush1.bf16.msra.mxu0 0
    %2118 = vmatprep.subr.bf16.mxu0 0
    %2119 = vmatpush1.bf16.msra.mxu0 0
    %2120 = vmatprep.subr.bf16.mxu0 0
    %2121 = vmatpush1.bf16.msra.mxu0 0
    %2122 = vmatprep.subr.bf16.mxu0 0
    %2123 = vmatpush1.bf16.msra.mxu0 0
    %2124 = vmatprep.subr.bf16.mxu0 0
    %2125 = vmatpush1.bf16.msra.mxu0 0
    %2126 = vmatprep.subr.bf16.mxu0 0
    %2127 = vmatpush1.bf16.msra.mxu0 0
    %2128 = vmatprep.subr.bf16.mxu0 0
    %2129 = vmatpush1.bf16.msra.mxu0 0
    %2130 = vmatprep.mubr.bf16.mxu0 0
    %2131 = vmatmul.mubr.bf16.gmra.mrb[0].mxu0 %v2016
    %v2132 = vpop.f32.mrb[0].mxu0
    %v2133 = vadd.f32 %v862, %v2132
    %v2134 = vpop.f32.mrb[0].mxu0
    %v2135 = vpop.f32.mrb[0].mxu0
    %v2136 = vpop.f32.mrb[0].mxu0
    %2137 = vdwg.mxu0
    %s2138 = scalar_lea.vmem [#allocation5], 6
    %v2139 = vld [vmem:[%s2138] sm:$0x3]
    %v2140 = vadd.f32 %v2139, %v2053
    %v2141 = vxor.u32 %v2140, 2147483648
    %v2142 = vmul.f32 %v2141, 1.442695
    %v2143 = vpow.pop %v2142
    %v2144 = vadd.f32 %v2143, 1.0
    %v2145 = vrcp.pop %v2144
    %v2146 = vmul.f32 1.0, %v2145
    %s2147 = scalar_lea.vmem [#allocation6], 6
    %v2148 = vld [vmem:[%s2147] sm:$0x3]
    %v2149 = vadd.f32 %v2148, %v2093
    %v2150 = vxor.u32 %v2149, 2147483648
    %v2151 = vmul.f32 %v2150, 1.442695
    %v2152 = vpow.pop %v2151
    %v2153 = vadd.f32 %v2152, 1.0
    %v2154 = vrcp.pop %v2153
    %v2155 = vmul.f32 1.0, %v2154
    %s2156 = scalar_lea.vmem [#allocation7], 6
    %v2157 = vld [vmem:[%s2156] sm:$0x3]
    %v2158 = vmul.f32 %v2146, %v2133
    %v2159 = vadd.f32 %v2157, %v2158
    %v2160 = vtanh.pop %v2159
    %v2161 = vsub.f32 1.0, %v2155
    %v2162 = vmul.f32 %v2161, %v2160
    %v2163 = vmul.f32 %v2155, %v1858
    %v2164 = vadd.f32 %v2162, %v2163
    %s2165 = scalar_lea.vmem [#allocation8], 8
    %2166 = vst.msk [vmem:[%s2165] sm:$0x3] %vm238, %v2014
    %s2167 = scalar_lea.vmem [#allocation9], 8
    %2168 = vst.msk [vmem:[%s2167] sm:$0x3] %vm238, %v2164
    %v2169 = vpack.c.bf16 %v2014, %v2014
    %v2170 = vpack.c.bf16 %v2164, %v2164
    %v2172 = vsel %vm147, %v2169, 0
    %2174 = vmatprep.subr.bf16.mxu0 0
    %2175 = vmatpush1.bf16.msra.mxu0 %v573
    %2176 = vmatprep.subr.bf16.mxu0 0
    %2177 = vmatpush1.bf16.msra.mxu0 %v574
    %2178 = vmatprep.subr.bf16.mxu0 0
    %2179 = vmatpush1.bf16.msra.mxu0 0
    %2180 = vmatprep.subr.bf16.mxu0 0
    %2181 = vmatpush1.bf16.msra.mxu0 0
    %2182 = vmatprep.subr.bf16.mxu0 0
    %2183 = vmatpush1.bf16.msra.mxu0 0
    %2184 = vmatprep.subr.bf16.mxu0 0
    %2185 = vmatpush1.bf16.msra.mxu0 0
    %2186 = vmatprep.subr.bf16.mxu0 0
    %2187 = vmatpush1.bf16.msra.mxu0 0
    %2188 = vmatprep.subr.bf16.mxu0 0
    %2189 = vmatpush1.bf16.msra.mxu0 0
    %2190 = vmatprep.subr.bf16.mxu0 0
    %2191 = vmatpush1.bf16.msra.mxu0 0
    %2192 = vmatprep.subr.bf16.mxu0 0
    %2193 = vmatpush1.bf16.msra.mxu0 0
    %2194 = vmatprep.subr.bf16.mxu0 0
    %2195 = vmatpush1.bf16.msra.mxu0 0
    %2196 = vmatprep.subr.bf16.mxu0 0
    %2197 = vmatpush1.bf16.msra.mxu0 0
    %2198 = vmatprep.subr.bf16.mxu0 0
    %2199 = vmatpush1.bf16.msra.mxu0 0
    %2200 = vmatprep.subr.bf16.mxu0 0
    %2201 = vmatpush1.bf16.msra.mxu0 0
    %2202 = vmatprep.subr.bf16.mxu0 0
    %2203 = vmatpush1.bf16.msra.mxu0 0
    %2204 = vmatprep.subr.bf16.mxu0 0
    %2205 = vmatpush1.bf16.msra.mxu0 0
    %2206 = vmatprep.mubr.bf16.mxu0 0
    %2207 = vmatmul.mubr.bf16.gmra.mrb[0].mxu0 %v2172
    %v2208 = vpop.f32.mrb[0].mxu0
    %v2209 = vadd.f32 0.0, %v2208
    %v2210 = vpop.f32.mrb[0].mxu0
    %v2211 = vpop.f32.mrb[0].mxu0
    %v2212 = vpop.f32.mrb[0].mxu0
    %2213 = vdwg.mxu0
    %2214 = vmatprep.subr.bf16.mxu0 0
    %2215 = vmatpush1.bf16.msra.mxu0 %v628
    %2216 = vmatprep.subr.bf16.mxu0 0
    %2217 = vmatpush1.bf16.msra.mxu0 %v629
    %2218 = vmatprep.subr.bf16.mxu0 0
    %2219 = vmatpush1.bf16.msra.mxu0 0
    %2220 = vmatprep.subr.bf16.mxu0 0
    %2221 = vmatpush1.bf16.msra.mxu0 0
    %2222 = vmatprep.subr.bf16.mxu0 0
    %2223 = vmatpush1.bf16.msra.mxu0 0
    %2224 = vmatprep.subr.bf16.mxu0 0
    %2225 = vmatpush1.bf16.msra.mxu0 0
    %2226 = vmatprep.subr.bf16.mxu0 0
    %2227 = vmatpush1.bf16.msra.mxu0 0
    %2228 = vmatprep.subr.bf16.mxu0 0
    %2229 = vmatpush1.bf16.msra.mxu0 0
    %2230 = vmatprep.subr.bf16.mxu0 0
    %2231 = vmatpush1.bf16.msra.mxu0 0
    %2232 = vmatprep.subr.bf16.mxu0 0
    %2233 = vmatpush1.bf16.msra.mxu0 0
    %2234 = vmatprep.subr.bf16.mxu0 0
    %2235 = vmatpush1.bf16.msra.mxu0 0
    %2236 = vmatprep.subr.bf16.mxu0 0
    %2237 = vmatpush1.bf16.msra.mxu0 0
    %2238 = vmatprep.subr.bf16.mxu0 0
    %2239 = vmatpush1.bf16.msra.mxu0 0
    %2240 = vmatprep.subr.bf16.mxu0 0
    %2241 = vmatpush1.bf16.msra.mxu0 0
    %2242 = vmatprep.subr.bf16.mxu0 0
    %2243 = vmatpush1.bf16.msra.mxu0 0
    %2244 = vmatprep.subr.bf16.mxu0 0
    %2245 = vmatpush1.bf16.msra.mxu0 0
    %2246 = vmatprep.mubr.bf16.mxu0 0
    %2247 = vmatmul.mubr.bf16.gmra.mrb[0].mxu0 %v2172
    %v2248 = vpop.f32.mrb[0].mxu0
    %v2249 = vadd.f32 0.0, %v2248
    %v2250 = vpop.f32.mrb[0].mxu0
    %v2251 = vpop.f32.mrb[0].mxu0
    %v2252 = vpop.f32.mrb[0].mxu0
    %2253 = vdwg.mxu0
    %2254 = vmatprep.subr.bf16.mxu0 0
    %2255 = vmatpush1.bf16.msra.mxu0 %v686
    %2256 = vmatprep.subr.bf16.mxu0 0
    %2257 = vmatpush1.bf16.msra.mxu0 %v687
    %2258 = vmatprep.subr.bf16.mxu0 0
    %2259 = vmatpush1.bf16.msra.mxu0 0
    %2260 = vmatprep.subr.bf16.mxu0 0
    %2261 = vmatpush1.bf16.msra.mxu0 0
    %2262 = vmatprep.subr.bf16.mxu0 0
    %2263 = vmatpush1.bf16.msra.mxu0 0
    %2264 = vmatprep.subr.bf16.mxu0 0
    %2265 = vmatpush1.bf16.msra.mxu0 0
    %2266 = vmatprep.subr.bf16.mxu0 0
    %2267 = vmatpush1.bf16.msra.mxu0 0
    %2268 = vmatprep.subr.bf16.mxu0 0
    %2269 = vmatpush1.bf16.msra.mxu0 0
    %2270 = vmatprep.subr.bf16.mxu0 0
    %2271 = vmatpush1.bf16.msra.mxu0 0
    %2272 = vmatprep.subr.bf16.mxu0 0
    %2273 = vmatpush1.bf16.msra.mxu0 0
    %2274 = vmatprep.subr.bf16.mxu0 0
    %2275 = vmatpush1.bf16.msra.mxu0 0
    %2276 = vmatprep.subr.bf16.mxu0 0
    %2277 = vmatpush1.bf16.msra.mxu0 0
    %2278 = vmatprep.subr.bf16.mxu0 0
    %2279 = vmatpush1.bf16.msra.mxu0 0
    %2280 = vmatprep.subr.bf16.mxu0 0
    %2281 = vmatpush1.bf16.msra.mxu0 0
    %2282 = vmatprep.subr.bf16.mxu0 0
    %2283 = vmatpush1.bf16.msra.mxu0 0
    %2284 = vmatprep.subr.bf16.mxu0 0
    %2285 = vmatpush1.bf16.msra.mxu0 0
    %2286 = vmatprep.mubr.bf16.mxu0 0
    %2287 = vmatmul.mubr.bf16.gmra.mrb[0].mxu0 %v2172
    %v2288 = vpop.f32.mrb[0].mxu0
    %v2289 = vadd.f32 %v676, %v2288
    %v2290 = vpop.f32.mrb[0].mxu0
    %v2291 = vpop.f32.mrb[0].mxu0
    %v2292 = vpop.f32.mrb[0].mxu0
    %2293 = vdwg.mxu0
    %s2294 = scalar_lea.vmem [#allocation2], 10
    %v2295 = vld [vmem:[%s2294] sm:$0x3]
    %v2296 = vadd.f32 %v2295, %v2209
    %v2297 = vxor.u32 %v2296, 2147483648
    %v2298 = vmul.f32 %v2297, 1.442695
    %v2299 = vpow.pop %v2298
    %v2300 = vadd.f32 %v2299, 1.0
    %v2301 = vrcp.pop %v2300
    %v2302 = vmul.f32 1.0, %v2301
    %s2303 = scalar_lea.vmem [#allocation3], 10
    %v2304 = vld [vmem:[%s2303] sm:$0x3]
    %v2305 = vadd.f32 %v2304, %v2249
    %v2306 = vxor.u32 %v2305, 2147483648
    %v2307 = vmul.f32 %v2306, 1.442695
    %v2308 = vpow.pop %v2307
    %v2309 = vadd.f32 %v2308, 1.0
    %v2310 = vrcp.pop %v2309
    %v2311 = vmul.f32 1.0, %v2310
    %s2312 = scalar_lea.vmem [#allocation4], 10
    %v2313 = vld [vmem:[%s2312] sm:$0x3]
    %v2314 = vmul.f32 %v2302, %v2289
    %v2315 = vadd.f32 %v2313, %v2314
    %v2316 = vtanh.pop %v2315
    %v2317 = vsub.f32 1.0, %v2311
    %v2318 = vmul.f32 %v2317, %v2316
    %v2319 = vmul.f32 %v2311, %v2014
    %v2320 = vadd.f32 %v2318, %v2319
    %v2322 = vsel %vm147, %v2170, 0
    %2324 = vmatprep.subr.bf16.mxu0 0
    %2325 = vmatpush1.bf16.msra.mxu0 %v762
    %2326 = vmatprep.subr.bf16.mxu0 0
    %2327 = vmatpush1.bf16.msra.mxu0 %v763
    %2328 = vmatprep.subr.bf16.mxu0 0
    %2329 = vmatpush1.bf16.msra.mxu0 0
    %2330 = vmatprep.subr.bf16.mxu0 0
    %2331 = vmatpush1.bf16.msra.mxu0 0
    %2332 = vmatprep.subr.bf16.mxu0 0
    %2333 = vmatpush1.bf16.msra.mxu0 0
    %2334 = vmatprep.subr.bf16.mxu0 0
    %2335 = vmatpush1.bf16.msra.mxu0 0
    %2336 = vmatprep.subr.bf16.mxu0 0
    %2337 = vmatpush1.bf16.msra.mxu0 0
    %2338 = vmatprep.subr.bf16.mxu0 0
    %2339 = vmatpush1.bf16.msra.mxu0 0
    %2340 = vmatprep.subr.bf16.mxu0 0
    %2341 = vmatpush1.bf16.msra.mxu0 0
    %2342 = vmatprep.subr.bf16.mxu0 0
    %2343 = vmatpush1.bf16.msra.mxu0 0
    %2344 = vmatprep.subr.bf16.mxu0 0
    %2345 = vmatpush1.bf16.msra.mxu0 0
    %2346 = vmatprep.subr.bf16.mxu0 0
    %2347 = vmatpush1.bf16.msra.mxu0 0
    %2348 = vmatprep.subr.bf16.mxu0 0
    %2349 = vmatpush1.bf16.msra.mxu0 0
    %2350 = vmatprep.subr.bf16.mxu0 0
    %2351 = vmatpush1.bf16.msra.mxu0 0
    %2352 = vmatprep.subr.bf16.mxu0 0
    %2353 = vmatpush1.bf16.msra.mxu0 0
    %2354 = vmatprep.subr.bf16.mxu0 0
    %2355 = vmatpush1.bf16.msra.mxu0 0
    %2356 = vmatprep.mubr.bf16.mxu0 0
    %2357 = vmatmul.mubr.bf16.gmra.mrb[0].mxu0 %v2322
    %v2358 = vpop.f32.mrb[0].mxu0
    %v2359 = vadd.f32 0.0, %v2358
    %v2360 = vpop.f32.mrb[0].mxu0
    %v2361 = vpop.f32.mrb[0].mxu0
    %v2362 = vpop.f32.mrb[0].mxu0
    %2363 = vdwg.mxu0
    %2364 = vmatprep.subr.bf16.mxu0 0
    %2365 = vmatpush1.bf16.msra.mxu0 %v814
    %2366 = vmatprep.subr.bf16.mxu0 0
    %2367 = vmatpush1.bf16.msra.mxu0 %v815
    %2368 = vmatprep.subr.bf16.mxu0 0
    %2369 = vmatpush1.bf16.msra.mxu0 0
    %2370 = vmatprep.subr.bf16.mxu0 0
    %2371 = vmatpush1.bf16.msra.mxu0 0
    %2372 = vmatprep.subr.bf16.mxu0 0
    %2373 = vmatpush1.bf16.msra.mxu0 0
    %2374 = vmatprep.subr.bf16.mxu0 0
    %2375 = vmatpush1.bf16.msra.mxu0 0
    %2376 = vmatprep.subr.bf16.mxu0 0
    %2377 = vmatpush1.bf16.msra.mxu0 0
    %2378 = vmatprep.subr.bf16.mxu0 0
    %2379 = vmatpush1.bf16.msra.mxu0 0
    %2380 = vmatprep.subr.bf16.mxu0 0
    %2381 = vmatpush1.bf16.msra.mxu0 0
    %2382 = vmatprep.subr.bf16.mxu0 0
    %2383 = vmatpush1.bf16.msra.mxu0 0
    %2384 = vmatprep.subr.bf16.mxu0 0
    %2385 = vmatpush1.bf16.msra.mxu0 0
    %2386 = vmatprep.subr.bf16.mxu0 0
    %2387 = vmatpush1.bf16.msra.mxu0 0
    %2388 = vmatprep.subr.bf16.mxu0 0
    %2389 = vmatpush1.bf16.msra.mxu0 0
    %2390 = vmatprep.subr.bf16.mxu0 0
    %2391 = vmatpush1.bf16.msra.mxu0 0
    %2392 = vmatprep.subr.bf16.mxu0 0
    %2393 = vmatpush1.bf16.msra.mxu0 0
    %2394 = vmatprep.subr.bf16.mxu0 0
    %2395 = vmatpush1.bf16.msra.mxu0 0
    %2396 = vmatprep.mubr.bf16.mxu0 0
    %2397 = vmatmul.mubr.bf16.gmra.mrb[0].mxu0 %v2322
    %v2398 = vpop.f32.mrb[0].mxu0
    %v2399 = vadd.f32 0.0, %v2398
    %v2400 = vpop.f32.mrb[0].mxu0
    %v2401 = vpop.f32.mrb[0].mxu0
    %v2402 = vpop.f32.mrb[0].mxu0
    %2403 = vdwg.mxu0
    %2404 = vmatprep.subr.bf16.mxu0 0
    %2405 = vmatpush1.bf16.msra.mxu0 %v872
    %2406 = vmatprep.subr.bf16.mxu0 0
    %2407 = vmatpush1.bf16.msra.mxu0 %v873
    %2408 = vmatprep.subr.bf16.mxu0 0
    %2409 = vmatpush1.bf16.msra.mxu0 0
    %2410 = vmatprep.subr.bf16.mxu0 0
    %2411 = vmatpush1.bf16.msra.mxu0 0
    %2412 = vmatprep.subr.bf16.mxu0 0
    %2413 = vmatpush1.bf16.msra.mxu0 0
    %2414 = vmatprep.subr.bf16.mxu0 0
    %2415 = vmatpush1.bf16.msra.mxu0 0
    %2416 = vmatprep.subr.bf16.mxu0 0
    %2417 = vmatpush1.bf16.msra.mxu0 0
    %2418 = vmatprep.subr.bf16.mxu0 0
    %2419 = vmatpush1.bf16.msra.mxu0 0
    %2420 = vmatprep.subr.bf16.mxu0 0
    %2421 = vmatpush1.bf16.msra.mxu0 0
    %2422 = vmatprep.subr.bf16.mxu0 0
    %2423 = vmatpush1.bf16.msra.mxu0 0
    %2424 = vmatprep.subr.bf16.mxu0 0
    %2425 = vmatpush1.bf16.msra.mxu0 0
    %2426 = vmatprep.subr.bf16.mxu0 0
    %2427 = vmatpush1.bf16.msra.mxu0 0
    %2428 = vmatprep.subr.bf16.mxu0 0
    %2429 = vmatpush1.bf16.msra.mxu0 0
    %2430 = vmatprep.subr.bf16.mxu0 0
    %2431 = vmatpush1.bf16.msra.mxu0 0
    %2432 = vmatprep.subr.bf16.mxu0 0
    %2433 = vmatpush1.bf16.msra.mxu0 0
    %2434 = vmatprep.subr.bf16.mxu0 0
    %2435 = vmatpush1.bf16.msra.mxu0 0
    %2436 = vmatprep.mubr.bf16.mxu0 0
    %2437 = vmatmul.mubr.bf16.gmra.mrb[0].mxu0 %v2322
    %v2438 = vpop.f32.mrb[0].mxu0
    %v2439 = vadd.f32 %v862, %v2438
    %v2440 = vpop.f32.mrb[0].mxu0
    %v2441 = vpop.f32.mrb[0].mxu0
    %v2442 = vpop.f32.mrb[0].mxu0
    %2443 = vdwg.mxu0
    %s2444 = scalar_lea.vmem [#allocation5], 4
    %v2445 = vld [vmem:[%s2444] sm:$0x3]
    %v2446 = vadd.f32 %v2445, %v2359
    %v2447 = vxor.u32 %v2446, 2147483648
    %v2448 = vmul.f32 %v2447, 1.442695
    %v2449 = vpow.pop %v2448
    %v2450 = vadd.f32 %v2449, 1.0
    %v2451 = vrcp.pop %v2450
    %v2452 = vmul.f32 1.0, %v2451
    %s2453 = scalar_lea.vmem [#allocation6], 4
    %v2454 = vld [vmem:[%s2453] sm:$0x3]
    %v2455 = vadd.f32 %v2454, %v2399
    %v2456 = vxor.u32 %v2455, 2147483648
    %v2457 = vmul.f32 %v2456, 1.442695
    %v2458 = vpow.pop %v2457
    %v2459 = vadd.f32 %v2458, 1.0
    %v2460 = vrcp.pop %v2459
    %v2461 = vmul.f32 1.0, %v2460
    %s2462 = scalar_lea.vmem [#allocation7], 4
    %v2463 = vld [vmem:[%s2462] sm:$0x3]
    %v2464 = vmul.f32 %v2452, %v2439
    %v2465 = vadd.f32 %v2463, %v2464
    %v2466 = vtanh.pop %v2465
    %v2467 = vsub.f32 1.0, %v2461
    %v2468 = vmul.f32 %v2467, %v2466
    %v2469 = vmul.f32 %v2461, %v2164
    %v2470 = vadd.f32 %v2468, %v2469
    %s2471 = scalar_lea.vmem [#allocation8], 10
    %2472 = vst.msk [vmem:[%s2471] sm:$0x3] %vm238, %v2320
    %s2473 = scalar_lea.vmem [#allocation9], 10
    %2474 = vst.msk [vmem:[%s2473] sm:$0x3] %vm238, %v2470
    %v2475 = vpack.c.bf16 %v2320, %v2320
    %v2476 = vpack.c.bf16 %v2470, %v2470
    %v2478 = vsel %vm147, %v2475, 0
    %2480 = vmatprep.subr.bf16.mxu0 0
    %2481 = vmatpush1.bf16.msra.mxu0 %v573
    %2482 = vmatprep.subr.bf16.mxu0 0
    %2483 = vmatpush1.bf16.msra.mxu0 %v574
    %2484 = vmatprep.subr.bf16.mxu0 0
    %2485 = vmatpush1.bf16.msra.mxu0 0
    %2486 = vmatprep.subr.bf16.mxu0 0
    %2487 = vmatpush1.bf16.msra.mxu0 0
    %2488 = vmatprep.subr.bf16.mxu0 0
    %2489 = vmatpush1.bf16.msra.mxu0 0
    %2490 = vmatprep.subr.bf16.mxu0 0
    %2491 = vmatpush1.bf16.msra.mxu0 0
    %2492 = vmatprep.subr.bf16.mxu0 0
    %2493 = vmatpush1.bf16.msra.mxu0 0
    %2494 = vmatprep.subr.bf16.mxu0 0
    %2495 = vmatpush1.bf16.msra.mxu0 0
    %2496 = vmatprep.subr.bf16.mxu0 0
    %2497 = vmatpush1.bf16.msra.mxu0 0
    %2498 = vmatprep.subr.bf16.mxu0 0
    %2499 = vmatpush1.bf16.msra.mxu0 0
    %2500 = vmatprep.subr.bf16.mxu0 0
    %2501 = vmatpush1.bf16.msra.mxu0 0
    %2502 = vmatprep.subr.bf16.mxu0 0
    %2503 = vmatpush1.bf16.msra.mxu0 0
    %2504 = vmatprep.subr.bf16.mxu0 0
    %2505 = vmatpush1.bf16.msra.mxu0 0
    %2506 = vmatprep.subr.bf16.mxu0 0
    %2507 = vmatpush1.bf16.msra.mxu0 0
    %2508 = vmatprep.subr.bf16.mxu0 0
    %2509 = vmatpush1.bf16.msra.mxu0 0
    %2510 = vmatprep.subr.bf16.mxu0 0
    %2511 = vmatpush1.bf16.msra.mxu0 0
    %2512 = vmatprep.mubr.bf16.mxu0 0
    %2513 = vmatmul.mubr.bf16.gmra.mrb[0].mxu0 %v2478
    %v2514 = vpop.f32.mrb[0].mxu0
    %v2515 = vadd.f32 0.0, %v2514
    %v2516 = vpop.f32.mrb[0].mxu0
    %v2517 = vpop.f32.mrb[0].mxu0
    %v2518 = vpop.f32.mrb[0].mxu0
    %2519 = vdwg.mxu0
    %2520 = vmatprep.subr.bf16.mxu0 0
    %2521 = vmatpush1.bf16.msra.mxu0 %v628
    %2522 = vmatprep.subr.bf16.mxu0 0
    %2523 = vmatpush1.bf16.msra.mxu0 %v629
    %2524 = vmatprep.subr.bf16.mxu0 0
    %2525 = vmatpush1.bf16.msra.mxu0 0
    %2526 = vmatprep.subr.bf16.mxu0 0
    %2527 = vmatpush1.bf16.msra.mxu0 0
    %2528 = vmatprep.subr.bf16.mxu0 0
    %2529 = vmatpush1.bf16.msra.mxu0 0
    %2530 = vmatprep.subr.bf16.mxu0 0
    %2531 = vmatpush1.bf16.msra.mxu0 0
    %2532 = vmatprep.subr.bf16.mxu0 0
    %2533 = vmatpush1.bf16.msra.mxu0 0
    %2534 = vmatprep.subr.bf16.mxu0 0
    %2535 = vmatpush1.bf16.msra.mxu0 0
    %2536 = vmatprep.subr.bf16.mxu0 0
    %2537 = vmatpush1.bf16.msra.mxu0 0
    %2538 = vmatprep.subr.bf16.mxu0 0
    %2539 = vmatpush1.bf16.msra.mxu0 0
    %2540 = vmatprep.subr.bf16.mxu0 0
    %2541 = vmatpush1.bf16.msra.mxu0 0
    %2542 = vmatprep.subr.bf16.mxu0 0
    %2543 = vmatpush1.bf16.msra.mxu0 0
    %2544 = vmatprep.subr.bf16.mxu0 0
    %2545 = vmatpush1.bf16.msra.mxu0 0
    %2546 = vmatprep.subr.bf16.mxu0 0
    %2547 = vmatpush1.bf16.msra.mxu0 0
    %2548 = vmatprep.subr.bf16.mxu0 0
    %2549 = vmatpush1.bf16.msra.mxu0 0
    %2550 = vmatprep.subr.bf16.mxu0 0
    %2551 = vmatpush1.bf16.msra.mxu0 0
    %2552 = vmatprep.mubr.bf16.mxu0 0
    %2553 = vmatmul.mubr.bf16.gmra.mrb[0].mxu0 %v2478
    %v2554 = vpop.f32.mrb[0].mxu0
    %v2555 = vadd.f32 0.0, %v2554
    %v2556 = vpop.f32.mrb[0].mxu0
    %v2557 = vpop.f32.mrb[0].mxu0
    %v2558 = vpop.f32.mrb[0].mxu0
    %2559 = vdwg.mxu0
    %2560 = vmatprep.subr.bf16.mxu0 0
    %2561 = vmatpush1.bf16.msra.mxu0 %v686
    %2562 = vmatprep.subr.bf16.mxu0 0
    %2563 = vmatpush1.bf16.msra.mxu0 %v687
    %2564 = vmatprep.subr.bf16.mxu0 0
    %2565 = vmatpush1.bf16.msra.mxu0 0
    %2566 = vmatprep.subr.bf16.mxu0 0
    %2567 = vmatpush1.bf16.msra.mxu0 0
    %2568 = vmatprep.subr.bf16.mxu0 0
    %2569 = vmatpush1.bf16.msra.mxu0 0
    %2570 = vmatprep.subr.bf16.mxu0 0
    %2571 = vmatpush1.bf16.msra.mxu0 0
    %2572 = vmatprep.subr.bf16.mxu0 0
    %2573 = vmatpush1.bf16.msra.mxu0 0
    %2574 = vmatprep.subr.bf16.mxu0 0
    %2575 = vmatpush1.bf16.msra.mxu0 0
    %2576 = vmatprep.subr.bf16.mxu0 0
    %2577 = vmatpush1.bf16.msra.mxu0 0
    %2578 = vmatprep.subr.bf16.mxu0 0
    %2579 = vmatpush1.bf16.msra.mxu0 0
    %2580 = vmatprep.subr.bf16.mxu0 0
    %2581 = vmatpush1.bf16.msra.mxu0 0
    %2582 = vmatprep.subr.bf16.mxu0 0
    %2583 = vmatpush1.bf16.msra.mxu0 0
    %2584 = vmatprep.subr.bf16.mxu0 0
    %2585 = vmatpush1.bf16.msra.mxu0 0
    %2586 = vmatprep.subr.bf16.mxu0 0
    %2587 = vmatpush1.bf16.msra.mxu0 0
    %2588 = vmatprep.subr.bf16.mxu0 0
    %2589 = vmatpush1.bf16.msra.mxu0 0
    %2590 = vmatprep.subr.bf16.mxu0 0
    %2591 = vmatpush1.bf16.msra.mxu0 0
    %2592 = vmatprep.mubr.bf16.mxu0 0
    %2593 = vmatmul.mubr.bf16.gmra.mrb[0].mxu0 %v2478
    %v2594 = vpop.f32.mrb[0].mxu0
    %v2595 = vadd.f32 %v676, %v2594
    %v2596 = vpop.f32.mrb[0].mxu0
    %v2597 = vpop.f32.mrb[0].mxu0
    %v2598 = vpop.f32.mrb[0].mxu0
    %2599 = vdwg.mxu0
    %s2600 = scalar_lea.vmem [#allocation2], 12
    %v2601 = vld [vmem:[%s2600] sm:$0x3]
    %v2602 = vadd.f32 %v2601, %v2515
    %v2603 = vxor.u32 %v2602, 2147483648
    %v2604 = vmul.f32 %v2603, 1.442695
    %v2605 = vpow.pop %v2604
    %v2606 = vadd.f32 %v2605, 1.0
    %v2607 = vrcp.pop %v2606
    %v2608 = vmul.f32 1.0, %v2607
    %s2609 = scalar_lea.vmem [#allocation3], 12
    %v2610 = vld [vmem:[%s2609] sm:$0x3]
    %v2611 = vadd.f32 %v2610, %v2555
    %v2612 = vxor.u32 %v2611, 2147483648
    %v2613 = vmul.f32 %v2612, 1.442695
    %v2614 = vpow.pop %v2613
    %v2615 = vadd.f32 %v2614, 1.0
    %v2616 = vrcp.pop %v2615
    %v2617 = vmul.f32 1.0, %v2616
    %s2618 = scalar_lea.vmem [#allocation4], 12
    %v2619 = vld [vmem:[%s2618] sm:$0x3]
    %v2620 = vmul.f32 %v2608, %v2595
    %v2621 = vadd.f32 %v2619, %v2620
    %v2622 = vtanh.pop %v2621
    %v2623 = vsub.f32 1.0, %v2617
    %v2624 = vmul.f32 %v2623, %v2622
    %v2625 = vmul.f32 %v2617, %v2320
    %v2626 = vadd.f32 %v2624, %v2625
    %v2628 = vsel %vm147, %v2476, 0
    %2630 = vmatprep.subr.bf16.mxu0 0
    %2631 = vmatpush1.bf16.msra.mxu0 %v762
    %2632 = vmatprep.subr.bf16.mxu0 0
    %2633 = vmatpush1.bf16.msra.mxu0 %v763
    %2634 = vmatprep.subr.bf16.mxu0 0
    %2635 = vmatpush1.bf16.msra.mxu0 0
    %2636 = vmatprep.subr.bf16.mxu0 0
    %2637 = vmatpush1.bf16.msra.mxu0 0
    %2638 = vmatprep.subr.bf16.mxu0 0
    %2639 = vmatpush1.bf16.msra.mxu0 0
    %2640 = vmatprep.subr.bf16.mxu0 0
    %2641 = vmatpush1.bf16.msra.mxu0 0
    %2642 = vmatprep.subr.bf16.mxu0 0
    %2643 = vmatpush1.bf16.msra.mxu0 0
    %2644 = vmatprep.subr.bf16.mxu0 0
    %2645 = vmatpush1.bf16.msra.mxu0 0
    %2646 = vmatprep.subr.bf16.mxu0 0
    %2647 = vmatpush1.bf16.msra.mxu0 0
    %2648 = vmatprep.subr.bf16.mxu0 0
    %2649 = vmatpush1.bf16.msra.mxu0 0
    %2650 = vmatprep.subr.bf16.mxu0 0
    %2651 = vmatpush1.bf16.msra.mxu0 0
    %2652 = vmatprep.subr.bf16.mxu0 0
    %2653 = vmatpush1.bf16.msra.mxu0 0
    %2654 = vmatprep.subr.bf16.mxu0 0
    %2655 = vmatpush1.bf16.msra.mxu0 0
    %2656 = vmatprep.subr.bf16.mxu0 0
    %2657 = vmatpush1.bf16.msra.mxu0 0
    %2658 = vmatprep.subr.bf16.mxu0 0
    %2659 = vmatpush1.bf16.msra.mxu0 0
    %2660 = vmatprep.subr.bf16.mxu0 0
    %2661 = vmatpush1.bf16.msra.mxu0 0
    %2662 = vmatprep.mubr.bf16.mxu0 0
    %2663 = vmatmul.mubr.bf16.gmra.mrb[0].mxu0 %v2628
    %v2664 = vpop.f32.mrb[0].mxu0
    %v2665 = vadd.f32 0.0, %v2664
    %v2666 = vpop.f32.mrb[0].mxu0
    %v2667 = vpop.f32.mrb[0].mxu0
    %v2668 = vpop.f32.mrb[0].mxu0
    %2669 = vdwg.mxu0
    %2670 = vmatprep.subr.bf16.mxu0 0
    %2671 = vmatpush1.bf16.msra.mxu0 %v814
    %2672 = vmatprep.subr.bf16.mxu0 0
    %2673 = vmatpush1.bf16.msra.mxu0 %v815
    %2674 = vmatprep.subr.bf16.mxu0 0
    %2675 = vmatpush1.bf16.msra.mxu0 0
    %2676 = vmatprep.subr.bf16.mxu0 0
    %2677 = vmatpush1.bf16.msra.mxu0 0
    %2678 = vmatprep.subr.bf16.mxu0 0
    %2679 = vmatpush1.bf16.msra.mxu0 0
    %2680 = vmatprep.subr.bf16.mxu0 0
    %2681 = vmatpush1.bf16.msra.mxu0 0
    %2682 = vmatprep.subr.bf16.mxu0 0
    %2683 = vmatpush1.bf16.msra.mxu0 0
    %2684 = vmatprep.subr.bf16.mxu0 0
    %2685 = vmatpush1.bf16.msra.mxu0 0
    %2686 = vmatprep.subr.bf16.mxu0 0
    %2687 = vmatpush1.bf16.msra.mxu0 0
    %2688 = vmatprep.subr.bf16.mxu0 0
    %2689 = vmatpush1.bf16.msra.mxu0 0
    %2690 = vmatprep.subr.bf16.mxu0 0
    %2691 = vmatpush1.bf16.msra.mxu0 0
    %2692 = vmatprep.subr.bf16.mxu0 0
    %2693 = vmatpush1.bf16.msra.mxu0 0
    %2694 = vmatprep.subr.bf16.mxu0 0
    %2695 = vmatpush1.bf16.msra.mxu0 0
    %2696 = vmatprep.subr.bf16.mxu0 0
    %2697 = vmatpush1.bf16.msra.mxu0 0
    %2698 = vmatprep.subr.bf16.mxu0 0
    %2699 = vmatpush1.bf16.msra.mxu0 0
    %2700 = vmatprep.subr.bf16.mxu0 0
    %2701 = vmatpush1.bf16.msra.mxu0 0
    %2702 = vmatprep.mubr.bf16.mxu0 0
    %2703 = vmatmul.mubr.bf16.gmra.mrb[0].mxu0 %v2628
    %v2704 = vpop.f32.mrb[0].mxu0
    %v2705 = vadd.f32 0.0, %v2704
    %v2706 = vpop.f32.mrb[0].mxu0
    %v2707 = vpop.f32.mrb[0].mxu0
    %v2708 = vpop.f32.mrb[0].mxu0
    %2709 = vdwg.mxu0
    %2710 = vmatprep.subr.bf16.mxu0 0
    %2711 = vmatpush1.bf16.msra.mxu0 %v872
    %2712 = vmatprep.subr.bf16.mxu0 0
    %2713 = vmatpush1.bf16.msra.mxu0 %v873
    %2714 = vmatprep.subr.bf16.mxu0 0
    %2715 = vmatpush1.bf16.msra.mxu0 0
    %2716 = vmatprep.subr.bf16.mxu0 0
    %2717 = vmatpush1.bf16.msra.mxu0 0
    %2718 = vmatprep.subr.bf16.mxu0 0
    %2719 = vmatpush1.bf16.msra.mxu0 0
    %2720 = vmatprep.subr.bf16.mxu0 0
    %2721 = vmatpush1.bf16.msra.mxu0 0
    %2722 = vmatprep.subr.bf16.mxu0 0
    %2723 = vmatpush1.bf16.msra.mxu0 0
    %2724 = vmatprep.subr.bf16.mxu0 0
    %2725 = vmatpush1.bf16.msra.mxu0 0
    %2726 = vmatprep.subr.bf16.mxu0 0
    %2727 = vmatpush1.bf16.msra.mxu0 0
    %2728 = vmatprep.subr.bf16.mxu0 0
    %2729 = vmatpush1.bf16.msra.mxu0 0
    %2730 = vmatprep.subr.bf16.mxu0 0
    %2731 = vmatpush1.bf16.msra.mxu0 0
    %2732 = vmatprep.subr.bf16.mxu0 0
    %2733 = vmatpush1.bf16.msra.mxu0 0
    %2734 = vmatprep.subr.bf16.mxu0 0
    %2735 = vmatpush1.bf16.msra.mxu0 0
    %2736 = vmatprep.subr.bf16.mxu0 0
    %2737 = vmatpush1.bf16.msra.mxu0 0
    %2738 = vmatprep.subr.bf16.mxu0 0
    %2739 = vmatpush1.bf16.msra.mxu0 0
    %2740 = vmatprep.subr.bf16.mxu0 0
    %2741 = vmatpush1.bf16.msra.mxu0 0
    %2742 = vmatprep.mubr.bf16.mxu0 0
    %2743 = vmatmul.mubr.bf16.gmra.mrb[0].mxu0 %v2628
    %v2744 = vpop.f32.mrb[0].mxu0
    %v2745 = vadd.f32 %v862, %v2744
    %v2746 = vpop.f32.mrb[0].mxu0
    %v2747 = vpop.f32.mrb[0].mxu0
    %v2748 = vpop.f32.mrb[0].mxu0
    %2749 = vdwg.mxu0
    %s2750 = scalar_lea.vmem [#allocation5], 2
    %v2751 = vld [vmem:[%s2750] sm:$0x3]
    %v2752 = vadd.f32 %v2751, %v2665
    %v2753 = vxor.u32 %v2752, 2147483648
    %v2754 = vmul.f32 %v2753, 1.442695
    %v2755 = vpow.pop %v2754
    %v2756 = vadd.f32 %v2755, 1.0
    %v2757 = vrcp.pop %v2756
    %v2758 = vmul.f32 1.0, %v2757
    %s2759 = scalar_lea.vmem [#allocation6], 2
    %v2760 = vld [vmem:[%s2759] sm:$0x3]
    %v2761 = vadd.f32 %v2760, %v2705
    %v2762 = vxor.u32 %v2761, 2147483648
    %v2763 = vmul.f32 %v2762, 1.442695
    %v2764 = vpow.pop %v2763
    %v2765 = vadd.f32 %v2764, 1.0
    %v2766 = vrcp.pop %v2765
    %v2767 = vmul.f32 1.0, %v2766
    %s2768 = scalar_lea.vmem [#allocation7], 2
    %v2769 = vld [vmem:[%s2768] sm:$0x3]
    %v2770 = vmul.f32 %v2758, %v2745
    %v2771 = vadd.f32 %v2769, %v2770
    %v2772 = vtanh.pop %v2771
    %v2773 = vsub.f32 1.0, %v2767
    %v2774 = vmul.f32 %v2773, %v2772
    %v2775 = vmul.f32 %v2767, %v2470
    %v2776 = vadd.f32 %v2774, %v2775
    %s2777 = scalar_lea.vmem [#allocation8], 12
    %2778 = vst.msk [vmem:[%s2777] sm:$0x3] %vm238, %v2626
    %s2779 = scalar_lea.vmem [#allocation9], 12
    %2780 = vst.msk [vmem:[%s2779] sm:$0x3] %vm238, %v2776
    %v2781 = vpack.c.bf16 %v2626, %v2626
    %v2782 = vpack.c.bf16 %v2776, %v2776
    %v2784 = vsel %vm147, %v2781, 0
    %2786 = vmatprep.subr.bf16.mxu0 0
    %2787 = vmatpush1.bf16.msra.mxu0 %v573
    %2788 = vmatprep.subr.bf16.mxu0 0
    %2789 = vmatpush1.bf16.msra.mxu0 %v574
    %2790 = vmatprep.subr.bf16.mxu0 0
    %2791 = vmatpush1.bf16.msra.mxu0 0
    %2792 = vmatprep.subr.bf16.mxu0 0
    %2793 = vmatpush1.bf16.msra.mxu0 0
    %2794 = vmatprep.subr.bf16.mxu0 0
    %2795 = vmatpush1.bf16.msra.mxu0 0
    %2796 = vmatprep.subr.bf16.mxu0 0
    %2797 = vmatpush1.bf16.msra.mxu0 0
    %2798 = vmatprep.subr.bf16.mxu0 0
    %2799 = vmatpush1.bf16.msra.mxu0 0
    %2800 = vmatprep.subr.bf16.mxu0 0
    %2801 = vmatpush1.bf16.msra.mxu0 0
    %2802 = vmatprep.subr.bf16.mxu0 0
    %2803 = vmatpush1.bf16.msra.mxu0 0
    %2804 = vmatprep.subr.bf16.mxu0 0
    %2805 = vmatpush1.bf16.msra.mxu0 0
    %2806 = vmatprep.subr.bf16.mxu0 0
    %2807 = vmatpush1.bf16.msra.mxu0 0
    %2808 = vmatprep.subr.bf16.mxu0 0
    %2809 = vmatpush1.bf16.msra.mxu0 0
    %2810 = vmatprep.subr.bf16.mxu0 0
    %2811 = vmatpush1.bf16.msra.mxu0 0
    %2812 = vmatprep.subr.bf16.mxu0 0
    %2813 = vmatpush1.bf16.msra.mxu0 0
    %2814 = vmatprep.subr.bf16.mxu0 0
    %2815 = vmatpush1.bf16.msra.mxu0 0
    %2816 = vmatprep.subr.bf16.mxu0 0
    %2817 = vmatpush1.bf16.msra.mxu0 0
    %2818 = vmatprep.mubr.bf16.mxu0 0
    %2819 = vmatmul.mubr.bf16.gmra.mrb[0].mxu0 %v2784
    %v2820 = vpop.f32.mrb[0].mxu0
    %v2821 = vadd.f32 0.0, %v2820
    %v2822 = vpop.f32.mrb[0].mxu0
    %v2823 = vpop.f32.mrb[0].mxu0
    %v2824 = vpop.f32.mrb[0].mxu0
    %2825 = vdwg.mxu0
    %2826 = vmatprep.subr.bf16.mxu0 0
    %2827 = vmatpush1.bf16.msra.mxu0 %v628
    %2828 = vmatprep.subr.bf16.mxu0 0
    %2829 = vmatpush1.bf16.msra.mxu0 %v629
    %2830 = vmatprep.subr.bf16.mxu0 0
    %2831 = vmatpush1.bf16.msra.mxu0 0
    %2832 = vmatprep.subr.bf16.mxu0 0
    %2833 = vmatpush1.bf16.msra.mxu0 0
    %2834 = vmatprep.subr.bf16.mxu0 0
    %2835 = vmatpush1.bf16.msra.mxu0 0
    %2836 = vmatprep.subr.bf16.mxu0 0
    %2837 = vmatpush1.bf16.msra.mxu0 0
    %2838 = vmatprep.subr.bf16.mxu0 0
    %2839 = vmatpush1.bf16.msra.mxu0 0
    %2840 = vmatprep.subr.bf16.mxu0 0
    %2841 = vmatpush1.bf16.msra.mxu0 0
    %2842 = vmatprep.subr.bf16.mxu0 0
    %2843 = vmatpush1.bf16.msra.mxu0 0
    %2844 = vmatprep.subr.bf16.mxu0 0
    %2845 = vmatpush1.bf16.msra.mxu0 0
    %2846 = vmatprep.subr.bf16.mxu0 0
    %2847 = vmatpush1.bf16.msra.mxu0 0
    %2848 = vmatprep.subr.bf16.mxu0 0
    %2849 = vmatpush1.bf16.msra.mxu0 0
    %2850 = vmatprep.subr.bf16.mxu0 0
    %2851 = vmatpush1.bf16.msra.mxu0 0
    %2852 = vmatprep.subr.bf16.mxu0 0
    %2853 = vmatpush1.bf16.msra.mxu0 0
    %2854 = vmatprep.subr.bf16.mxu0 0
    %2855 = vmatpush1.bf16.msra.mxu0 0
    %2856 = vmatprep.subr.bf16.mxu0 0
    %2857 = vmatpush1.bf16.msra.mxu0 0
    %2858 = vmatprep.mubr.bf16.mxu0 0
    %2859 = vmatmul.mubr.bf16.gmra.mrb[0].mxu0 %v2784
    %v2860 = vpop.f32.mrb[0].mxu0
    %v2861 = vadd.f32 0.0, %v2860
    %v2862 = vpop.f32.mrb[0].mxu0
    %v2863 = vpop.f32.mrb[0].mxu0
    %v2864 = vpop.f32.mrb[0].mxu0
    %2865 = vdwg.mxu0
    %2866 = vmatprep.subr.bf16.mxu0 0
    %2867 = vmatpush1.bf16.msra.mxu0 %v686
    %2868 = vmatprep.subr.bf16.mxu0 0
    %2869 = vmatpush1.bf16.msra.mxu0 %v687
    %2870 = vmatprep.subr.bf16.mxu0 0
    %2871 = vmatpush1.bf16.msra.mxu0 0
    %2872 = vmatprep.subr.bf16.mxu0 0
    %2873 = vmatpush1.bf16.msra.mxu0 0
    %2874 = vmatprep.subr.bf16.mxu0 0
    %2875 = vmatpush1.bf16.msra.mxu0 0
    %2876 = vmatprep.subr.bf16.mxu0 0
    %2877 = vmatpush1.bf16.msra.mxu0 0
    %2878 = vmatprep.subr.bf16.mxu0 0
    %2879 = vmatpush1.bf16.msra.mxu0 0
    %2880 = vmatprep.subr.bf16.mxu0 0
    %2881 = vmatpush1.bf16.msra.mxu0 0
    %2882 = vmatprep.subr.bf16.mxu0 0
    %2883 = vmatpush1.bf16.msra.mxu0 0
    %2884 = vmatprep.subr.bf16.mxu0 0
    %2885 = vmatpush1.bf16.msra.mxu0 0
    %2886 = vmatprep.subr.bf16.mxu0 0
    %2887 = vmatpush1.bf16.msra.mxu0 0
    %2888 = vmatprep.subr.bf16.mxu0 0
    %2889 = vmatpush1.bf16.msra.mxu0 0
    %2890 = vmatprep.subr.bf16.mxu0 0
    %2891 = vmatpush1.bf16.msra.mxu0 0
    %2892 = vmatprep.subr.bf16.mxu0 0
    %2893 = vmatpush1.bf16.msra.mxu0 0
    %2894 = vmatprep.subr.bf16.mxu0 0
    %2895 = vmatpush1.bf16.msra.mxu0 0
    %2896 = vmatprep.subr.bf16.mxu0 0
    %2897 = vmatpush1.bf16.msra.mxu0 0
    %2898 = vmatprep.mubr.bf16.mxu0 0
    %2899 = vmatmul.mubr.bf16.gmra.mrb[0].mxu0 %v2784
    %v2900 = vpop.f32.mrb[0].mxu0
    %v2901 = vadd.f32 %v676, %v2900
    %v2902 = vpop.f32.mrb[0].mxu0
    %v2903 = vpop.f32.mrb[0].mxu0
    %v2904 = vpop.f32.mrb[0].mxu0
    %2905 = vdwg.mxu0
    %s2906 = scalar_lea.vmem [#allocation2], 14
    %v2907 = vld [vmem:[%s2906] sm:$0x3]
    %v2908 = vadd.f32 %v2907, %v2821
    %v2909 = vxor.u32 %v2908, 2147483648
    %v2910 = vmul.f32 %v2909, 1.442695
    %v2911 = vpow.pop %v2910
    %v2912 = vadd.f32 %v2911, 1.0
    %v2913 = vrcp.pop %v2912
    %v2914 = vmul.f32 1.0, %v2913
    %s2915 = scalar_lea.vmem [#allocation3], 14
    %v2916 = vld [vmem:[%s2915] sm:$0x3]
    %v2917 = vadd.f32 %v2916, %v2861
    %v2918 = vxor.u32 %v2917, 2147483648
    %v2919 = vmul.f32 %v2918, 1.442695
    %v2920 = vpow.pop %v2919
    %v2921 = vadd.f32 %v2920, 1.0
    %v2922 = vrcp.pop %v2921
    %v2923 = vmul.f32 1.0, %v2922
    %s2924 = scalar_lea.vmem [#allocation4], 14
    %v2925 = vld [vmem:[%s2924] sm:$0x3]
    %v2926 = vmul.f32 %v2914, %v2901
    %v2927 = vadd.f32 %v2925, %v2926
    %v2928 = vtanh.pop %v2927
    %v2929 = vsub.f32 1.0, %v2923
    %v2930 = vmul.f32 %v2929, %v2928
    %v2931 = vmul.f32 %v2923, %v2626
    %v2932 = vadd.f32 %v2930, %v2931
    %v2934 = vsel %vm147, %v2782, 0
    %2936 = vmatprep.subr.bf16.mxu0 0
    %2937 = vmatpush1.bf16.msra.mxu0 %v762
    %2938 = vmatprep.subr.bf16.mxu0 0
    %2939 = vmatpush1.bf16.msra.mxu0 %v763
    %2940 = vmatprep.subr.bf16.mxu0 0
    %2941 = vmatpush1.bf16.msra.mxu0 0
    %2942 = vmatprep.subr.bf16.mxu0 0
    %2943 = vmatpush1.bf16.msra.mxu0 0
    %2944 = vmatprep.subr.bf16.mxu0 0
    %2945 = vmatpush1.bf16.msra.mxu0 0
    %2946 = vmatprep.subr.bf16.mxu0 0
    %2947 = vmatpush1.bf16.msra.mxu0 0
    %2948 = vmatprep.subr.bf16.mxu0 0
    %2949 = vmatpush1.bf16.msra.mxu0 0
    %2950 = vmatprep.subr.bf16.mxu0 0
    %2951 = vmatpush1.bf16.msra.mxu0 0
    %2952 = vmatprep.subr.bf16.mxu0 0
    %2953 = vmatpush1.bf16.msra.mxu0 0
    %2954 = vmatprep.subr.bf16.mxu0 0
    %2955 = vmatpush1.bf16.msra.mxu0 0
    %2956 = vmatprep.subr.bf16.mxu0 0
    %2957 = vmatpush1.bf16.msra.mxu0 0
    %2958 = vmatprep.subr.bf16.mxu0 0
    %2959 = vmatpush1.bf16.msra.mxu0 0
    %2960 = vmatprep.subr.bf16.mxu0 0
    %2961 = vmatpush1.bf16.msra.mxu0 0
    %2962 = vmatprep.subr.bf16.mxu0 0
    %2963 = vmatpush1.bf16.msra.mxu0 0
    %2964 = vmatprep.subr.bf16.mxu0 0
    %2965 = vmatpush1.bf16.msra.mxu0 0
    %2966 = vmatprep.subr.bf16.mxu0 0
    %2967 = vmatpush1.bf16.msra.mxu0 0
    %2968 = vmatprep.mubr.bf16.mxu0 0
    %2969 = vmatmul.mubr.bf16.gmra.mrb[0].mxu0 %v2934
    %v2970 = vpop.f32.mrb[0].mxu0
    %v2971 = vadd.f32 0.0, %v2970
    %v2972 = vpop.f32.mrb[0].mxu0
    %v2973 = vpop.f32.mrb[0].mxu0
    %v2974 = vpop.f32.mrb[0].mxu0
    %2975 = vdwg.mxu0
    %2976 = vmatprep.subr.bf16.mxu0 0
    %2977 = vmatpush1.bf16.msra.mxu0 %v814
    %2978 = vmatprep.subr.bf16.mxu0 0
    %2979 = vmatpush1.bf16.msra.mxu0 %v815
    %2980 = vmatprep.subr.bf16.mxu0 0
    %2981 = vmatpush1.bf16.msra.mxu0 0
    %2982 = vmatprep.subr.bf16.mxu0 0
    %2983 = vmatpush1.bf16.msra.mxu0 0
    %2984 = vmatprep.subr.bf16.mxu0 0
    %2985 = vmatpush1.bf16.msra.mxu0 0
    %2986 = vmatprep.subr.bf16.mxu0 0
    %2987 = vmatpush1.bf16.msra.mxu0 0
    %2988 = vmatprep.subr.bf16.mxu0 0
    %2989 = vmatpush1.bf16.msra.mxu0 0
    %2990 = vmatprep.subr.bf16.mxu0 0
    %2991 = vmatpush1.bf16.msra.mxu0 0
    %2992 = vmatprep.subr.bf16.mxu0 0
    %2993 = vmatpush1.bf16.msra.mxu0 0
    %2994 = vmatprep.subr.bf16.mxu0 0
    %2995 = vmatpush1.bf16.msra.mxu0 0
    %2996 = vmatprep.subr.bf16.mxu0 0
    %2997 = vmatpush1.bf16.msra.mxu0 0
    %2998 = vmatprep.subr.bf16.mxu0 0
    %2999 = vmatpush1.bf16.msra.mxu0 0
    %3000 = vmatprep.subr.bf16.mxu0 0
    %3001 = vmatpush1.bf16.msra.mxu0 0
    %3002 = vmatprep.subr.bf16.mxu0 0
    %3003 = vmatpush1.bf16.msra.mxu0 0
    %3004 = vmatprep.subr.bf16.mxu0 0
    %3005 = vmatpush1.bf16.msra.mxu0 0
    %3006 = vmatprep.subr.bf16.mxu0 0
    %3007 = vmatpush1.bf16.msra.mxu0 0
    %3008 = vmatprep.mubr.bf16.mxu0 0
    %3009 = vmatmul.mubr.bf16.gmra.mrb[0].mxu0 %v2934
    %v3010 = vpop.f32.mrb[0].mxu0
    %v3011 = vadd.f32 0.0, %v3010
    %v3012 = vpop.f32.mrb[0].mxu0
    %v3013 = vpop.f32.mrb[0].mxu0
    %v3014 = vpop.f32.mrb[0].mxu0
    %3015 = vdwg.mxu0
    %3016 = vmatprep.subr.bf16.mxu0 0
    %3017 = vmatpush1.bf16.msra.mxu0 %v872
    %3018 = vmatprep.subr.bf16.mxu0 0
    %3019 = vmatpush1.bf16.msra.mxu0 %v873
    %3020 = vmatprep.subr.bf16.mxu0 0
    %3021 = vmatpush1.bf16.msra.mxu0 0
    %3022 = vmatprep.subr.bf16.mxu0 0
    %3023 = vmatpush1.bf16.msra.mxu0 0
    %3024 = vmatprep.subr.bf16.mxu0 0
    %3025 = vmatpush1.bf16.msra.mxu0 0
    %3026 = vmatprep.subr.bf16.mxu0 0
    %3027 = vmatpush1.bf16.msra.mxu0 0
    %3028 = vmatprep.subr.bf16.mxu0 0
    %3029 = vmatpush1.bf16.msra.mxu0 0
    %3030 = vmatprep.subr.bf16.mxu0 0
    %3031 = vmatpush1.bf16.msra.mxu0 0
    %3032 = vmatprep.subr.bf16.mxu0 0
    %3033 = vmatpush1.bf16.msra.mxu0 0
    %3034 = vmatprep.subr.bf16.mxu0 0
    %3035 = vmatpush1.bf16.msra.mxu0 0
    %3036 = vmatprep.subr.bf16.mxu0 0
    %3037 = vmatpush1.bf16.msra.mxu0 0
    %3038 = vmatprep.subr.bf16.mxu0 0
    %3039 = vmatpush1.bf16.msra.mxu0 0
    %3040 = vmatprep.subr.bf16.mxu0 0
    %3041 = vmatpush1.bf16.msra.mxu0 0
    %3042 = vmatprep.subr.bf16.mxu0 0
    %3043 = vmatpush1.bf16.msra.mxu0 0
    %3044 = vmatprep.subr.bf16.mxu0 0
    %3045 = vmatpush1.bf16.msra.mxu0 0
    %3046 = vmatprep.subr.bf16.mxu0 0
    %3047 = vmatpush1.bf16.msra.mxu0 0
    %3048 = vmatprep.mubr.bf16.mxu0 0
    %3049 = vmatmul.mubr.bf16.gmra.mrb[0].mxu0 %v2934
    %v3050 = vpop.f32.mrb[0].mxu0
    %v3051 = vadd.f32 %v862, %v3050
    %v3052 = vpop.f32.mrb[0].mxu0
    %v3053 = vpop.f32.mrb[0].mxu0
    %v3054 = vpop.f32.mrb[0].mxu0
    %3055 = vdwg.mxu0
    %v3056 = vld [vmem:[#allocation5] sm:$0x3]
    %v3057 = vadd.f32 %v3056, %v2971
    %v3058 = vxor.u32 %v3057, 2147483648
    %v3059 = vmul.f32 %v3058, 1.442695
    %v3060 = vpow.pop %v3059
    %v3061 = vadd.f32 %v3060, 1.0
    %v3062 = vrcp.pop %v3061
    %v3063 = vmul.f32 1.0, %v3062
    %v3064 = vld [vmem:[#allocation6] sm:$0x3]
    %v3065 = vadd.f32 %v3064, %v3011
    %v3066 = vxor.u32 %v3065, 2147483648
    %v3067 = vmul.f32 %v3066, 1.442695
    %v3068 = vpow.pop %v3067
    %v3069 = vadd.f32 %v3068, 1.0
    %v3070 = vrcp.pop %v3069
    %v3071 = vmul.f32 1.0, %v3070
    %v3072 = vld [vmem:[#allocation7] sm:$0x3]
    %v3073 = vmul.f32 %v3063, %v3051
    %v3074 = vadd.f32 %v3072, %v3073
    %v3075 = vtanh.pop %v3074
    %v3076 = vsub.f32 1.0, %v3071
    %v3077 = vmul.f32 %v3076, %v3075
    %v3078 = vmul.f32 %v3071, %v2776
    %v3079 = vadd.f32 %v3077, %v3078
    %s3080 = scalar_lea.vmem [#allocation8], 14
    %3081 = vst.msk [vmem:[%s3080] sm:$0x3] %vm238, %v2932
    %s3082 = scalar_lea.vmem [#allocation9], 14
    %3083 = vst.msk [vmem:[%s3082] sm:$0x3] %vm238, %v3079
    %v3084 = vld [vmem:[#allocation8] sm:$0x3]
    %v3085 = vld [vmem:[#allocation8 + $0x2] sm:$0x3]
    %v3086 = vld [vmem:[#allocation8 + $0x4] sm:$0x3]
    %v3087 = vld [vmem:[#allocation8 + $0x6] sm:$0x3]
    %v3088 = vld [vmem:[#allocation8 + $0x8] sm:$0x3]
    %v3089 = vld [vmem:[#allocation8 + $0xa] sm:$0x3]
    %v3090 = vld [vmem:[#allocation8 + $0xc] sm:$0x3]
    %v3091 = vld [vmem:[#allocation8 + $0xe] sm:$0x3]
    %v3092 = vtanh.pop %v3084
    %v3093 = vtanh.pop %v3085
    %v3094 = vtanh.pop %v3086
    %v3095 = vtanh.pop %v3087
    %v3096 = vtanh.pop %v3088
    %v3097 = vtanh.pop %v3089
    %v3098 = vtanh.pop %v3090
    %v3099 = vtanh.pop %v3091
    %v3100 = vsel %vm238, %v3092, -inf
    %v3101 = vsel %vm238, %v3093, -inf
    %v3102 = vsel %vm238, %v3094, -inf
    %v3103 = vsel %vm238, %v3095, -inf
    %v3104 = vsel %vm238, %v3096, -inf
    %v3105 = vmax.f32 %v3100, %v3104
    %v3106 = vsel %vm238, %v3097, -inf
    %v3107 = vmax.f32 %v3101, %v3106
    %v3108 = vsel %vm238, %v3098, -inf
    %v3109 = vmax.f32 %v3102, %v3108
    %v3110 = vsel %vm238, %v3099, -inf
    %v3111 = vmax.f32 %v3103, %v3110
    %v3112 = vmax.f32 %v3105, %v3107
    %v3113 = vmax.f32 %v3109, %v3111
    %v3114 = vmax.f32 %v3112, %v3113
    %v3115 = vld [vmem:[#allocation9] sm:$0x3]
    %v3116 = vld [vmem:[#allocation9 + $0x2] sm:$0x3]
    %v3117 = vld [vmem:[#allocation9 + $0x4] sm:$0x3]
    %v3118 = vld [vmem:[#allocation9 + $0x6] sm:$0x3]
    %v3119 = vld [vmem:[#allocation9 + $0x8] sm:$0x3]
    %v3120 = vld [vmem:[#allocation9 + $0xa] sm:$0x3]
    %v3121 = vld [vmem:[#allocation9 + $0xc] sm:$0x3]
    %v3122 = vld [vmem:[#allocation9 + $0xe] sm:$0x3]
    %v3123 = vtanh.pop %v3115
    %v3124 = vtanh.pop %v3116
    %v3125 = vtanh.pop %v3117
    %v3126 = vtanh.pop %v3118
    %v3127 = vtanh.pop %v3119
    %v3128 = vtanh.pop %v3120
    %v3129 = vtanh.pop %v3121
    %v3130 = vtanh.pop %v3122
    %v3131 = vsel %vm238, %v3123, -inf
    %v3132 = vsel %vm238, %v3124, -inf
    %v3133 = vsel %vm238, %v3125, -inf
    %v3134 = vsel %vm238, %v3126, -inf
    %v3135 = vsel %vm238, %v3127, -inf
    %v3136 = vmax.f32 %v3131, %v3135
    %v3137 = vsel %vm238, %v3128, -inf
    %v3138 = vmax.f32 %v3132, %v3137
    %v3139 = vsel %vm238, %v3129, -inf
    %v3140 = vmax.f32 %v3133, %v3139
    %v3141 = vsel %vm238, %v3130, -inf
    %v3142 = vmax.f32 %v3134, %v3141
    %v3143 = vmax.f32 %v3136, %v3138
    %v3144 = vmax.f32 %v3140, %v3142
    %v3145 = vmax.f32 %v3143, %v3144
    %3147 = vrot.lane.b32.xlu0 %v3145, 32
    %v3148 = vpop.permute.xlu0 %3147
    %v3150 = vsel %vm147, %v3114, %v3148
    %v3151 = vld [vmem:[%s11] sm:$0xff]
    %v3152 = vld [vmem:[%s11 + $0x8] sm:$0xff]
    %v3153 = vld [vmem:[%s11 + $0x10] sm:$0xff]
    %v3154 = vld [vmem:[%s11 + $0x18] sm:$0xff]
    %v3155 = vld [vmem:[%s11 + $0x20] sm:$0xff]
    %v3156 = vld [vmem:[%s11 + $0x28] sm:$0xff]
    %v3157 = vld [vmem:[%s11 + $0x30] sm:$0xff]
    %v3158 = vld [vmem:[%s11 + $0x38] sm:$0xff]
    %v3159 = vld [vmem:[%s12] sm:$0x1]
    %v3161 = vlaneseq
    %v3162 = vshrl.u32 %v3161, 7
    %v3163 = vsub.s32 0, %v3162
    %v3164 = vrot.slane %v3159, %v3163
    %vm3166 = vcmask 523264
    %v3168 = vsel %vm3166, %v3150, 0
    %3170 = vmatprep.subr.mxu0 0.0
    %3171 = vmatpush1.msra.mxu0 %v3151
    %3172 = vmatprep.subr.mxu0 0.0
    %3173 = vmatpush1.msra.mxu0 %v3152
    %3174 = vmatprep.subr.mxu0 0.0
    %3175 = vmatpush1.msra.mxu0 %v3153
    %3176 = vmatprep.subr.mxu0 0.0
    %3177 = vmatpush1.msra.mxu0 %v3154
    %3178 = vmatprep.subr.mxu0 0.0
    %3179 = vmatpush1.msra.mxu0 %v3155
    %3180 = vmatprep.subr.mxu0 0.0
    %3181 = vmatpush1.msra.mxu0 %v3156
    %3182 = vmatprep.subr.mxu0 0.0
    %3183 = vmatpush1.msra.mxu0 %v3157
    %3184 = vmatprep.subr.mxu0 0.0
    %3185 = vmatpush1.msra.mxu0 %v3158
    %3186 = vmatprep.subr.mxu0 0.0
    %3187 = vmatpush1.msra.mxu0 0.0
    %3188 = vmatprep.subr.mxu0 0.0
    %3189 = vmatpush1.msra.mxu0 0.0
    %3190 = vmatprep.subr.mxu0 0.0
    %3191 = vmatpush1.msra.mxu0 0.0
    %3192 = vmatprep.subr.mxu0 0.0
    %3193 = vmatpush1.msra.mxu0 0.0
    %3194 = vmatprep.subr.mxu0 0.0
    %3195 = vmatpush1.msra.mxu0 0.0
    %3196 = vmatprep.subr.mxu0 0.0
    %3197 = vmatpush1.msra.mxu0 0.0
    %3198 = vmatprep.subr.mxu0 0.0
    %3199 = vmatpush1.msra.mxu0 0.0
    %3200 = vmatprep.subr.mxu0 0.0
    %3201 = vmatpush1.msra.mxu0 0.0
    %3202 = vmatprep.subr.mxu0 0.0
    %3203 = vmatpush1.msra.mxu0 0.0
    %3204 = vmatprep.subr.mxu0 0.0
    %3205 = vmatpush1.msra.mxu0 0.0
    %3206 = vmatprep.subr.mxu0 0.0
    %3207 = vmatpush1.msra.mxu0 0.0
    %3208 = vmatprep.subr.mxu0 0.0
    %3209 = vmatpush1.msra.mxu0 0.0
    %3210 = vmatprep.subr.mxu0 0.0
    %3211 = vmatpush1.msra.mxu0 0.0
    %3212 = vmatprep.subr.mxu0 0.0
    %3213 = vmatpush1.msra.mxu0 0.0
    %3214 = vmatprep.subr.mxu0 0.0
    %3215 = vmatpush1.msra.mxu0 0.0
    %3216 = vmatprep.subr.mxu0 0.0
    %3217 = vmatpush1.msra.mxu0 0.0
    %3218 = vmatprep.subr.mxu0 0.0
    %3219 = vmatpush1.msra.mxu0 0.0
    %3220 = vmatprep.subr.mxu0 0.0
    %3221 = vmatpush1.msra.mxu0 0.0
    %3222 = vmatprep.subr.mxu0 0.0
    %3223 = vmatpush1.msra.mxu0 0.0
    %3224 = vmatprep.subr.mxu0 0.0
    %3225 = vmatpush1.msra.mxu0 0.0
    %3226 = vmatprep.subr.mxu0 0.0
    %3227 = vmatpush1.msra.mxu0 0.0
    %3228 = vmatprep.subr.mxu0 0.0
    %3229 = vmatpush1.msra.mxu0 0.0
    %3230 = vmatprep.subr.mxu0 0.0
    %3231 = vmatpush1.msra.mxu0 0.0
    %3232 = vmatprep.subr.mxu0 0.0
    %3233 = vmatpush1.msra.mxu0 0.0
    %3234 = vmatprep.mubr.f32.mxu0 0.0
    %3235 = vmatmul.mubr.f32.gmra.mrb[0].mxu0 %v3168
    %v3236 = vpop.f32.mrb[0].mxu0
    %v3237 = vadd.f32 %v3164, %v3236
    %v3238 = vpop.f32.mrb[0].mxu0
    %3239 = vdwg.mxu0
    %vm3240 = vcmask 33792
    %3241 = vst.msk [vmem:[#allocation10] sm:$0x3] %vm3240, %v3237
    // Predicated region
    $region54: #{bigru_forward.1} parent=1 // pred_check
      _
    $region55: #{bigru_forward.1} parent=1 // pred_check_branch
      %3243 = sbr.rel (0) target = $region57
    $region56: #{bigru_forward.1} parent=1 // pred_region
      %s3245 = ssub.s32 32, 32
      %3246 = vsyncadd [#allocation11], %s3245
      %s3248 = sshll.u32 [#allocation10], 4
      %s3249 = int_to_ptr.vmem [resolvable:$true] %s3248
      %3251 = dma.vmem_to_hbm [thread:$0]  %s3249, 32, %s13, [#allocation11]
    $region57: #{bigru_forward.1} parent=1 // pred_fallthru
      _
    // Predicated region
    $region58: #{bigru_forward.1} parent=1 // pred_check
      _
    $region59: #{bigru_forward.1} parent=1 // pred_check_branch
      %3253 = sbr.rel (0) target = $region61
    $region60: #{bigru_forward.1} parent=1 // pred_region
      %3254 = dma.done [#allocation11], 32
    $region61: #{bigru_forward.1} parent=1 // pred_fallthru
      _
    %3255 = vsyncpa [#allocation11], 1

</llo_original>
